<compile_context>
chip_gen: v5e
topology: v5e:2x2
jax: 0.10.0
libtpu: 0.0.40
codegen_flags: <defaults>
</compile_context>

<pallas_src>
import functools
import math

import jax
import jax.numpy as jnp
from jax.experimental import pallas as pl
from jax.experimental.pallas import tpu as pltpu


# ---------------- in-kernel math helpers (all operands are small 2-D VMEM-resident values) ----

def _conv_same(h2, w2d, bias, relu, N, L):
    """'Same' Conv1d (stride 1, odd K, pad=(K-1)//2) as ONE unbatched 2-D im2col MXU matmul.

    h2:   (Cin, N*L)    channel-major flat activations (batch folded into the lane axis).
    w2d:  (Cout, K*Cin) weights, k-major flatten: w2d[o, k*Cin + c] = w[o, c, k].
    bias: (Cout, 1).
    """
    Cin = h2.shape[0]
    Cout, KC = w2d.shape
    K = KC // Cin
    if K == 1:
        p2 = h2
    else:
        pad = (K - 1) // 2
        zeros = jnp.zeros((Cin, pad), jnp.float32)
        cols = []
        for n in range(N):                                    # unrolled at trace time (N small)
            hn = h2[:, n * L:(n + 1) * L]                     # (Cin, L)  static lane slice
            hpn = jnp.concatenate([zeros, hn, zeros], axis=1)  # (Cin, L + 2*pad)
            # patch row k*Cin + c == channel c at tap k (matches the w2d flatten order)
            # TODO(synk): taps could use pltpu.roll (XLU slot) instead of unaligned lane slices.
            cols.append(jnp.concatenate([hpn[:, k:k + L] for k in range(K)], axis=0))
        p2 = jnp.concatenate(cols, axis=1)                    # (K*Cin, N*L)
    out = jnp.dot(w2d, p2, preferred_element_type=jnp.float32) + bias   # (Cout, N*L)
    if relu:
        out = jnp.maximum(out, 0.0)
    return out


def _batchnorm(h2, gamma, beta, eps):
    """Training-mode BatchNorm1d: per-channel batch stats over all (N, L) positions (lane axis)."""
    mean = jnp.mean(h2, axis=1, keepdims=True)
    var = jnp.mean(jnp.square(h2 - mean), axis=1, keepdims=True)
    return (h2 - mean) * jax.lax.rsqrt(var + eps) * gamma + beta


def _maxpool2(h2):
    """MaxPool1d(kernel=2, stride=2) on the flat (C, N*L) layout via two unbatched 0/1 matmuls.

    Flat selection is correct because L is even, so global column parity == per-sample parity.
    """
    NL = h2.shape[1]
    NLh = NL // 2
    r = jax.lax.broadcasted_iota(jnp.int32, (NL, NLh), 0)
    c = jax.lax.broadcasted_iota(jnp.int32, (NL, NLh), 1)
    s_even = jnp.where(r == 2 * c, 1.0, 0.0).astype(jnp.float32)       # picks columns 0::2
    s_odd = jnp.where(r == 2 * c + 1, 1.0, 0.0).astype(jnp.float32)    # picks columns 1::2
    he = jnp.dot(h2, s_even, preferred_element_type=jnp.float32)
    ho = jnp.dot(h2, s_odd, preferred_element_type=jnp.float32)
    return jnp.maximum(he, ho)


def _upsample2(h2):
    """nn.Upsample(scale_factor=2, mode='nearest') on the flat layout via one placement matmul."""
    NL = h2.shape[1]
    NL2 = 2 * NL
    r = jax.lax.broadcasted_iota(jnp.int32, (NL, NL2), 0)
    c = jax.lax.broadcasted_iota(jnp.int32, (NL, NL2), 1)
    u = jnp.where((c == 2 * r) | (c == 2 * r + 1), 1.0, 0.0).astype(jnp.float32)
    return jnp.dot(h2, u, preferred_element_type=jnp.float32)


# ---------------- fused whole-network Pallas kernel ----------------

def _fused_ae_kernel(*refs, N, L0, num_enc_blocks, num_dec_blocks, eps):
    # refs = [x, (wa,ba,ga,bea,wb,bb,gb,beb) * num_enc_blocks, (wf,bf), (w0,b0),
    #         (w,b) * num_dec_blocks, (ow,ob), y_ref, z_ref]
    it = iter(refs)
    x_ref = next(it)
    enc_blocks = [tuple(next(it) for _ in range(8)) for _ in range(num_enc_blocks)]
    efw, efb = next(it), next(it)
    d0w, d0b = next(it), next(it)
    dec_blocks = [tuple(next(it) for _ in range(2)) for _ in range(num_dec_blocks)]
    ow, ob = next(it), next(it)
    y_ref, z_ref = next(it), next(it)

    # ---- all 4 encoders at once (stacked / block-diagonal channels) ----
    L = L0
    h = x_ref[...].astype(jnp.float32)                                  # (Cin_pad, N*L)
    for (wa, ba, ga, bea, wb, bb, gb, beb) in enc_blocks:
        # Conv -> ReLU -> BN -> Conv -> ReLU -> MaxPool -> BN
        h = _conv_same(h, wa[...], ba[...], True, N, L)
        h = _batchnorm(h, ga[...], bea[...], eps)
        h = _conv_same(h, wb[...], bb[...], True, N, L)
        h = _maxpool2(h)
        L //= 2
        h = _batchnorm(h, gb[...], beb[...], eps)
    # per-encoder 1x1 conv + ReLU (block-diagonal) -> z is already channel-concatenated
    z = _conv_same(h, efw[...], efb[...], True, N, L)
    z_ref[...] = z.astype(z_ref.dtype)                                  # (hidden, N*Ld)

    # ---- decoder ----
    h = _conv_same(z, d0w[...], d0b[...], True, N, L)                   # 1x1 conv + ReLU
    for (wd, bd) in dec_blocks:
        h = _upsample2(h)                                               # nearest x2
        L *= 2
        h = _conv_same(h, wd[...], bd[...], True, N, L)                 # ConvT(k7,s1,p3) == same conv
    # weight-normed 1x1 output conv (effective weight precomputed in fuse_params)
    y = _conv_same(h, ow[...], ob[...], False, N, L)
    y_ref[...] = y.astype(y_ref.dtype)                                  # (input_channels, N*L)


# ---------------- parameter preprocessing (runs once) ----------------

def _w2d(w):
    """(Cout, Cin, K) conv weight -> (Cout, K*Cin) im2col weight (k-major flatten)."""
    cout, cin, k = w.shape
    return jnp.transpose(w, (0, 2, 1)).reshape(cout, k * cin)


def _col(v):
    return v.reshape(-1, 1)


def _block_diag(ws):
    """Block-diagonal stack of per-encoder conv weights along (Cout, Cin)."""
    k = ws[0].shape[2]
    co = sum(w.shape[0] for w in ws)
    ci = sum(w.shape[1] for w in ws)
    out = jnp.zeros((co, ci, k), jnp.float32)
    ro = cc = 0
    for w in ws:
        out = out.at[ro:ro + w.shape[0], cc:cc + w.shape[1], :].set(w)
        ro += w.shape[0]
        cc += w.shape[1]
    return out


def fuse_params(params):
    """Stack the 4 encoders into block-diagonal weights, fold ConvTranspose flips and the
    output-head weight_norm, pre-reshape everything to im2col 2-D form, and flatten into
    the exact kernel input order."""
    encs = params['encoders']
    flat = []
    num_blocks = len(encs[0]['blocks'])
    for bi in range(num_blocks):
        blks = [e['blocks'][bi] for e in encs]
        w1s = [b['w1'] for b in blks]
        if bi == 0:
            # All encoders read the shared input channels -> plain Cout stack; zero-pad Cin
            # to a multiple of 8 (the wrapper pads x identically), keeping sublanes aligned.
            wa = jnp.concatenate(w1s, axis=0)
            cin = wa.shape[1]
            cpad = (-cin) % 8
            if cpad:
                wa = jnp.concatenate(
                    [wa, jnp.zeros((wa.shape[0], cpad, wa.shape[2]), jnp.float32)], axis=1)
        else:
            wa = _block_diag(w1s)
        wb = _block_diag([b['w2'] for b in blks])
        flat += [
            _w2d(wa),
            _col(jnp.concatenate([b['b1'] for b in blks], axis=0)),
            _col(jnp.concatenate([b['g1'] for b in blks], axis=0)),
            _col(jnp.concatenate([b['be1'] for b in blks], axis=0)),
            _w2d(wb),
            _col(jnp.concatenate([b['b2'] for b in blks], axis=0)),
            _col(jnp.concatenate([b['g2'] for b in blks], axis=0)),
            _col(jnp.concatenate([b['be2'] for b in blks], axis=0)),
        ]
    flat += [_w2d(_block_diag([e['wf'] for e in encs])),
             _col(jnp.concatenate([e['bf'] for e in encs], axis=0))]

    dec = params['decoder']
    flat += [_w2d(dec['w0']), _col(dec['b0'])]
    for blk in dec['blocks']:
        # ConvTranspose1d(stride=1, pad=3, K=7) == Conv1d with flipped/transposed kernel, pad 3
        w_conv = jnp.flip(jnp.transpose(blk['w'], (1, 0, 2)), axis=-1)
        flat += [_w2d(w_conv), _col(blk['b'])]

    outp = params['output']
    v, g, ob = outp['v'], outp['g'], outp['b']
    norm = jnp.sqrt(jnp.sum(v * v, axis=(1, 2), keepdims=True))
    w_out = g * v / norm                       # weight_norm reparameterization (dim=0)
    flat += [_w2d(w_out), _col(ob)]
    return tuple(flat)


# ---------------- forward pass (single pallas_call) ----------------

def autoencoder_forward(fused_flat, x, *, num_encoders, hidden, num_enc_blocks, num_dec_blocks):
    N, Cin, L = x.shape
    assert L % (2 ** num_enc_blocks) == 0, "input_length must be divisible by 2**num_enc_blocks"
    Ld = L // (2 ** num_enc_blocks)
    cpad = (-Cin) % 8
    xp = jnp.pad(x, ((0, 0), (0, cpad), (0, 0))) if cpad else x   # matches zero-padded first-conv weight
    # channel-major flat layout (C, N*L): batch folded into the lane axis (wrapper-side reshape)
    x2 = jnp.transpose(xp, (1, 0, 2)).reshape(Cin + cpad, N * L)

    kernel = functools.partial(_fused_ae_kernel, N=N, L0=L, num_enc_blocks=num_enc_blocks,
                               num_dec_blocks=num_dec_blocks, eps=1e-5)

    param_elems = sum(int(p.size) for p in fused_flat)
    cost = pl.CostEstimate(
        flops=2 * param_elems * N * L,        # rough: every fused weight applied at full length
        transcendentals=0,
        bytes_accessed=4 * (int(x2.size) + param_elems + N * Cin * L + N * hidden * Ld))

    y2, z2 = pl.pallas_call(
        kernel,
        out_shape=(jax.ShapeDtypeStruct((Cin, N * L), x.dtype),
                   jax.ShapeDtypeStruct((hidden, N * Ld), x.dtype)),
        compiler_params=pltpu.CompilerParams(vmem_limit_bytes=16 * 1024 * 1024),
        cost_estimate=cost,
    )(x2, *fused_flat)

    # undo the flat channel-major layout in the wrapper (regular XLA ops)
    y = jnp.transpose(y2.reshape(Cin, N, L), (1, 0, 2))
    zcat = jnp.transpose(z2.reshape(hidden, N, Ld), (1, 0, 2))
    per = hidden // num_encoders
    zs = [zcat[:, e * per:(e + 1) * per, :] for e in range(num_encoders)]
    return y, zs


# ---------------- parameter init (deterministic, PyTorch-style, in-script) ----------------

def _init_conv(key, cout, cin, k):
    kw, kb = jax.random.split(key)
    bound = 1.0 / math.sqrt(cin * k)
    w = jax.random.uniform(kw, (cout, cin, k), jnp.float32, -bound, bound)
    b = jax.random.uniform(kb, (cout,), jnp.float32, -bound, bound)
    return w, b


def _init_conv_t(key, cin, cout, k):
    kw, kb = jax.random.split(key)
    bound = 1.0 / math.sqrt(cout * k)
    w = jax.random.uniform(kw, (cin, cout, k), jnp.float32, -bound, bound)
    b = jax.random.uniform(kb, (cout,), jnp.float32, -bound, bound)
    return w, b


def init_autoencoder(key, *, input_channels, channels, hidden, num_encoders):
    enc_channels = [c // num_encoders for c in channels]
    keys = jax.random.split(key, num_encoders + 2)
    params = {}

    def init_encoder(ekey):
        chans = [input_channels] + enc_channels
        bkeys = jax.random.split(ekey, len(chans))
        blocks = []
        for i in range(len(chans) - 1):
            cin, cout = chans[i], chans[i + 1]
            k1, k2 = jax.random.split(bkeys[i])
            w1, b1 = _init_conv(k1, cout, cin, 7)
            w2, b2 = _init_conv(k2, cout, cout, 7)
            blocks.append(dict(
                w1=w1, b1=b1, g1=jnp.ones((cout,), jnp.float32), be1=jnp.zeros((cout,), jnp.float32),
                w2=w2, b2=b2, g2=jnp.ones((cout,), jnp.float32), be2=jnp.zeros((cout,), jnp.float32)))
        wf, bf = _init_conv(bkeys[-1], hidden // num_encoders, enc_channels[-1], 1)
        return dict(blocks=blocks, wf=wf, bf=bf)

    params['encoders'] = [init_encoder(keys[i]) for i in range(num_encoders)]

    # Decoder: channel list is [channels[0]] + channels, e.g. [8, 8, 16, 32]
    dec_channels = [channels[0]] + channels
    dkeys = jax.random.split(keys[num_encoders], len(dec_channels))
    w0, b0 = _init_conv(dkeys[0], dec_channels[-1], hidden, 1)
    dblocks = []
    j = 1
    for c_i in reversed(range(1, len(dec_channels))):
        cin, cout = dec_channels[c_i], dec_channels[c_i - 1]
        wt, bt = _init_conv_t(dkeys[j], cin, cout, 7)
        dblocks.append(dict(w=wt, b=bt))
        j += 1
    params['decoder'] = dict(w0=w0, b0=b0, blocks=dblocks)

    # Output head: weight_norm(Conv1d(channels[0] -> input_channels, k=1))
    kv, kb = jax.random.split(keys[num_encoders + 1])
    bound = 1.0 / math.sqrt(channels[0])
    v = jax.random.uniform(kv, (input_channels, channels[0], 1), jnp.float32, -bound, bound)
    g = jnp.sqrt(jnp.sum(v * v, axis=(1, 2), keepdims=True))   # weight_norm init: g = ||v||
    ob = jax.random.uniform(kb, (input_channels,), jnp.float32, -bound, bound)
    params['output'] = dict(v=v, g=g, b=ob)
    return params


if __name__ == "__main__":
    N = 2
    input_channels = 3
    input_length = 16
    channels = [8, 16, 32]
    hidden = 32
    num_encoders = 4

    key = jax.random.PRNGKey(0)
    pkey, xkey = jax.random.split(key)
    params = init_autoencoder(pkey, input_channels=input_channels, channels=channels,
                              hidden=hidden, num_encoders=num_encoders)
    fused = fuse_params(params)                       # one-time parameter preprocessing
    x = jax.random.normal(xkey, (N, input_channels, input_length), jnp.float32)

    fwd = jax.jit(functools.partial(
        autoencoder_forward,
        num_encoders=num_encoders, hidden=hidden,
        num_enc_blocks=len(channels), num_dec_blocks=len(channels)))

    y, zs = fwd(fused, x)
    y = jax.block_until_ready(y)
    zs = [jax.block_until_ready(z) for z in zs]

    assert y.shape == (N, input_channels, input_length), y.shape
    assert len(zs) == num_encoders
    down_len = input_length // (2 ** len(channels))
    for z in zs:
        assert z.shape == (N, hidden // num_encoders, down_len), z.shape
    assert bool(jnp.all(jnp.isfinite(y)))
    print("KERNEL_OK")
</pallas_src>

<mosaic_0001>
module attributes {stable_mosaic.version = 11 : i64} {
  func.func @_fused_ae_kernel(%arg0: memref<8x32xf32, #tpu.memory_space<vmem>>, %arg1: memref<8x56xf32, #tpu.memory_space<vmem>>, %arg2: memref<8x1xf32, #tpu.memory_space<vmem>>, %arg3: memref<8x1xf32, #tpu.memory_space<vmem>>, %arg4: memref<8x1xf32, #tpu.memory_space<vmem>>, %arg5: memref<8x56xf32, #tpu.memory_space<vmem>>, %arg6: memref<8x1xf32, #tpu.memory_space<vmem>>, %arg7: memref<8x1xf32, #tpu.memory_space<vmem>>, %arg8: memref<8x1xf32, #tpu.memory_space<vmem>>, %arg9: memref<16x56xf32, #tpu.memory_space<vmem>>, %arg10: memref<16x1xf32, #tpu.memory_space<vmem>>, %arg11: memref<16x1xf32, #tpu.memory_space<vmem>>, %arg12: memref<16x1xf32, #tpu.memory_space<vmem>>, %arg13: memref<16x112xf32, #tpu.memory_space<vmem>>, %arg14: memref<16x1xf32, #tpu.memory_space<vmem>>, %arg15: memref<16x1xf32, #tpu.memory_space<vmem>>, %arg16: memref<16x1xf32, #tpu.memory_space<vmem>>, %arg17: memref<32x112xf32, #tpu.memory_space<vmem>>, %arg18: memref<32x1xf32, #tpu.memory_space<vmem>>, %arg19: memref<32x1xf32, #tpu.memory_space<vmem>>, %arg20: memref<32x1xf32, #tpu.memory_space<vmem>>, %arg21: memref<32x224xf32, #tpu.memory_space<vmem>>, %arg22: memref<32x1xf32, #tpu.memory_space<vmem>>, %arg23: memref<32x1xf32, #tpu.memory_space<vmem>>, %arg24: memref<32x1xf32, #tpu.memory_space<vmem>>, %arg25: memref<32x32xf32, #tpu.memory_space<vmem>>, %arg26: memref<32x1xf32, #tpu.memory_space<vmem>>, %arg27: memref<32x32xf32, #tpu.memory_space<vmem>>, %arg28: memref<32x1xf32, #tpu.memory_space<vmem>>, %arg29: memref<16x224xf32, #tpu.memory_space<vmem>>, %arg30: memref<16x1xf32, #tpu.memory_space<vmem>>, %arg31: memref<8x112xf32, #tpu.memory_space<vmem>>, %arg32: memref<8x1xf32, #tpu.memory_space<vmem>>, %arg33: memref<8x56xf32, #tpu.memory_space<vmem>>, %arg34: memref<8x1xf32, #tpu.memory_space<vmem>>, %arg35: memref<3x8xf32, #tpu.memory_space<vmem>>, %arg36: memref<3x1xf32, #tpu.memory_space<vmem>>, %arg37: memref<3x32xf32, #tpu.memory_space<vmem>>, %arg38: memref<32x4xf32, #tpu.memory_space<vmem>>) attributes {dimension_semantics = [], scalar_prefetch = 0 : i64, scratch_operands = 0 : i64, tpu.core_type = #tpu.core_type<tc>} {
    %c0 = arith.constant 0 : index
    %c0_0 = arith.constant 0 : index
    %0 = vector.load %arg0[%c0, %c0_0] : memref<8x32xf32, #tpu.memory_space<vmem>>, vector<8x32xf32>
    %c0_1 = arith.constant 0 : index
    %c0_2 = arith.constant 0 : index
    %1 = vector.load %arg1[%c0_1, %c0_2] : memref<8x56xf32, #tpu.memory_space<vmem>>, vector<8x56xf32>
    %c0_3 = arith.constant 0 : index
    %c0_4 = arith.constant 0 : index
    %2 = vector.load %arg2[%c0_3, %c0_4] : memref<8x1xf32, #tpu.memory_space<vmem>>, vector<8x1xf32>
    %cst = arith.constant 0.000000e+00 : f32
    %3 = vector.broadcast %cst : f32 to vector<8x3xf32>
    %4 = vector.extract_strided_slice %0 {offsets = [0, 0], sizes = [8, 16], strides = [1, 1]} : vector<8x32xf32> to vector<8x16xf32>
    %5 = tpu.concatenate %3, %4, %3 in 1 : vector<8x3xf32>, vector<8x16xf32>, vector<8x3xf32> -> vector<8x22xf32>
    %6 = vector.extract_strided_slice %5 {offsets = [0, 0], sizes = [8, 16], strides = [1, 1]} : vector<8x22xf32> to vector<8x16xf32>
    %7 = vector.extract_strided_slice %5 {offsets = [0, 1], sizes = [8, 16], strides = [1, 1]} : vector<8x22xf32> to vector<8x16xf32>
    %8 = vector.extract_strided_slice %5 {offsets = [0, 2], sizes = [8, 16], strides = [1, 1]} : vector<8x22xf32> to vector<8x16xf32>
    %9 = vector.extract_strided_slice %5 {offsets = [0, 3], sizes = [8, 16], strides = [1, 1]} : vector<8x22xf32> to vector<8x16xf32>
    %10 = vector.extract_strided_slice %5 {offsets = [0, 4], sizes = [8, 16], strides = [1, 1]} : vector<8x22xf32> to vector<8x16xf32>
    %11 = vector.extract_strided_slice %5 {offsets = [0, 5], sizes = [8, 16], strides = [1, 1]} : vector<8x22xf32> to vector<8x16xf32>
    %12 = vector.extract_strided_slice %5 {offsets = [0, 6], sizes = [8, 16], strides = [1, 1]} : vector<8x22xf32> to vector<8x16xf32>
    %13 = tpu.concatenate %6, %7, %8, %9, %10, %11, %12 in 0 : vector<8x16xf32>, vector<8x16xf32>, vector<8x16xf32>, vector<8x16xf32>, vector<8x16xf32>, vector<8x16xf32>, vector<8x16xf32> -> vector<56x16xf32>
    %14 = vector.extract_strided_slice %0 {offsets = [0, 16], sizes = [8, 16], strides = [1, 1]} : vector<8x32xf32> to vector<8x16xf32>
    %15 = tpu.concatenate %3, %14, %3 in 1 : vector<8x3xf32>, vector<8x16xf32>, vector<8x3xf32> -> vector<8x22xf32>
    %16 = vector.extract_strided_slice %15 {offsets = [0, 0], sizes = [8, 16], strides = [1, 1]} : vector<8x22xf32> to vector<8x16xf32>
    %17 = vector.extract_strided_slice %15 {offsets = [0, 1], sizes = [8, 16], strides = [1, 1]} : vector<8x22xf32> to vector<8x16xf32>
    %18 = vector.extract_strided_slice %15 {offsets = [0, 2], sizes = [8, 16], strides = [1, 1]} : vector<8x22xf32> to vector<8x16xf32>
    %19 = vector.extract_strided_slice %15 {offsets = [0, 3], sizes = [8, 16], strides = [1, 1]} : vector<8x22xf32> to vector<8x16xf32>
    %20 = vector.extract_strided_slice %15 {offsets = [0, 4], sizes = [8, 16], strides = [1, 1]} : vector<8x22xf32> to vector<8x16xf32>
    %21 = vector.extract_strided_slice %15 {offsets = [0, 5], sizes = [8, 16], strides = [1, 1]} : vector<8x22xf32> to vector<8x16xf32>
    %22 = vector.extract_strided_slice %15 {offsets = [0, 6], sizes = [8, 16], strides = [1, 1]} : vector<8x22xf32> to vector<8x16xf32>
    %23 = tpu.concatenate %16, %17, %18, %19, %20, %21, %22 in 0 : vector<8x16xf32>, vector<8x16xf32>, vector<8x16xf32>, vector<8x16xf32>, vector<8x16xf32>, vector<8x16xf32>, vector<8x16xf32> -> vector<56x16xf32>
    %24 = tpu.concatenate %13, %23 in 1 : vector<56x16xf32>, vector<56x16xf32> -> vector<56x32xf32>
    %cst_5 = arith.constant dense<0.000000e+00> : vector<8x32xf32>
    %25 = tpu.matmul %1, %24, %cst_5 {dimension_numbers = #tpu.dot_dimension_numbers<[1], [0], [0], [1], [0, 0, 1, 1], [], []>} : vector<8x56xf32>, vector<56x32xf32>, vector<8x32xf32> -> vector<8x32xf32>
    %26 = vector.broadcast %2 : vector<8x1xf32> to vector<8x32xf32>
    %27 = arith.addf %25, %26 : vector<8x32xf32>
    %cst_6 = arith.constant 0.000000e+00 : f32
    %28 = vector.broadcast %cst_6 : f32 to vector<8x32xf32>
    %29 = arith.maximumf %27, %28 : vector<8x32xf32>
    %c0_7 = arith.constant 0 : index
    %c0_8 = arith.constant 0 : index
    %30 = vector.load %arg3[%c0_7, %c0_8] : memref<8x1xf32, #tpu.memory_space<vmem>>, vector<8x1xf32>
    %c0_9 = arith.constant 0 : index
    %c0_10 = arith.constant 0 : index
    %31 = vector.load %arg4[%c0_9, %c0_10] : memref<8x1xf32, #tpu.memory_space<vmem>>, vector<8x1xf32>
    %cst_11 = arith.constant dense<0.000000e+00> : vector<8xf32>
    %32 = vector.multi_reduction <add>, %29, %cst_11 [1] : vector<8x32xf32> to vector<8xf32>
    %33 = vector.shape_cast %32 : vector<8xf32> to vector<8x1xf32>
    %cst_12 = arith.constant 3.200000e+01 : f32
    %34 = vector.broadcast %cst_12 : f32 to vector<8x1xf32>
    %35 = arith.divf %33, %34 : vector<8x1xf32>
    %36 = vector.broadcast %35 : vector<8x1xf32> to vector<8x32xf32>
    %37 = arith.subf %29, %36 : vector<8x32xf32>
    %38 = arith.mulf %37, %37 : vector<8x32xf32>
    %cst_13 = arith.constant dense<0.000000e+00> : vector<8xf32>
    %39 = vector.multi_reduction <add>, %38, %cst_13 [1] : vector<8x32xf32> to vector<8xf32>
    %40 = vector.shape_cast %39 : vector<8xf32> to vector<8x1xf32>
    %cst_14 = arith.constant 3.200000e+01 : f32
    %41 = vector.broadcast %cst_14 : f32 to vector<8x1xf32>
    %42 = arith.divf %40, %41 : vector<8x1xf32>
    %43 = vector.broadcast %35 : vector<8x1xf32> to vector<8x32xf32>
    %44 = arith.subf %29, %43 : vector<8x32xf32>
    %cst_15 = arith.constant 9.99999974E-6 : f32
    %45 = vector.broadcast %cst_15 : f32 to vector<8x1xf32>
    %46 = arith.addf %42, %45 : vector<8x1xf32>
    %47 = math.rsqrt %46 : vector<8x1xf32>
    %48 = vector.broadcast %47 : vector<8x1xf32> to vector<8x32xf32>
    %49 = arith.mulf %44, %48 : vector<8x32xf32>
    %50 = vector.broadcast %30 : vector<8x1xf32> to vector<8x32xf32>
    %51 = arith.mulf %49, %50 : vector<8x32xf32>
    %52 = vector.broadcast %31 : vector<8x1xf32> to vector<8x32xf32>
    %53 = arith.addf %51, %52 : vector<8x32xf32>
    %c0_16 = arith.constant 0 : index
    %c0_17 = arith.constant 0 : index
    %54 = vector.load %arg5[%c0_16, %c0_17] : memref<8x56xf32, #tpu.memory_space<vmem>>, vector<8x56xf32>
    %c0_18 = arith.constant 0 : index
    %c0_19 = arith.constant 0 : index
    %55 = vector.load %arg6[%c0_18, %c0_19] : memref<8x1xf32, #tpu.memory_space<vmem>>, vector<8x1xf32>
    %cst_20 = arith.constant 0.000000e+00 : f32
    %56 = vector.broadcast %cst_20 : f32 to vector<8x3xf32>
    %57 = vector.extract_strided_slice %53 {offsets = [0, 0], sizes = [8, 16], strides = [1, 1]} : vector<8x32xf32> to vector<8x16xf32>
    %58 = tpu.concatenate %56, %57, %56 in 1 : vector<8x3xf32>, vector<8x16xf32>, vector<8x3xf32> -> vector<8x22xf32>
    %59 = vector.extract_strided_slice %58 {offsets = [0, 0], sizes = [8, 16], strides = [1, 1]} : vector<8x22xf32> to vector<8x16xf32>
    %60 = vector.extract_strided_slice %58 {offsets = [0, 1], sizes = [8, 16], strides = [1, 1]} : vector<8x22xf32> to vector<8x16xf32>
    %61 = vector.extract_strided_slice %58 {offsets = [0, 2], sizes = [8, 16], strides = [1, 1]} : vector<8x22xf32> to vector<8x16xf32>
    %62 = vector.extract_strided_slice %58 {offsets = [0, 3], sizes = [8, 16], strides = [1, 1]} : vector<8x22xf32> to vector<8x16xf32>
    %63 = vector.extract_strided_slice %58 {offsets = [0, 4], sizes = [8, 16], strides = [1, 1]} : vector<8x22xf32> to vector<8x16xf32>
    %64 = vector.extract_strided_slice %58 {offsets = [0, 5], sizes = [8, 16], strides = [1, 1]} : vector<8x22xf32> to vector<8x16xf32>
    %65 = vector.extract_strided_slice %58 {offsets = [0, 6], sizes = [8, 16], strides = [1, 1]} : vector<8x22xf32> to vector<8x16xf32>
    %66 = tpu.concatenate %59, %60, %61, %62, %63, %64, %65 in 0 : vector<8x16xf32>, vector<8x16xf32>, vector<8x16xf32>, vector<8x16xf32>, vector<8x16xf32>, vector<8x16xf32>, vector<8x16xf32> -> vector<56x16xf32>
    %67 = vector.extract_strided_slice %53 {offsets = [0, 16], sizes = [8, 16], strides = [1, 1]} : vector<8x32xf32> to vector<8x16xf32>
    %68 = tpu.concatenate %56, %67, %56 in 1 : vector<8x3xf32>, vector<8x16xf32>, vector<8x3xf32> -> vector<8x22xf32>
    %69 = vector.extract_strided_slice %68 {offsets = [0, 0], sizes = [8, 16], strides = [1, 1]} : vector<8x22xf32> to vector<8x16xf32>
    %70 = vector.extract_strided_slice %68 {offsets = [0, 1], sizes = [8, 16], strides = [1, 1]} : vector<8x22xf32> to vector<8x16xf32>
    %71 = vector.extract_strided_slice %68 {offsets = [0, 2], sizes = [8, 16], strides = [1, 1]} : vector<8x22xf32> to vector<8x16xf32>
    %72 = vector.extract_strided_slice %68 {offsets = [0, 3], sizes = [8, 16], strides = [1, 1]} : vector<8x22xf32> to vector<8x16xf32>
    %73 = vector.extract_strided_slice %68 {offsets = [0, 4], sizes = [8, 16], strides = [1, 1]} : vector<8x22xf32> to vector<8x16xf32>
    %74 = vector.extract_strided_slice %68 {offsets = [0, 5], sizes = [8, 16], strides = [1, 1]} : vector<8x22xf32> to vector<8x16xf32>
    %75 = vector.extract_strided_slice %68 {offsets = [0, 6], sizes = [8, 16], strides = [1, 1]} : vector<8x22xf32> to vector<8x16xf32>
    %76 = tpu.concatenate %69, %70, %71, %72, %73, %74, %75 in 0 : vector<8x16xf32>, vector<8x16xf32>, vector<8x16xf32>, vector<8x16xf32>, vector<8x16xf32>, vector<8x16xf32>, vector<8x16xf32> -> vector<56x16xf32>
    %77 = tpu.concatenate %66, %76 in 1 : vector<56x16xf32>, vector<56x16xf32> -> vector<56x32xf32>
    %cst_21 = arith.constant dense<0.000000e+00> : vector<8x32xf32>
    %78 = tpu.matmul %54, %77, %cst_21 {dimension_numbers = #tpu.dot_dimension_numbers<[1], [0], [0], [1], [0, 0, 1, 1], [], []>} : vector<8x56xf32>, vector<56x32xf32>, vector<8x32xf32> -> vector<8x32xf32>
    %79 = vector.broadcast %55 : vector<8x1xf32> to vector<8x32xf32>
    %80 = arith.addf %78, %79 : vector<8x32xf32>
    %cst_22 = arith.constant 0.000000e+00 : f32
    %81 = vector.broadcast %cst_22 : f32 to vector<8x32xf32>
    %82 = arith.maximumf %80, %81 : vector<8x32xf32>
    %83 = tpu.iota {dimensions = array<i32: 0>} : vector<32x16xi32>
    %84 = tpu.iota {dimensions = array<i32: 1>} : vector<32x16xi32>
    %c2_i32 = arith.constant 2 : i32
    %85 = vector.broadcast %c2_i32 : i32 to vector<32x16xi32>
    %86 = arith.muli %85, %84 : vector<32x16xi32>
    %87 = arith.cmpi eq, %83, %86 : vector<32x16xi32>
    %cst_23 = arith.constant 1.000000e+00 : f32
    %cst_24 = arith.constant 0.000000e+00 : f32
    %88 = vector.broadcast %cst_23 : f32 to vector<32x16xf32>
    %89 = vector.broadcast %cst_24 : f32 to vector<32x16xf32>
    %90 = arith.select %87, %88, %89 : vector<32x16xi1>, vector<32x16xf32>
    %c2_i32_25 = arith.constant 2 : i32
    %91 = vector.broadcast %c2_i32_25 : i32 to vector<32x16xi32>
    %92 = arith.muli %91, %84 : vector<32x16xi32>
    %c1_i32 = arith.constant 1 : i32
    %93 = vector.broadcast %c1_i32 : i32 to vector<32x16xi32>
    %94 = arith.addi %92, %93 : vector<32x16xi32>
    %95 = arith.cmpi eq, %83, %94 : vector<32x16xi32>
    %cst_26 = arith.constant 1.000000e+00 : f32
    %cst_27 = arith.constant 0.000000e+00 : f32
    %96 = vector.broadcast %cst_26 : f32 to vector<32x16xf32>
    %97 = vector.broadcast %cst_27 : f32 to vector<32x16xf32>
    %98 = arith.select %95, %96, %97 : vector<32x16xi1>, vector<32x16xf32>
    %cst_28 = arith.constant dense<0.000000e+00> : vector<8x16xf32>
    %99 = tpu.matmul %82, %90, %cst_28 {dimension_numbers = #tpu.dot_dimension_numbers<[1], [0], [0], [1], [0, 0, 1, 1], [], []>} : vector<8x32xf32>, vector<32x16xf32>, vector<8x16xf32> -> vector<8x16xf32>
    %cst_29 = arith.constant dense<0.000000e+00> : vector<8x16xf32>
    %100 = tpu.matmul %82, %98, %cst_29 {dimension_numbers = #tpu.dot_dimension_numbers<[1], [0], [0], [1], [0, 0, 1, 1], [], []>} : vector<8x32xf32>, vector<32x16xf32>, vector<8x16xf32> -> vector<8x16xf32>
    %101 = arith.maximumf %99, %100 : vector<8x16xf32>
    %c0_30 = arith.constant 0 : index
    %c0_31 = arith.constant 0 : index
    %102 = vector.load %arg7[%c0_30, %c0_31] : memref<8x1xf32, #tpu.memory_space<vmem>>, vector<8x1xf32>
    %c0_32 = arith.constant 0 : index
    %c0_33 = arith.constant 0 : index
    %103 = vector.load %arg8[%c0_32, %c0_33] : memref<8x1xf32, #tpu.memory_space<vmem>>, vector<8x1xf32>
    %cst_34 = arith.constant dense<0.000000e+00> : vector<8xf32>
    %104 = vector.multi_reduction <add>, %101, %cst_34 [1] : vector<8x16xf32> to vector<8xf32>
    %105 = vector.shape_cast %104 : vector<8xf32> to vector<8x1xf32>
    %cst_35 = arith.constant 1.600000e+01 : f32
    %106 = vector.broadcast %cst_35 : f32 to vector<8x1xf32>
    %107 = arith.divf %105, %106 : vector<8x1xf32>
    %108 = vector.broadcast %107 : vector<8x1xf32> to vector<8x16xf32>
    %109 = arith.subf %101, %108 : vector<8x16xf32>
    %110 = arith.mulf %109, %109 : vector<8x16xf32>
    %cst_36 = arith.constant dense<0.000000e+00> : vector<8xf32>
    %111 = vector.multi_reduction <add>, %110, %cst_36 [1] : vector<8x16xf32> to vector<8xf32>
    %112 = vector.shape_cast %111 : vector<8xf32> to vector<8x1xf32>
    %cst_37 = arith.constant 1.600000e+01 : f32
    %113 = vector.broadcast %cst_37 : f32 to vector<8x1xf32>
    %114 = arith.divf %112, %113 : vector<8x1xf32>
    %115 = vector.broadcast %107 : vector<8x1xf32> to vector<8x16xf32>
    %116 = arith.subf %101, %115 : vector<8x16xf32>
    %cst_38 = arith.constant 9.99999974E-6 : f32
    %117 = vector.broadcast %cst_38 : f32 to vector<8x1xf32>
    %118 = arith.addf %114, %117 : vector<8x1xf32>
    %119 = math.rsqrt %118 : vector<8x1xf32>
    %120 = vector.broadcast %119 : vector<8x1xf32> to vector<8x16xf32>
    %121 = arith.mulf %116, %120 : vector<8x16xf32>
    %122 = vector.broadcast %102 : vector<8x1xf32> to vector<8x16xf32>
    %123 = arith.mulf %121, %122 : vector<8x16xf32>
    %124 = vector.broadcast %103 : vector<8x1xf32> to vector<8x16xf32>
    %125 = arith.addf %123, %124 : vector<8x16xf32>
    %c0_39 = arith.constant 0 : index
    %c0_40 = arith.constant 0 : index
    %126 = vector.load %arg9[%c0_39, %c0_40] : memref<16x56xf32, #tpu.memory_space<vmem>>, vector<16x56xf32>
    %c0_41 = arith.constant 0 : index
    %c0_42 = arith.constant 0 : index
    %127 = vector.load %arg10[%c0_41, %c0_42] : memref<16x1xf32, #tpu.memory_space<vmem>>, vector<16x1xf32>
    %cst_43 = arith.constant 0.000000e+00 : f32
    %128 = vector.broadcast %cst_43 : f32 to vector<8x3xf32>
    %129 = vector.extract_strided_slice %125 {offsets = [0, 0], sizes = [8, 8], strides = [1, 1]} : vector<8x16xf32> to vector<8x8xf32>
    %130 = tpu.concatenate %128, %129, %128 in 1 : vector<8x3xf32>, vector<8x8xf32>, vector<8x3xf32> -> vector<8x14xf32>
    %131 = vector.extract_strided_slice %130 {offsets = [0, 0], sizes = [8, 8], strides = [1, 1]} : vector<8x14xf32> to vector<8x8xf32>
    %132 = vector.extract_strided_slice %130 {offsets = [0, 1], sizes = [8, 8], strides = [1, 1]} : vector<8x14xf32> to vector<8x8xf32>
    %133 = vector.extract_strided_slice %130 {offsets = [0, 2], sizes = [8, 8], strides = [1, 1]} : vector<8x14xf32> to vector<8x8xf32>
    %134 = vector.extract_strided_slice %130 {offsets = [0, 3], sizes = [8, 8], strides = [1, 1]} : vector<8x14xf32> to vector<8x8xf32>
    %135 = vector.extract_strided_slice %130 {offsets = [0, 4], sizes = [8, 8], strides = [1, 1]} : vector<8x14xf32> to vector<8x8xf32>
    %136 = vector.extract_strided_slice %130 {offsets = [0, 5], sizes = [8, 8], strides = [1, 1]} : vector<8x14xf32> to vector<8x8xf32>
    %137 = vector.extract_strided_slice %130 {offsets = [0, 6], sizes = [8, 8], strides = [1, 1]} : vector<8x14xf32> to vector<8x8xf32>
    %138 = tpu.concatenate %131, %132, %133, %134, %135, %136, %137 in 0 : vector<8x8xf32>, vector<8x8xf32>, vector<8x8xf32>, vector<8x8xf32>, vector<8x8xf32>, vector<8x8xf32>, vector<8x8xf32> -> vector<56x8xf32>
    %139 = vector.extract_strided_slice %125 {offsets = [0, 8], sizes = [8, 8], strides = [1, 1]} : vector<8x16xf32> to vector<8x8xf32>
    %140 = tpu.concatenate %128, %139, %128 in 1 : vector<8x3xf32>, vector<8x8xf32>, vector<8x3xf32> -> vector<8x14xf32>
    %141 = vector.extract_strided_slice %140 {offsets = [0, 0], sizes = [8, 8], strides = [1, 1]} : vector<8x14xf32> to vector<8x8xf32>
    %142 = vector.extract_strided_slice %140 {offsets = [0, 1], sizes = [8, 8], strides = [1, 1]} : vector<8x14xf32> to vector<8x8xf32>
    %143 = vector.extract_strided_slice %140 {offsets = [0, 2], sizes = [8, 8], strides = [1, 1]} : vector<8x14xf32> to vector<8x8xf32>
    %144 = vector.extract_strided_slice %140 {offsets = [0, 3], sizes = [8, 8], strides = [1, 1]} : vector<8x14xf32> to vector<8x8xf32>
    %145 = vector.extract_strided_slice %140 {offsets = [0, 4], sizes = [8, 8], strides = [1, 1]} : vector<8x14xf32> to vector<8x8xf32>
    %146 = vector.extract_strided_slice %140 {offsets = [0, 5], sizes = [8, 8], strides = [1, 1]} : vector<8x14xf32> to vector<8x8xf32>
    %147 = vector.extract_strided_slice %140 {offsets = [0, 6], sizes = [8, 8], strides = [1, 1]} : vector<8x14xf32> to vector<8x8xf32>
    %148 = tpu.concatenate %141, %142, %143, %144, %145, %146, %147 in 0 : vector<8x8xf32>, vector<8x8xf32>, vector<8x8xf32>, vector<8x8xf32>, vector<8x8xf32>, vector<8x8xf32>, vector<8x8xf32> -> vector<56x8xf32>
    %149 = tpu.concatenate %138, %148 in 1 : vector<56x8xf32>, vector<56x8xf32> -> vector<56x16xf32>
    %cst_44 = arith.constant dense<0.000000e+00> : vector<16x16xf32>
    %150 = tpu.matmul %126, %149, %cst_44 {dimension_numbers = #tpu.dot_dimension_numbers<[1], [0], [0], [1], [0, 0, 1, 1], [], []>} : vector<16x56xf32>, vector<56x16xf32>, vector<16x16xf32> -> vector<16x16xf32>
    %151 = vector.broadcast %127 : vector<16x1xf32> to vector<16x16xf32>
    %152 = arith.addf %150, %151 : vector<16x16xf32>
    %cst_45 = arith.constant 0.000000e+00 : f32
    %153 = vector.broadcast %cst_45 : f32 to vector<16x16xf32>
    %154 = arith.maximumf %152, %153 : vector<16x16xf32>
    %c0_46 = arith.constant 0 : index
    %c0_47 = arith.constant 0 : index
    %155 = vector.load %arg11[%c0_46, %c0_47] : memref<16x1xf32, #tpu.memory_space<vmem>>, vector<16x1xf32>
    %c0_48 = arith.constant 0 : index
    %c0_49 = arith.constant 0 : index
    %156 = vector.load %arg12[%c0_48, %c0_49] : memref<16x1xf32, #tpu.memory_space<vmem>>, vector<16x1xf32>
    %cst_50 = arith.constant dense<0.000000e+00> : vector<16xf32>
    %157 = vector.multi_reduction <add>, %154, %cst_50 [1] : vector<16x16xf32> to vector<16xf32>
    %158 = vector.shape_cast %157 : vector<16xf32> to vector<16x1xf32>
    %cst_51 = arith.constant 1.600000e+01 : f32
    %159 = vector.broadcast %cst_51 : f32 to vector<16x1xf32>
    %160 = arith.divf %158, %159 : vector<16x1xf32>
    %161 = vector.broadcast %160 : vector<16x1xf32> to vector<16x16xf32>
    %162 = arith.subf %154, %161 : vector<16x16xf32>
    %163 = arith.mulf %162, %162 : vector<16x16xf32>
    %cst_52 = arith.constant dense<0.000000e+00> : vector<16xf32>
    %164 = vector.multi_reduction <add>, %163, %cst_52 [1] : vector<16x16xf32> to vector<16xf32>
    %165 = vector.shape_cast %164 : vector<16xf32> to vector<16x1xf32>
    %cst_53 = arith.constant 1.600000e+01 : f32
    %166 = vector.broadcast %cst_53 : f32 to vector<16x1xf32>
    %167 = arith.divf %165, %166 : vector<16x1xf32>
    %168 = vector.broadcast %160 : vector<16x1xf32> to vector<16x16xf32>
    %169 = arith.subf %154, %168 : vector<16x16xf32>
    %cst_54 = arith.constant 9.99999974E-6 : f32
    %170 = vector.broadcast %cst_54 : f32 to vector<16x1xf32>
    %171 = arith.addf %167, %170 : vector<16x1xf32>
    %172 = math.rsqrt %171 : vector<16x1xf32>
    %173 = vector.broadcast %172 : vector<16x1xf32> to vector<16x16xf32>
    %174 = arith.mulf %169, %173 : vector<16x16xf32>
    %175 = vector.broadcast %155 : vector<16x1xf32> to vector<16x16xf32>
    %176 = arith.mulf %174, %175 : vector<16x16xf32>
    %177 = vector.broadcast %156 : vector<16x1xf32> to vector<16x16xf32>
    %178 = arith.addf %176, %177 : vector<16x16xf32>
    %c0_55 = arith.constant 0 : index
    %c0_56 = arith.constant 0 : index
    %179 = vector.load %arg13[%c0_55, %c0_56] : memref<16x112xf32, #tpu.memory_space<vmem>>, vector<16x112xf32>
    %c0_57 = arith.constant 0 : index
    %c0_58 = arith.constant 0 : index
    %180 = vector.load %arg14[%c0_57, %c0_58] : memref<16x1xf32, #tpu.memory_space<vmem>>, vector<16x1xf32>
    %cst_59 = arith.constant 0.000000e+00 : f32
    %181 = vector.broadcast %cst_59 : f32 to vector<16x3xf32>
    %182 = vector.extract_strided_slice %178 {offsets = [0, 0], sizes = [16, 8], strides = [1, 1]} : vector<16x16xf32> to vector<16x8xf32>
    %183 = tpu.concatenate %181, %182, %181 in 1 : vector<16x3xf32>, vector<16x8xf32>, vector<16x3xf32> -> vector<16x14xf32>
    %184 = vector.extract_strided_slice %183 {offsets = [0, 0], sizes = [16, 8], strides = [1, 1]} : vector<16x14xf32> to vector<16x8xf32>
    %185 = vector.extract_strided_slice %183 {offsets = [0, 1], sizes = [16, 8], strides = [1, 1]} : vector<16x14xf32> to vector<16x8xf32>
    %186 = vector.extract_strided_slice %183 {offsets = [0, 2], sizes = [16, 8], strides = [1, 1]} : vector<16x14xf32> to vector<16x8xf32>
    %187 = vector.extract_strided_slice %183 {offsets = [0, 3], sizes = [16, 8], strides = [1, 1]} : vector<16x14xf32> to vector<16x8xf32>
    %188 = vector.extract_strided_slice %183 {offsets = [0, 4], sizes = [16, 8], strides = [1, 1]} : vector<16x14xf32> to vector<16x8xf32>
    %189 = vector.extract_strided_slice %183 {offsets = [0, 5], sizes = [16, 8], strides = [1, 1]} : vector<16x14xf32> to vector<16x8xf32>
    %190 = vector.extract_strided_slice %183 {offsets = [0, 6], sizes = [16, 8], strides = [1, 1]} : vector<16x14xf32> to vector<16x8xf32>
    %191 = tpu.concatenate %184, %185, %186, %187, %188, %189, %190 in 0 : vector<16x8xf32>, vector<16x8xf32>, vector<16x8xf32>, vector<16x8xf32>, vector<16x8xf32>, vector<16x8xf32>, vector<16x8xf32> -> vector<112x8xf32>
    %192 = vector.extract_strided_slice %178 {offsets = [0, 8], sizes = [16, 8], strides = [1, 1]} : vector<16x16xf32> to vector<16x8xf32>
    %193 = tpu.concatenate %181, %192, %181 in 1 : vector<16x3xf32>, vector<16x8xf32>, vector<16x3xf32> -> vector<16x14xf32>
    %194 = vector.extract_strided_slice %193 {offsets = [0, 0], sizes = [16, 8], strides = [1, 1]} : vector<16x14xf32> to vector<16x8xf32>
    %195 = vector.extract_strided_slice %193 {offsets = [0, 1], sizes = [16, 8], strides = [1, 1]} : vector<16x14xf32> to vector<16x8xf32>
    %196 = vector.extract_strided_slice %193 {offsets = [0, 2], sizes = [16, 8], strides = [1, 1]} : vector<16x14xf32> to vector<16x8xf32>
    %197 = vector.extract_strided_slice %193 {offsets = [0, 3], sizes = [16, 8], strides = [1, 1]} : vector<16x14xf32> to vector<16x8xf32>
    %198 = vector.extract_strided_slice %193 {offsets = [0, 4], sizes = [16, 8], strides = [1, 1]} : vector<16x14xf32> to vector<16x8xf32>
    %199 = vector.extract_strided_slice %193 {offsets = [0, 5], sizes = [16, 8], strides = [1, 1]} : vector<16x14xf32> to vector<16x8xf32>
    %200 = vector.extract_strided_slice %193 {offsets = [0, 6], sizes = [16, 8], strides = [1, 1]} : vector<16x14xf32> to vector<16x8xf32>
    %201 = tpu.concatenate %194, %195, %196, %197, %198, %199, %200 in 0 : vector<16x8xf32>, vector<16x8xf32>, vector<16x8xf32>, vector<16x8xf32>, vector<16x8xf32>, vector<16x8xf32>, vector<16x8xf32> -> vector<112x8xf32>
    %202 = tpu.concatenate %191, %201 in 1 : vector<112x8xf32>, vector<112x8xf32> -> vector<112x16xf32>
    %cst_60 = arith.constant dense<0.000000e+00> : vector<16x16xf32>
    %203 = tpu.matmul %179, %202, %cst_60 {dimension_numbers = #tpu.dot_dimension_numbers<[1], [0], [0], [1], [0, 0, 1, 1], [], []>} : vector<16x112xf32>, vector<112x16xf32>, vector<16x16xf32> -> vector<16x16xf32>
    %204 = vector.broadcast %180 : vector<16x1xf32> to vector<16x16xf32>
    %205 = arith.addf %203, %204 : vector<16x16xf32>
    %cst_61 = arith.constant 0.000000e+00 : f32
    %206 = vector.broadcast %cst_61 : f32 to vector<16x16xf32>
    %207 = arith.maximumf %205, %206 : vector<16x16xf32>
    %208 = tpu.iota {dimensions = array<i32: 0>} : vector<16x8xi32>
    %209 = tpu.iota {dimensions = array<i32: 1>} : vector<16x8xi32>
    %c2_i32_62 = arith.constant 2 : i32
    %210 = vector.broadcast %c2_i32_62 : i32 to vector<16x8xi32>
    %211 = arith.muli %210, %209 : vector<16x8xi32>
    %212 = arith.cmpi eq, %208, %211 : vector<16x8xi32>
    %cst_63 = arith.constant 1.000000e+00 : f32
    %cst_64 = arith.constant 0.000000e+00 : f32
    %213 = vector.broadcast %cst_63 : f32 to vector<16x8xf32>
    %214 = vector.broadcast %cst_64 : f32 to vector<16x8xf32>
    %215 = arith.select %212, %213, %214 : vector<16x8xi1>, vector<16x8xf32>
    %c2_i32_65 = arith.constant 2 : i32
    %216 = vector.broadcast %c2_i32_65 : i32 to vector<16x8xi32>
    %217 = arith.muli %216, %209 : vector<16x8xi32>
    %c1_i32_66 = arith.constant 1 : i32
    %218 = vector.broadcast %c1_i32_66 : i32 to vector<16x8xi32>
    %219 = arith.addi %217, %218 : vector<16x8xi32>
    %220 = arith.cmpi eq, %208, %219 : vector<16x8xi32>
    %cst_67 = arith.constant 1.000000e+00 : f32
    %cst_68 = arith.constant 0.000000e+00 : f32
    %221 = vector.broadcast %cst_67 : f32 to vector<16x8xf32>
    %222 = vector.broadcast %cst_68 : f32 to vector<16x8xf32>
    %223 = arith.select %220, %221, %222 : vector<16x8xi1>, vector<16x8xf32>
    %cst_69 = arith.constant dense<0.000000e+00> : vector<16x8xf32>
    %224 = tpu.matmul %207, %215, %cst_69 {dimension_numbers = #tpu.dot_dimension_numbers<[1], [0], [0], [1], [0, 0, 1, 1], [], []>} : vector<16x16xf32>, vector<16x8xf32>, vector<16x8xf32> -> vector<16x8xf32>
    %cst_70 = arith.constant dense<0.000000e+00> : vector<16x8xf32>
    %225 = tpu.matmul %207, %223, %cst_70 {dimension_numbers = #tpu.dot_dimension_numbers<[1], [0], [0], [1], [0, 0, 1, 1], [], []>} : vector<16x16xf32>, vector<16x8xf32>, vector<16x8xf32> -> vector<16x8xf32>
    %226 = arith.maximumf %224, %225 : vector<16x8xf32>
    %c0_71 = arith.constant 0 : index
    %c0_72 = arith.constant 0 : index
    %227 = vector.load %arg15[%c0_71, %c0_72] : memref<16x1xf32, #tpu.memory_space<vmem>>, vector<16x1xf32>
    %c0_73 = arith.constant 0 : index
    %c0_74 = arith.constant 0 : index
    %228 = vector.load %arg16[%c0_73, %c0_74] : memref<16x1xf32, #tpu.memory_space<vmem>>, vector<16x1xf32>
    %cst_75 = arith.constant dense<0.000000e+00> : vector<16xf32>
    %229 = vector.multi_reduction <add>, %226, %cst_75 [1] : vector<16x8xf32> to vector<16xf32>
    %230 = vector.shape_cast %229 : vector<16xf32> to vector<16x1xf32>
    %cst_76 = arith.constant 8.000000e+00 : f32
    %231 = vector.broadcast %cst_76 : f32 to vector<16x1xf32>
    %232 = arith.divf %230, %231 : vector<16x1xf32>
    %233 = vector.broadcast %232 : vector<16x1xf32> to vector<16x8xf32>
    %234 = arith.subf %226, %233 : vector<16x8xf32>
    %235 = arith.mulf %234, %234 : vector<16x8xf32>
    %cst_77 = arith.constant dense<0.000000e+00> : vector<16xf32>
    %236 = vector.multi_reduction <add>, %235, %cst_77 [1] : vector<16x8xf32> to vector<16xf32>
    %237 = vector.shape_cast %236 : vector<16xf32> to vector<16x1xf32>
    %cst_78 = arith.constant 8.000000e+00 : f32
    %238 = vector.broadcast %cst_78 : f32 to vector<16x1xf32>
    %239 = arith.divf %237, %238 : vector<16x1xf32>
    %240 = vector.broadcast %232 : vector<16x1xf32> to vector<16x8xf32>
    %241 = arith.subf %226, %240 : vector<16x8xf32>
    %cst_79 = arith.constant 9.99999974E-6 : f32
    %242 = vector.broadcast %cst_79 : f32 to vector<16x1xf32>
    %243 = arith.addf %239, %242 : vector<16x1xf32>
    %244 = math.rsqrt %243 : vector<16x1xf32>
    %245 = vector.broadcast %244 : vector<16x1xf32> to vector<16x8xf32>
    %246 = arith.mulf %241, %245 : vector<16x8xf32>
    %247 = vector.broadcast %227 : vector<16x1xf32> to vector<16x8xf32>
    %248 = arith.mulf %246, %247 : vector<16x8xf32>
    %249 = vector.broadcast %228 : vector<16x1xf32> to vector<16x8xf32>
    %250 = arith.addf %248, %249 : vector<16x8xf32>
    %c0_80 = arith.constant 0 : index
    %c0_81 = arith.constant 0 : index
    %251 = vector.load %arg17[%c0_80, %c0_81] : memref<32x112xf32, #tpu.memory_space<vmem>>, vector<32x112xf32>
    %c0_82 = arith.constant 0 : index
    %c0_83 = arith.constant 0 : index
    %252 = vector.load %arg18[%c0_82, %c0_83] : memref<32x1xf32, #tpu.memory_space<vmem>>, vector<32x1xf32>
    %cst_84 = arith.constant 0.000000e+00 : f32
    %253 = vector.broadcast %cst_84 : f32 to vector<16x3xf32>
    %254 = vector.extract_strided_slice %250 {offsets = [0, 0], sizes = [16, 4], strides = [1, 1]} : vector<16x8xf32> to vector<16x4xf32>
    %255 = tpu.concatenate %253, %254, %253 in 1 : vector<16x3xf32>, vector<16x4xf32>, vector<16x3xf32> -> vector<16x10xf32>
    %256 = vector.extract_strided_slice %255 {offsets = [0, 0], sizes = [16, 4], strides = [1, 1]} : vector<16x10xf32> to vector<16x4xf32>
    %257 = vector.extract_strided_slice %255 {offsets = [0, 1], sizes = [16, 4], strides = [1, 1]} : vector<16x10xf32> to vector<16x4xf32>
    %258 = vector.extract_strided_slice %255 {offsets = [0, 2], sizes = [16, 4], strides = [1, 1]} : vector<16x10xf32> to vector<16x4xf32>
    %259 = vector.extract_strided_slice %255 {offsets = [0, 3], sizes = [16, 4], strides = [1, 1]} : vector<16x10xf32> to vector<16x4xf32>
    %260 = vector.extract_strided_slice %255 {offsets = [0, 4], sizes = [16, 4], strides = [1, 1]} : vector<16x10xf32> to vector<16x4xf32>
    %261 = vector.extract_strided_slice %255 {offsets = [0, 5], sizes = [16, 4], strides = [1, 1]} : vector<16x10xf32> to vector<16x4xf32>
    %262 = vector.extract_strided_slice %255 {offsets = [0, 6], sizes = [16, 4], strides = [1, 1]} : vector<16x10xf32> to vector<16x4xf32>
    %263 = tpu.concatenate %256, %257, %258, %259, %260, %261, %262 in 0 : vector<16x4xf32>, vector<16x4xf32>, vector<16x4xf32>, vector<16x4xf32>, vector<16x4xf32>, vector<16x4xf32>, vector<16x4xf32> -> vector<112x4xf32>
    %264 = vector.extract_strided_slice %250 {offsets = [0, 4], sizes = [16, 4], strides = [1, 1]} : vector<16x8xf32> to vector<16x4xf32>
    %265 = tpu.concatenate %253, %264, %253 in 1 : vector<16x3xf32>, vector<16x4xf32>, vector<16x3xf32> -> vector<16x10xf32>
    %266 = vector.extract_strided_slice %265 {offsets = [0, 0], sizes = [16, 4], strides = [1, 1]} : vector<16x10xf32> to vector<16x4xf32>
    %267 = vector.extract_strided_slice %265 {offsets = [0, 1], sizes = [16, 4], strides = [1, 1]} : vector<16x10xf32> to vector<16x4xf32>
    %268 = vector.extract_strided_slice %265 {offsets = [0, 2], sizes = [16, 4], strides = [1, 1]} : vector<16x10xf32> to vector<16x4xf32>
    %269 = vector.extract_strided_slice %265 {offsets = [0, 3], sizes = [16, 4], strides = [1, 1]} : vector<16x10xf32> to vector<16x4xf32>
    %270 = vector.extract_strided_slice %265 {offsets = [0, 4], sizes = [16, 4], strides = [1, 1]} : vector<16x10xf32> to vector<16x4xf32>
    %271 = vector.extract_strided_slice %265 {offsets = [0, 5], sizes = [16, 4], strides = [1, 1]} : vector<16x10xf32> to vector<16x4xf32>
    %272 = vector.extract_strided_slice %265 {offsets = [0, 6], sizes = [16, 4], strides = [1, 1]} : vector<16x10xf32> to vector<16x4xf32>
    %273 = tpu.concatenate %266, %267, %268, %269, %270, %271, %272 in 0 : vector<16x4xf32>, vector<16x4xf32>, vector<16x4xf32>, vector<16x4xf32>, vector<16x4xf32>, vector<16x4xf32>, vector<16x4xf32> -> vector<112x4xf32>
    %274 = tpu.concatenate %263, %273 in 1 : vector<112x4xf32>, vector<112x4xf32> -> vector<112x8xf32>
    %cst_85 = arith.constant dense<0.000000e+00> : vector<32x8xf32>
    %275 = tpu.matmul %251, %274, %cst_85 {dimension_numbers = #tpu.dot_dimension_numbers<[1], [0], [0], [1], [0, 0, 1, 1], [], []>} : vector<32x112xf32>, vector<112x8xf32>, vector<32x8xf32> -> vector<32x8xf32>
    %276 = vector.broadcast %252 : vector<32x1xf32> to vector<32x8xf32>
    %277 = arith.addf %275, %276 : vector<32x8xf32>
    %cst_86 = arith.constant 0.000000e+00 : f32
    %278 = vector.broadcast %cst_86 : f32 to vector<32x8xf32>
    %279 = arith.maximumf %277, %278 : vector<32x8xf32>
    %c0_87 = arith.constant 0 : index
    %c0_88 = arith.constant 0 : index
    %280 = vector.load %arg19[%c0_87, %c0_88] : memref<32x1xf32, #tpu.memory_space<vmem>>, vector<32x1xf32>
    %c0_89 = arith.constant 0 : index
    %c0_90 = arith.constant 0 : index
    %281 = vector.load %arg20[%c0_89, %c0_90] : memref<32x1xf32, #tpu.memory_space<vmem>>, vector<32x1xf32>
    %cst_91 = arith.constant dense<0.000000e+00> : vector<32xf32>
    %282 = vector.multi_reduction <add>, %279, %cst_91 [1] : vector<32x8xf32> to vector<32xf32>
    %283 = vector.shape_cast %282 : vector<32xf32> to vector<32x1xf32>
    %cst_92 = arith.constant 8.000000e+00 : f32
    %284 = vector.broadcast %cst_92 : f32 to vector<32x1xf32>
    %285 = arith.divf %283, %284 : vector<32x1xf32>
    %286 = vector.broadcast %285 : vector<32x1xf32> to vector<32x8xf32>
    %287 = arith.subf %279, %286 : vector<32x8xf32>
    %288 = arith.mulf %287, %287 : vector<32x8xf32>
    %cst_93 = arith.constant dense<0.000000e+00> : vector<32xf32>
    %289 = vector.multi_reduction <add>, %288, %cst_93 [1] : vector<32x8xf32> to vector<32xf32>
    %290 = vector.shape_cast %289 : vector<32xf32> to vector<32x1xf32>
    %cst_94 = arith.constant 8.000000e+00 : f32
    %291 = vector.broadcast %cst_94 : f32 to vector<32x1xf32>
    %292 = arith.divf %290, %291 : vector<32x1xf32>
    %293 = vector.broadcast %285 : vector<32x1xf32> to vector<32x8xf32>
    %294 = arith.subf %279, %293 : vector<32x8xf32>
    %cst_95 = arith.constant 9.99999974E-6 : f32
    %295 = vector.broadcast %cst_95 : f32 to vector<32x1xf32>
    %296 = arith.addf %292, %295 : vector<32x1xf32>
    %297 = math.rsqrt %296 : vector<32x1xf32>
    %298 = vector.broadcast %297 : vector<32x1xf32> to vector<32x8xf32>
    %299 = arith.mulf %294, %298 : vector<32x8xf32>
    %300 = vector.broadcast %280 : vector<32x1xf32> to vector<32x8xf32>
    %301 = arith.mulf %299, %300 : vector<32x8xf32>
    %302 = vector.broadcast %281 : vector<32x1xf32> to vector<32x8xf32>
    %303 = arith.addf %301, %302 : vector<32x8xf32>
    %c0_96 = arith.constant 0 : index
    %c0_97 = arith.constant 0 : index
    %304 = vector.load %arg21[%c0_96, %c0_97] : memref<32x224xf32, #tpu.memory_space<vmem>>, vector<32x224xf32>
    %c0_98 = arith.constant 0 : index
    %c0_99 = arith.constant 0 : index
    %305 = vector.load %arg22[%c0_98, %c0_99] : memref<32x1xf32, #tpu.memory_space<vmem>>, vector<32x1xf32>
    %cst_100 = arith.constant 0.000000e+00 : f32
    %306 = vector.broadcast %cst_100 : f32 to vector<32x3xf32>
    %307 = vector.extract_strided_slice %303 {offsets = [0, 0], sizes = [32, 4], strides = [1, 1]} : vector<32x8xf32> to vector<32x4xf32>
    %308 = tpu.concatenate %306, %307, %306 in 1 : vector<32x3xf32>, vector<32x4xf32>, vector<32x3xf32> -> vector<32x10xf32>
    %309 = vector.extract_strided_slice %308 {offsets = [0, 0], sizes = [32, 4], strides = [1, 1]} : vector<32x10xf32> to vector<32x4xf32>
    %310 = vector.extract_strided_slice %308 {offsets = [0, 1], sizes = [32, 4], strides = [1, 1]} : vector<32x10xf32> to vector<32x4xf32>
    %311 = vector.extract_strided_slice %308 {offsets = [0, 2], sizes = [32, 4], strides = [1, 1]} : vector<32x10xf32> to vector<32x4xf32>
    %312 = vector.extract_strided_slice %308 {offsets = [0, 3], sizes = [32, 4], strides = [1, 1]} : vector<32x10xf32> to vector<32x4xf32>
    %313 = vector.extract_strided_slice %308 {offsets = [0, 4], sizes = [32, 4], strides = [1, 1]} : vector<32x10xf32> to vector<32x4xf32>
    %314 = vector.extract_strided_slice %308 {offsets = [0, 5], sizes = [32, 4], strides = [1, 1]} : vector<32x10xf32> to vector<32x4xf32>
    %315 = vector.extract_strided_slice %308 {offsets = [0, 6], sizes = [32, 4], strides = [1, 1]} : vector<32x10xf32> to vector<32x4xf32>
    %316 = tpu.concatenate %309, %310, %311, %312, %313, %314, %315 in 0 : vector<32x4xf32>, vector<32x4xf32>, vector<32x4xf32>, vector<32x4xf32>, vector<32x4xf32>, vector<32x4xf32>, vector<32x4xf32> -> vector<224x4xf32>
    %317 = vector.extract_strided_slice %303 {offsets = [0, 4], sizes = [32, 4], strides = [1, 1]} : vector<32x8xf32> to vector<32x4xf32>
    %318 = tpu.concatenate %306, %317, %306 in 1 : vector<32x3xf32>, vector<32x4xf32>, vector<32x3xf32> -> vector<32x10xf32>
    %319 = vector.extract_strided_slice %318 {offsets = [0, 0], sizes = [32, 4], strides = [1, 1]} : vector<32x10xf32> to vector<32x4xf32>
    %320 = vector.extract_strided_slice %318 {offsets = [0, 1], sizes = [32, 4], strides = [1, 1]} : vector<32x10xf32> to vector<32x4xf32>
    %321 = vector.extract_strided_slice %318 {offsets = [0, 2], sizes = [32, 4], strides = [1, 1]} : vector<32x10xf32> to vector<32x4xf32>
    %322 = vector.extract_strided_slice %318 {offsets = [0, 3], sizes = [32, 4], strides = [1, 1]} : vector<32x10xf32> to vector<32x4xf32>
    %323 = vector.extract_strided_slice %318 {offsets = [0, 4], sizes = [32, 4], strides = [1, 1]} : vector<32x10xf32> to vector<32x4xf32>
    %324 = vector.extract_strided_slice %318 {offsets = [0, 5], sizes = [32, 4], strides = [1, 1]} : vector<32x10xf32> to vector<32x4xf32>
    %325 = vector.extract_strided_slice %318 {offsets = [0, 6], sizes = [32, 4], strides = [1, 1]} : vector<32x10xf32> to vector<32x4xf32>
    %326 = tpu.concatenate %319, %320, %321, %322, %323, %324, %325 in 0 : vector<32x4xf32>, vector<32x4xf32>, vector<32x4xf32>, vector<32x4xf32>, vector<32x4xf32>, vector<32x4xf32>, vector<32x4xf32> -> vector<224x4xf32>
    %327 = tpu.concatenate %316, %326 in 1 : vector<224x4xf32>, vector<224x4xf32> -> vector<224x8xf32>
    %cst_101 = arith.constant dense<0.000000e+00> : vector<32x8xf32>
    %328 = tpu.matmul %304, %327, %cst_101 {dimension_numbers = #tpu.dot_dimension_numbers<[1], [0], [0], [1], [0, 0, 1, 1], [], []>} : vector<32x224xf32>, vector<224x8xf32>, vector<32x8xf32> -> vector<32x8xf32>
    %329 = vector.broadcast %305 : vector<32x1xf32> to vector<32x8xf32>
    %330 = arith.addf %328, %329 : vector<32x8xf32>
    %cst_102 = arith.constant 0.000000e+00 : f32
    %331 = vector.broadcast %cst_102 : f32 to vector<32x8xf32>
    %332 = arith.maximumf %330, %331 : vector<32x8xf32>
    %333 = tpu.iota {dimensions = array<i32: 0>} : vector<8x4xi32>
    %334 = tpu.iota {dimensions = array<i32: 1>} : vector<8x4xi32>
    %c2_i32_103 = arith.constant 2 : i32
    %335 = vector.broadcast %c2_i32_103 : i32 to vector<8x4xi32>
    %336 = arith.muli %335, %334 : vector<8x4xi32>
    %337 = arith.cmpi eq, %333, %336 : vector<8x4xi32>
    %cst_104 = arith.constant 1.000000e+00 : f32
    %cst_105 = arith.constant 0.000000e+00 : f32
    %338 = vector.broadcast %cst_104 : f32 to vector<8x4xf32>
    %339 = vector.broadcast %cst_105 : f32 to vector<8x4xf32>
    %340 = arith.select %337, %338, %339 : vector<8x4xi1>, vector<8x4xf32>
    %c2_i32_106 = arith.constant 2 : i32
    %341 = vector.broadcast %c2_i32_106 : i32 to vector<8x4xi32>
    %342 = arith.muli %341, %334 : vector<8x4xi32>
    %c1_i32_107 = arith.constant 1 : i32
    %343 = vector.broadcast %c1_i32_107 : i32 to vector<8x4xi32>
    %344 = arith.addi %342, %343 : vector<8x4xi32>
    %345 = arith.cmpi eq, %333, %344 : vector<8x4xi32>
    %cst_108 = arith.constant 1.000000e+00 : f32
    %cst_109 = arith.constant 0.000000e+00 : f32
    %346 = vector.broadcast %cst_108 : f32 to vector<8x4xf32>
    %347 = vector.broadcast %cst_109 : f32 to vector<8x4xf32>
    %348 = arith.select %345, %346, %347 : vector<8x4xi1>, vector<8x4xf32>
    %cst_110 = arith.constant dense<0.000000e+00> : vector<32x4xf32>
    %349 = tpu.matmul %332, %340, %cst_110 {dimension_numbers = #tpu.dot_dimension_numbers<[1], [0], [0], [1], [0, 0, 1, 1], [], []>} : vector<32x8xf32>, vector<8x4xf32>, vector<32x4xf32> -> vector<32x4xf32>
    %cst_111 = arith.constant dense<0.000000e+00> : vector<32x4xf32>
    %350 = tpu.matmul %332, %348, %cst_111 {dimension_numbers = #tpu.dot_dimension_numbers<[1], [0], [0], [1], [0, 0, 1, 1], [], []>} : vector<32x8xf32>, vector<8x4xf32>, vector<32x4xf32> -> vector<32x4xf32>
    %351 = arith.maximumf %349, %350 : vector<32x4xf32>
    %c0_112 = arith.constant 0 : index
    %c0_113 = arith.constant 0 : index
    %352 = vector.load %arg23[%c0_112, %c0_113] : memref<32x1xf32, #tpu.memory_space<vmem>>, vector<32x1xf32>
    %c0_114 = arith.constant 0 : index
    %c0_115 = arith.constant 0 : index
    %353 = vector.load %arg24[%c0_114, %c0_115] : memref<32x1xf32, #tpu.memory_space<vmem>>, vector<32x1xf32>
    %cst_116 = arith.constant dense<0.000000e+00> : vector<32xf32>
    %354 = vector.multi_reduction <add>, %351, %cst_116 [1] : vector<32x4xf32> to vector<32xf32>
    %355 = vector.shape_cast %354 : vector<32xf32> to vector<32x1xf32>
    %cst_117 = arith.constant 4.000000e+00 : f32
    %356 = vector.broadcast %cst_117 : f32 to vector<32x1xf32>
    %357 = arith.divf %355, %356 : vector<32x1xf32>
    %358 = vector.broadcast %357 : vector<32x1xf32> to vector<32x4xf32>
    %359 = arith.subf %351, %358 : vector<32x4xf32>
    %360 = arith.mulf %359, %359 : vector<32x4xf32>
    %cst_118 = arith.constant dense<0.000000e+00> : vector<32xf32>
    %361 = vector.multi_reduction <add>, %360, %cst_118 [1] : vector<32x4xf32> to vector<32xf32>
    %362 = vector.shape_cast %361 : vector<32xf32> to vector<32x1xf32>
    %cst_119 = arith.constant 4.000000e+00 : f32
    %363 = vector.broadcast %cst_119 : f32 to vector<32x1xf32>
    %364 = arith.divf %362, %363 : vector<32x1xf32>
    %365 = vector.broadcast %357 : vector<32x1xf32> to vector<32x4xf32>
    %366 = arith.subf %351, %365 : vector<32x4xf32>
    %cst_120 = arith.constant 9.99999974E-6 : f32
    %367 = vector.broadcast %cst_120 : f32 to vector<32x1xf32>
    %368 = arith.addf %364, %367 : vector<32x1xf32>
    %369 = math.rsqrt %368 : vector<32x1xf32>
    %370 = vector.broadcast %369 : vector<32x1xf32> to vector<32x4xf32>
    %371 = arith.mulf %366, %370 : vector<32x4xf32>
    %372 = vector.broadcast %352 : vector<32x1xf32> to vector<32x4xf32>
    %373 = arith.mulf %371, %372 : vector<32x4xf32>
    %374 = vector.broadcast %353 : vector<32x1xf32> to vector<32x4xf32>
    %375 = arith.addf %373, %374 : vector<32x4xf32>
    %c0_121 = arith.constant 0 : index
    %c0_122 = arith.constant 0 : index
    %376 = vector.load %arg25[%c0_121, %c0_122] : memref<32x32xf32, #tpu.memory_space<vmem>>, vector<32x32xf32>
    %c0_123 = arith.constant 0 : index
    %c0_124 = arith.constant 0 : index
    %377 = vector.load %arg26[%c0_123, %c0_124] : memref<32x1xf32, #tpu.memory_space<vmem>>, vector<32x1xf32>
    %cst_125 = arith.constant dense<0.000000e+00> : vector<32x4xf32>
    %378 = tpu.matmul %376, %375, %cst_125 {dimension_numbers = #tpu.dot_dimension_numbers<[1], [0], [0], [1], [0, 0, 1, 1], [], []>} : vector<32x32xf32>, vector<32x4xf32>, vector<32x4xf32> -> vector<32x4xf32>
    %379 = vector.broadcast %377 : vector<32x1xf32> to vector<32x4xf32>
    %380 = arith.addf %378, %379 : vector<32x4xf32>
    %cst_126 = arith.constant 0.000000e+00 : f32
    %381 = vector.broadcast %cst_126 : f32 to vector<32x4xf32>
    %382 = arith.maximumf %380, %381 : vector<32x4xf32>
    %c0_127 = arith.constant 0 : index
    %c0_128 = arith.constant 0 : index
    %383 = vector.load %arg38[%c0_127, %c0_128] : memref<32x4xf32, #tpu.memory_space<vmem>>, vector<32x4xf32>
    tpu.vector_store %arg38[%c0_127, %c0_128], %382 {strides = array<i32>} : memref<32x4xf32, #tpu.memory_space<vmem>>, vector<32x4xf32>,
    %c0_129 = arith.constant 0 : index
    %c0_130 = arith.constant 0 : index
    %384 = vector.load %arg27[%c0_129, %c0_130] : memref<32x32xf32, #tpu.memory_space<vmem>>, vector<32x32xf32>
    %c0_131 = arith.constant 0 : index
    %c0_132 = arith.constant 0 : index
    %385 = vector.load %arg28[%c0_131, %c0_132] : memref<32x1xf32, #tpu.memory_space<vmem>>, vector<32x1xf32>
    %cst_133 = arith.constant dense<0.000000e+00> : vector<32x4xf32>
    %386 = tpu.matmul %384, %382, %cst_133 {dimension_numbers = #tpu.dot_dimension_numbers<[1], [0], [0], [1], [0, 0, 1, 1], [], []>} : vector<32x32xf32>, vector<32x4xf32>, vector<32x4xf32> -> vector<32x4xf32>
    %387 = vector.broadcast %385 : vector<32x1xf32> to vector<32x4xf32>
    %388 = arith.addf %386, %387 : vector<32x4xf32>
    %cst_134 = arith.constant 0.000000e+00 : f32
    %389 = vector.broadcast %cst_134 : f32 to vector<32x4xf32>
    %390 = arith.maximumf %388, %389 : vector<32x4xf32>
    %391 = tpu.iota {dimensions = array<i32: 0>} : vector<4x8xi32>
    %392 = tpu.iota {dimensions = array<i32: 1>} : vector<4x8xi32>
    %c2_i32_135 = arith.constant 2 : i32
    %393 = vector.broadcast %c2_i32_135 : i32 to vector<4x8xi32>
    %394 = arith.muli %393, %391 : vector<4x8xi32>
    %395 = arith.cmpi eq, %392, %394 : vector<4x8xi32>
    %c2_i32_136 = arith.constant 2 : i32
    %396 = vector.broadcast %c2_i32_136 : i32 to vector<4x8xi32>
    %397 = arith.muli %396, %391 : vector<4x8xi32>
    %c1_i32_137 = arith.constant 1 : i32
    %398 = vector.broadcast %c1_i32_137 : i32 to vector<4x8xi32>
    %399 = arith.addi %397, %398 : vector<4x8xi32>
    %400 = arith.cmpi eq, %392, %399 : vector<4x8xi32>
    %401 = arith.ori %395, %400 : vector<4x8xi1>
    %cst_138 = arith.constant 1.000000e+00 : f32
    %cst_139 = arith.constant 0.000000e+00 : f32
    %402 = vector.broadcast %cst_138 : f32 to vector<4x8xf32>
    %403 = vector.broadcast %cst_139 : f32 to vector<4x8xf32>
    %404 = arith.select %401, %402, %403 : vector<4x8xi1>, vector<4x8xf32>
    %cst_140 = arith.constant dense<0.000000e+00> : vector<32x8xf32>
    %405 = tpu.matmul %390, %404, %cst_140 {dimension_numbers = #tpu.dot_dimension_numbers<[1], [0], [0], [1], [0, 0, 1, 1], [], []>} : vector<32x4xf32>, vector<4x8xf32>, vector<32x8xf32> -> vector<32x8xf32>
    %c0_141 = arith.constant 0 : index
    %c0_142 = arith.constant 0 : index
    %406 = vector.load %arg29[%c0_141, %c0_142] : memref<16x224xf32, #tpu.memory_space<vmem>>, vector<16x224xf32>
    %c0_143 = arith.constant 0 : index
    %c0_144 = arith.constant 0 : index
    %407 = vector.load %arg30[%c0_143, %c0_144] : memref<16x1xf32, #tpu.memory_space<vmem>>, vector<16x1xf32>
    %cst_145 = arith.constant 0.000000e+00 : f32
    %408 = vector.broadcast %cst_145 : f32 to vector<32x3xf32>
    %409 = vector.extract_strided_slice %405 {offsets = [0, 0], sizes = [32, 4], strides = [1, 1]} : vector<32x8xf32> to vector<32x4xf32>
    %410 = tpu.concatenate %408, %409, %408 in 1 : vector<32x3xf32>, vector<32x4xf32>, vector<32x3xf32> -> vector<32x10xf32>
    %411 = vector.extract_strided_slice %410 {offsets = [0, 0], sizes = [32, 4], strides = [1, 1]} : vector<32x10xf32> to vector<32x4xf32>
    %412 = vector.extract_strided_slice %410 {offsets = [0, 1], sizes = [32, 4], strides = [1, 1]} : vector<32x10xf32> to vector<32x4xf32>
    %413 = vector.extract_strided_slice %410 {offsets = [0, 2], sizes = [32, 4], strides = [1, 1]} : vector<32x10xf32> to vector<32x4xf32>
    %414 = vector.extract_strided_slice %410 {offsets = [0, 3], sizes = [32, 4], strides = [1, 1]} : vector<32x10xf32> to vector<32x4xf32>
    %415 = vector.extract_strided_slice %410 {offsets = [0, 4], sizes = [32, 4], strides = [1, 1]} : vector<32x10xf32> to vector<32x4xf32>
    %416 = vector.extract_strided_slice %410 {offsets = [0, 5], sizes = [32, 4], strides = [1, 1]} : vector<32x10xf32> to vector<32x4xf32>
    %417 = vector.extract_strided_slice %410 {offsets = [0, 6], sizes = [32, 4], strides = [1, 1]} : vector<32x10xf32> to vector<32x4xf32>
    %418 = tpu.concatenate %411, %412, %413, %414, %415, %416, %417 in 0 : vector<32x4xf32>, vector<32x4xf32>, vector<32x4xf32>, vector<32x4xf32>, vector<32x4xf32>, vector<32x4xf32>, vector<32x4xf32> -> vector<224x4xf32>
    %419 = vector.extract_strided_slice %405 {offsets = [0, 4], sizes = [32, 4], strides = [1, 1]} : vector<32x8xf32> to vector<32x4xf32>
    %420 = tpu.concatenate %408, %419, %408 in 1 : vector<32x3xf32>, vector<32x4xf32>, vector<32x3xf32> -> vector<32x10xf32>
    %421 = vector.extract_strided_slice %420 {offsets = [0, 0], sizes = [32, 4], strides = [1, 1]} : vector<32x10xf32> to vector<32x4xf32>
    %422 = vector.extract_strided_slice %420 {offsets = [0, 1], sizes = [32, 4], strides = [1, 1]} : vector<32x10xf32> to vector<32x4xf32>
    %423 = vector.extract_strided_slice %420 {offsets = [0, 2], sizes = [32, 4], strides = [1, 1]} : vector<32x10xf32> to vector<32x4xf32>
    %424 = vector.extract_strided_slice %420 {offsets = [0, 3], sizes = [32, 4], strides = [1, 1]} : vector<32x10xf32> to vector<32x4xf32>
    %425 = vector.extract_strided_slice %420 {offsets = [0, 4], sizes = [32, 4], strides = [1, 1]} : vector<32x10xf32> to vector<32x4xf32>
    %426 = vector.extract_strided_slice %420 {offsets = [0, 5], sizes = [32, 4], strides = [1, 1]} : vector<32x10xf32> to vector<32x4xf32>
    %427 = vector.extract_strided_slice %420 {offsets = [0, 6], sizes = [32, 4], strides = [1, 1]} : vector<32x10xf32> to vector<32x4xf32>
    %428 = tpu.concatenate %421, %422, %423, %424, %425, %426, %427 in 0 : vector<32x4xf32>, vector<32x4xf32>, vector<32x4xf32>, vector<32x4xf32>, vector<32x4xf32>, vector<32x4xf32>, vector<32x4xf32> -> vector<224x4xf32>
    %429 = tpu.concatenate %418, %428 in 1 : vector<224x4xf32>, vector<224x4xf32> -> vector<224x8xf32>
    %cst_146 = arith.constant dense<0.000000e+00> : vector<16x8xf32>
    %430 = tpu.matmul %406, %429, %cst_146 {dimension_numbers = #tpu.dot_dimension_numbers<[1], [0], [0], [1], [0, 0, 1, 1], [], []>} : vector<16x224xf32>, vector<224x8xf32>, vector<16x8xf32> -> vector<16x8xf32>
    %431 = vector.broadcast %407 : vector<16x1xf32> to vector<16x8xf32>
    %432 = arith.addf %430, %431 : vector<16x8xf32>
    %cst_147 = arith.constant 0.000000e+00 : f32
    %433 = vector.broadcast %cst_147 : f32 to vector<16x8xf32>
    %434 = arith.maximumf %432, %433 : vector<16x8xf32>
    %435 = tpu.iota {dimensions = array<i32: 0>} : vector<8x16xi32>
    %436 = tpu.iota {dimensions = array<i32: 1>} : vector<8x16xi32>
    %c2_i32_148 = arith.constant 2 : i32
    %437 = vector.broadcast %c2_i32_148 : i32 to vector<8x16xi32>
    %438 = arith.muli %437, %435 : vector<8x16xi32>
    %439 = arith.cmpi eq, %436, %438 : vector<8x16xi32>
    %c2_i32_149 = arith.constant 2 : i32
    %440 = vector.broadcast %c2_i32_149 : i32 to vector<8x16xi32>
    %441 = arith.muli %440, %435 : vector<8x16xi32>
    %c1_i32_150 = arith.constant 1 : i32
    %442 = vector.broadcast %c1_i32_150 : i32 to vector<8x16xi32>
    %443 = arith.addi %441, %442 : vector<8x16xi32>
    %444 = arith.cmpi eq, %436, %443 : vector<8x16xi32>
    %445 = arith.ori %439, %444 : vector<8x16xi1>
    %cst_151 = arith.constant 1.000000e+00 : f32
    %cst_152 = arith.constant 0.000000e+00 : f32
    %446 = vector.broadcast %cst_151 : f32 to vector<8x16xf32>
    %447 = vector.broadcast %cst_152 : f32 to vector<8x16xf32>
    %448 = arith.select %445, %446, %447 : vector<8x16xi1>, vector<8x16xf32>
    %cst_153 = arith.constant dense<0.000000e+00> : vector<16x16xf32>
    %449 = tpu.matmul %434, %448, %cst_153 {dimension_numbers = #tpu.dot_dimension_numbers<[1], [0], [0], [1], [0, 0, 1, 1], [], []>} : vector<16x8xf32>, vector<8x16xf32>, vector<16x16xf32> -> vector<16x16xf32>
    %c0_154 = arith.constant 0 : index
    %c0_155 = arith.constant 0 : index
    %450 = vector.load %arg31[%c0_154, %c0_155] : memref<8x112xf32, #tpu.memory_space<vmem>>, vector<8x112xf32>
    %c0_156 = arith.constant 0 : index
    %c0_157 = arith.constant 0 : index
    %451 = vector.load %arg32[%c0_156, %c0_157] : memref<8x1xf32, #tpu.memory_space<vmem>>, vector<8x1xf32>
    %cst_158 = arith.constant 0.000000e+00 : f32
    %452 = vector.broadcast %cst_158 : f32 to vector<16x3xf32>
    %453 = vector.extract_strided_slice %449 {offsets = [0, 0], sizes = [16, 8], strides = [1, 1]} : vector<16x16xf32> to vector<16x8xf32>
    %454 = tpu.concatenate %452, %453, %452 in 1 : vector<16x3xf32>, vector<16x8xf32>, vector<16x3xf32> -> vector<16x14xf32>
    %455 = vector.extract_strided_slice %454 {offsets = [0, 0], sizes = [16, 8], strides = [1, 1]} : vector<16x14xf32> to vector<16x8xf32>
    %456 = vector.extract_strided_slice %454 {offsets = [0, 1], sizes = [16, 8], strides = [1, 1]} : vector<16x14xf32> to vector<16x8xf32>
    %457 = vector.extract_strided_slice %454 {offsets = [0, 2], sizes = [16, 8], strides = [1, 1]} : vector<16x14xf32> to vector<16x8xf32>
    %458 = vector.extract_strided_slice %454 {offsets = [0, 3], sizes = [16, 8], strides = [1, 1]} : vector<16x14xf32> to vector<16x8xf32>
    %459 = vector.extract_strided_slice %454 {offsets = [0, 4], sizes = [16, 8], strides = [1, 1]} : vector<16x14xf32> to vector<16x8xf32>
    %460 = vector.extract_strided_slice %454 {offsets = [0, 5], sizes = [16, 8], strides = [1, 1]} : vector<16x14xf32> to vector<16x8xf32>
    %461 = vector.extract_strided_slice %454 {offsets = [0, 6], sizes = [16, 8], strides = [1, 1]} : vector<16x14xf32> to vector<16x8xf32>
    %462 = tpu.concatenate %455, %456, %457, %458, %459, %460, %461 in 0 : vector<16x8xf32>, vector<16x8xf32>, vector<16x8xf32>, vector<16x8xf32>, vector<16x8xf32>, vector<16x8xf32>, vector<16x8xf32> -> vector<112x8xf32>
    %463 = vector.extract_strided_slice %449 {offsets = [0, 8], sizes = [16, 8], strides = [1, 1]} : vector<16x16xf32> to vector<16x8xf32>
    %464 = tpu.concatenate %452, %463, %452 in 1 : vector<16x3xf32>, vector<16x8xf32>, vector<16x3xf32> -> vector<16x14xf32>
    %465 = vector.extract_strided_slice %464 {offsets = [0, 0], sizes = [16, 8], strides = [1, 1]} : vector<16x14xf32> to vector<16x8xf32>
    %466 = vector.extract_strided_slice %464 {offsets = [0, 1], sizes = [16, 8], strides = [1, 1]} : vector<16x14xf32> to vector<16x8xf32>
    %467 = vector.extract_strided_slice %464 {offsets = [0, 2], sizes = [16, 8], strides = [1, 1]} : vector<16x14xf32> to vector<16x8xf32>
    %468 = vector.extract_strided_slice %464 {offsets = [0, 3], sizes = [16, 8], strides = [1, 1]} : vector<16x14xf32> to vector<16x8xf32>
    %469 = vector.extract_strided_slice %464 {offsets = [0, 4], sizes = [16, 8], strides = [1, 1]} : vector<16x14xf32> to vector<16x8xf32>
    %470 = vector.extract_strided_slice %464 {offsets = [0, 5], sizes = [16, 8], strides = [1, 1]} : vector<16x14xf32> to vector<16x8xf32>
    %471 = vector.extract_strided_slice %464 {offsets = [0, 6], sizes = [16, 8], strides = [1, 1]} : vector<16x14xf32> to vector<16x8xf32>
    %472 = tpu.concatenate %465, %466, %467, %468, %469, %470, %471 in 0 : vector<16x8xf32>, vector<16x8xf32>, vector<16x8xf32>, vector<16x8xf32>, vector<16x8xf32>, vector<16x8xf32>, vector<16x8xf32> -> vector<112x8xf32>
    %473 = tpu.concatenate %462, %472 in 1 : vector<112x8xf32>, vector<112x8xf32> -> vector<112x16xf32>
    %cst_159 = arith.constant dense<0.000000e+00> : vector<8x16xf32>
    %474 = tpu.matmul %450, %473, %cst_159 {dimension_numbers = #tpu.dot_dimension_numbers<[1], [0], [0], [1], [0, 0, 1, 1], [], []>} : vector<8x112xf32>, vector<112x16xf32>, vector<8x16xf32> -> vector<8x16xf32>
    %475 = vector.broadcast %451 : vector<8x1xf32> to vector<8x16xf32>
    %476 = arith.addf %474, %475 : vector<8x16xf32>
    %cst_160 = arith.constant 0.000000e+00 : f32
    %477 = vector.broadcast %cst_160 : f32 to vector<8x16xf32>
    %478 = arith.maximumf %476, %477 : vector<8x16xf32>
    %479 = tpu.iota {dimensions = array<i32: 0>} : vector<16x32xi32>
    %480 = tpu.iota {dimensions = array<i32: 1>} : vector<16x32xi32>
    %c2_i32_161 = arith.constant 2 : i32
    %481 = vector.broadcast %c2_i32_161 : i32 to vector<16x32xi32>
    %482 = arith.muli %481, %479 : vector<16x32xi32>
    %483 = arith.cmpi eq, %480, %482 : vector<16x32xi32>
    %c2_i32_162 = arith.constant 2 : i32
    %484 = vector.broadcast %c2_i32_162 : i32 to vector<16x32xi32>
    %485 = arith.muli %484, %479 : vector<16x32xi32>
    %c1_i32_163 = arith.constant 1 : i32
    %486 = vector.broadcast %c1_i32_163 : i32 to vector<16x32xi32>
    %487 = arith.addi %485, %486 : vector<16x32xi32>
    %488 = arith.cmpi eq, %480, %487 : vector<16x32xi32>
    %489 = arith.ori %483, %488 : vector<16x32xi1>
    %cst_164 = arith.constant 1.000000e+00 : f32
    %cst_165 = arith.constant 0.000000e+00 : f32
    %490 = vector.broadcast %cst_164 : f32 to vector<16x32xf32>
    %491 = vector.broadcast %cst_165 : f32 to vector<16x32xf32>
    %492 = arith.select %489, %490, %491 : vector<16x32xi1>, vector<16x32xf32>
    %cst_166 = arith.constant dense<0.000000e+00> : vector<8x32xf32>
    %493 = tpu.matmul %478, %492, %cst_166 {dimension_numbers = #tpu.dot_dimension_numbers<[1], [0], [0], [1], [0, 0, 1, 1], [], []>} : vector<8x16xf32>, vector<16x32xf32>, vector<8x32xf32> -> vector<8x32xf32>
    %c0_167 = arith.constant 0 : index
    %c0_168 = arith.constant 0 : index
    %494 = vector.load %arg33[%c0_167, %c0_168] : memref<8x56xf32, #tpu.memory_space<vmem>>, vector<8x56xf32>
    %c0_169 = arith.constant 0 : index
    %c0_170 = arith.constant 0 : index
    %495 = vector.load %arg34[%c0_169, %c0_170] : memref<8x1xf32, #tpu.memory_space<vmem>>, vector<8x1xf32>
    %cst_171 = arith.constant 0.000000e+00 : f32
    %496 = vector.broadcast %cst_171 : f32 to vector<8x3xf32>
    %497 = vector.extract_strided_slice %493 {offsets = [0, 0], sizes = [8, 16], strides = [1, 1]} : vector<8x32xf32> to vector<8x16xf32>
    %498 = tpu.concatenate %496, %497, %496 in 1 : vector<8x3xf32>, vector<8x16xf32>, vector<8x3xf32> -> vector<8x22xf32>
    %499 = vector.extract_strided_slice %498 {offsets = [0, 0], sizes = [8, 16], strides = [1, 1]} : vector<8x22xf32> to vector<8x16xf32>
    %500 = vector.extract_strided_slice %498 {offsets = [0, 1], sizes = [8, 16], strides = [1, 1]} : vector<8x22xf32> to vector<8x16xf32>
    %501 = vector.extract_strided_slice %498 {offsets = [0, 2], sizes = [8, 16], strides = [1, 1]} : vector<8x22xf32> to vector<8x16xf32>
    %502 = vector.extract_strided_slice %498 {offsets = [0, 3], sizes = [8, 16], strides = [1, 1]} : vector<8x22xf32> to vector<8x16xf32>
    %503 = vector.extract_strided_slice %498 {offsets = [0, 4], sizes = [8, 16], strides = [1, 1]} : vector<8x22xf32> to vector<8x16xf32>
    %504 = vector.extract_strided_slice %498 {offsets = [0, 5], sizes = [8, 16], strides = [1, 1]} : vector<8x22xf32> to vector<8x16xf32>
    %505 = vector.extract_strided_slice %498 {offsets = [0, 6], sizes = [8, 16], strides = [1, 1]} : vector<8x22xf32> to vector<8x16xf32>
    %506 = tpu.concatenate %499, %500, %501, %502, %503, %504, %505 in 0 : vector<8x16xf32>, vector<8x16xf32>, vector<8x16xf32>, vector<8x16xf32>, vector<8x16xf32>, vector<8x16xf32>, vector<8x16xf32> -> vector<56x16xf32>
    %507 = vector.extract_strided_slice %493 {offsets = [0, 16], sizes = [8, 16], strides = [1, 1]} : vector<8x32xf32> to vector<8x16xf32>
    %508 = tpu.concatenate %496, %507, %496 in 1 : vector<8x3xf32>, vector<8x16xf32>, vector<8x3xf32> -> vector<8x22xf32>
    %509 = vector.extract_strided_slice %508 {offsets = [0, 0], sizes = [8, 16], strides = [1, 1]} : vector<8x22xf32> to vector<8x16xf32>
    %510 = vector.extract_strided_slice %508 {offsets = [0, 1], sizes = [8, 16], strides = [1, 1]} : vector<8x22xf32> to vector<8x16xf32>
    %511 = vector.extract_strided_slice %508 {offsets = [0, 2], sizes = [8, 16], strides = [1, 1]} : vector<8x22xf32> to vector<8x16xf32>
    %512 = vector.extract_strided_slice %508 {offsets = [0, 3], sizes = [8, 16], strides = [1, 1]} : vector<8x22xf32> to vector<8x16xf32>
    %513 = vector.extract_strided_slice %508 {offsets = [0, 4], sizes = [8, 16], strides = [1, 1]} : vector<8x22xf32> to vector<8x16xf32>
    %514 = vector.extract_strided_slice %508 {offsets = [0, 5], sizes = [8, 16], strides = [1, 1]} : vector<8x22xf32> to vector<8x16xf32>
    %515 = vector.extract_strided_slice %508 {offsets = [0, 6], sizes = [8, 16], strides = [1, 1]} : vector<8x22xf32> to vector<8x16xf32>
    %516 = tpu.concatenate %509, %510, %511, %512, %513, %514, %515 in 0 : vector<8x16xf32>, vector<8x16xf32>, vector<8x16xf32>, vector<8x16xf32>, vector<8x16xf32>, vector<8x16xf32>, vector<8x16xf32> -> vector<56x16xf32>
    %517 = tpu.concatenate %506, %516 in 1 : vector<56x16xf32>, vector<56x16xf32> -> vector<56x32xf32>
    %cst_172 = arith.constant dense<0.000000e+00> : vector<8x32xf32>
    %518 = tpu.matmul %494, %517, %cst_172 {dimension_numbers = #tpu.dot_dimension_numbers<[1], [0], [0], [1], [0, 0, 1, 1], [], []>} : vector<8x56xf32>, vector<56x32xf32>, vector<8x32xf32> -> vector<8x32xf32>
    %519 = vector.broadcast %495 : vector<8x1xf32> to vector<8x32xf32>
    %520 = arith.addf %518, %519 : vector<8x32xf32>
    %cst_173 = arith.constant 0.000000e+00 : f32
    %521 = vector.broadcast %cst_173 : f32 to vector<8x32xf32>
    %522 = arith.maximumf %520, %521 : vector<8x32xf32>
    %c0_174 = arith.constant 0 : index
    %c0_175 = arith.constant 0 : index
    %523 = vector.load %arg35[%c0_174, %c0_175] : memref<3x8xf32, #tpu.memory_space<vmem>>, vector<3x8xf32>
    %c0_176 = arith.constant 0 : index
    %c0_177 = arith.constant 0 : index
    %524 = vector.load %arg36[%c0_176, %c0_177] : memref<3x1xf32, #tpu.memory_space<vmem>>, vector<3x1xf32>
    %cst_178 = arith.constant dense<0.000000e+00> : vector<3x32xf32>
    %525 = tpu.matmul %523, %522, %cst_178 {dimension_numbers = #tpu.dot_dimension_numbers<[1], [0], [0], [1], [0, 0, 1, 1], [], []>} : vector<3x8xf32>, vector<8x32xf32>, vector<3x32xf32> -> vector<3x32xf32>
    %526 = vector.broadcast %524 : vector<3x1xf32> to vector<3x32xf32>
    %527 = arith.addf %525, %526 : vector<3x32xf32>
    %c0_179 = arith.constant 0 : index
    %c0_180 = arith.constant 0 : index
    %528 = vector.load %arg37[%c0_179, %c0_180] : memref<3x32xf32, #tpu.memory_space<vmem>>, vector<3x32xf32>
    tpu.vector_store %arg37[%c0_179, %c0_180], %527 {strides = array<i32>} : memref<3x32xf32, #tpu.memory_space<vmem>>, vector<3x32xf32>,
    return
  }
}

</mosaic_0001>

<llo_original>
// kernel: autoencoder_forward.1
$region0: #{autoencoder_forward.1}
  #allocation0 [shape = 'u32[]', space=smem, size = 0x4, offset = 0x4, fixed_abs, tag = 'smem constant byte address 0x4 - core index']
  #allocation1 [shape = 'u32[72,128]{1,0:T(1,128)}', space=vmem, size = 0x9000, scoped, tag = 'internal scratch']
  %s0 = inlined_call_operand.smem [shape: u32[39], index: -1, kind: input, shape index: {}]
  %s1 = sld [smem:[%s0]]
  %s2 = scalar_lea.smem %s0, 1
  %s3 = sld [smem:[%s2]]
  %s4 = scalar_lea.smem %s0, 2
  %s5 = sld [smem:[%s4]]
  %s6 = scalar_lea.smem %s0, 3
  %s7 = sld [smem:[%s6]]
  %s8 = scalar_lea.smem %s0, 4
  %s9 = sld [smem:[%s8]]
  %s10 = scalar_lea.smem %s0, 5
  %s11 = sld [smem:[%s10]]
  %s12 = scalar_lea.smem %s0, 6
  %s13 = sld [smem:[%s12]]
  %s14 = scalar_lea.smem %s0, 7
  %s15 = sld [smem:[%s14]]
  %s16 = scalar_lea.smem %s0, 8
  %s17 = sld [smem:[%s16]]
  %s18 = scalar_lea.smem %s0, 9
  %s19 = sld [smem:[%s18]]
  %s20 = scalar_lea.smem %s0, 10
  %s21 = sld [smem:[%s20]]
  %s22 = scalar_lea.smem %s0, 11
  %s23 = sld [smem:[%s22]]
  %s24 = scalar_lea.smem %s0, 12
  %s25 = sld [smem:[%s24]]
  %s26 = scalar_lea.smem %s0, 13
  %s27 = sld [smem:[%s26]]
  %s28 = scalar_lea.smem %s0, 14
  %s29 = sld [smem:[%s28]]
  %s30 = scalar_lea.smem %s0, 15
  %s31 = sld [smem:[%s30]]
  %s32 = scalar_lea.smem %s0, 16
  %s33 = sld [smem:[%s32]]
  %s34 = scalar_lea.smem %s0, 17
  %s35 = sld [smem:[%s34]]
  %s36 = scalar_lea.smem %s0, 18
  %s37 = sld [smem:[%s36]]
  %s38 = scalar_lea.smem %s0, 19
  %s39 = sld [smem:[%s38]]
  %s40 = scalar_lea.smem %s0, 20
  %s41 = sld [smem:[%s40]]
  %s42 = scalar_lea.smem %s0, 21
  %s43 = sld [smem:[%s42]]
  %s44 = scalar_lea.smem %s0, 22
  %s45 = sld [smem:[%s44]]
  %s46 = scalar_lea.smem %s0, 23
  %s47 = sld [smem:[%s46]]
  %s48 = scalar_lea.smem %s0, 24
  %s49 = sld [smem:[%s48]]
  %s50 = scalar_lea.smem %s0, 25
  %s51 = sld [smem:[%s50]]
  %s52 = scalar_lea.smem %s0, 26
  %s53 = sld [smem:[%s52]]
  %s54 = scalar_lea.smem %s0, 27
  %s55 = sld [smem:[%s54]]
  %s56 = scalar_lea.smem %s0, 28
  %s57 = sld [smem:[%s56]]
  %s58 = scalar_lea.smem %s0, 29
  %s59 = sld [smem:[%s58]]
  %s60 = scalar_lea.smem %s0, 30
  %s61 = sld [smem:[%s60]]
  %s62 = scalar_lea.smem %s0, 31
  %s63 = sld [smem:[%s62]]
  %s64 = scalar_lea.smem %s0, 32
  %s65 = sld [smem:[%s64]]
  %s66 = scalar_lea.smem %s0, 33
  %s67 = sld [smem:[%s66]]
  %s68 = scalar_lea.smem %s0, 34
  %s69 = sld [smem:[%s68]]
  %s70 = scalar_lea.smem %s0, 35
  %s71 = sld [smem:[%s70]]
  %s72 = scalar_lea.smem %s0, 36
  %s73 = sld [smem:[%s72]]
  %s74 = scalar_lea.smem %s0, 37
  %s75 = sld [smem:[%s74]]
  %s76 = scalar_lea.smem %s0, 38
  %s77 = sld [smem:[%s76]]
  %78 = xla_tuple %s75, %s77
  %s79 = sld [smem:[#allocation0]]
  $region166: #{autoencoder_forward.1} parent=0
    _
  %s81 = ssub.s32 1, %s79
  %s82 = scalar_select 0, %s81, %s79
  // Predicated region
  $region2: #{autoencoder_forward.1} parent=0 // pred_check
    _
  $region3: #{autoencoder_forward.1} parent=0 // pred_check_branch
    %84 = sbr.rel (0) target = $region5
  $region4: #{autoencoder_forward.1} parent=0 // pred_region
    _
  $region5: #{autoencoder_forward.1} parent=0 // pred_fallthru
    _
  // Predicated region
  $region6: #{autoencoder_forward.1} parent=0 // pred_check
    _
  $region7: #{autoencoder_forward.1} parent=0 // pred_check_branch
    %86 = sbr.rel (0) target = $region9
  $region8: #{autoencoder_forward.1} parent=0 // pred_region
    _
  $region9: #{autoencoder_forward.1} parent=0 // pred_fallthru
    _
  // Predicated region
  $region10: #{autoencoder_forward.1} parent=0 // pred_check
    _
  $region11: #{autoencoder_forward.1} parent=0 // pred_check_branch
    %88 = sbr.rel (0) target = $region13
  $region12: #{autoencoder_forward.1} parent=0 // pred_region
    _
  $region13: #{autoencoder_forward.1} parent=0 // pred_fallthru
    _
  // Predicated region
  $region14: #{autoencoder_forward.1} parent=0 // pred_check
    _
  $region15: #{autoencoder_forward.1} parent=0 // pred_check_branch
    %90 = sbr.rel (0) target = $region17
  $region16: #{autoencoder_forward.1} parent=0 // pred_region
    _
  $region17: #{autoencoder_forward.1} parent=0 // pred_fallthru
    _
  // Predicated region
  $region18: #{autoencoder_forward.1} parent=0 // pred_check
    _
  $region19: #{autoencoder_forward.1} parent=0 // pred_check_branch
    %92 = sbr.rel (0) target = $region21
  $region20: #{autoencoder_forward.1} parent=0 // pred_region
    _
  $region21: #{autoencoder_forward.1} parent=0 // pred_fallthru
    _
  // Predicated region
  $region22: #{autoencoder_forward.1} parent=0 // pred_check
    _
  $region23: #{autoencoder_forward.1} parent=0 // pred_check_branch
    %94 = sbr.rel (0) target = $region25
  $region24: #{autoencoder_forward.1} parent=0 // pred_region
    _
  $region25: #{autoencoder_forward.1} parent=0 // pred_fallthru
    _
  // Predicated region
  $region26: #{autoencoder_forward.1} parent=0 // pred_check
    _
  $region27: #{autoencoder_forward.1} parent=0 // pred_check_branch
    %96 = sbr.rel (0) target = $region29
  $region28: #{autoencoder_forward.1} parent=0 // pred_region
    _
  $region29: #{autoencoder_forward.1} parent=0 // pred_fallthru
    _
  // Predicated region
  $region30: #{autoencoder_forward.1} parent=0 // pred_check
    _
  $region31: #{autoencoder_forward.1} parent=0 // pred_check_branch
    %98 = sbr.rel (0) target = $region33
  $region32: #{autoencoder_forward.1} parent=0 // pred_region
    _
  $region33: #{autoencoder_forward.1} parent=0 // pred_fallthru
    _
  // Predicated region
  $region34: #{autoencoder_forward.1} parent=0 // pred_check
    _
  $region35: #{autoencoder_forward.1} parent=0 // pred_check_branch
    %100 = sbr.rel (0) target = $region37
  $region36: #{autoencoder_forward.1} parent=0 // pred_region
    _
  $region37: #{autoencoder_forward.1} parent=0 // pred_fallthru
    _
  // Predicated region
  $region38: #{autoencoder_forward.1} parent=0 // pred_check
    _
  $region39: #{autoencoder_forward.1} parent=0 // pred_check_branch
    %102 = sbr.rel (0) target = $region41
  $region40: #{autoencoder_forward.1} parent=0 // pred_region
    _
  $region41: #{autoencoder_forward.1} parent=0 // pred_fallthru
    _
  // Predicated region
  $region42: #{autoencoder_forward.1} parent=0 // pred_check
    _
  $region43: #{autoencoder_forward.1} parent=0 // pred_check_branch
    %104 = sbr.rel (0) target = $region45
  $region44: #{autoencoder_forward.1} parent=0 // pred_region
    _
  $region45: #{autoencoder_forward.1} parent=0 // pred_fallthru
    _
  // Predicated region
  $region46: #{autoencoder_forward.1} parent=0 // pred_check
    _
  $region47: #{autoencoder_forward.1} parent=0 // pred_check_branch
    %106 = sbr.rel (0) target = $region49
  $region48: #{autoencoder_forward.1} parent=0 // pred_region
    _
  $region49: #{autoencoder_forward.1} parent=0 // pred_fallthru
    _
  // Predicated region
  $region50: #{autoencoder_forward.1} parent=0 // pred_check
    _
  $region51: #{autoencoder_forward.1} parent=0 // pred_check_branch
    %108 = sbr.rel (0) target = $region53
  $region52: #{autoencoder_forward.1} parent=0 // pred_region
    _
  $region53: #{autoencoder_forward.1} parent=0 // pred_fallthru
    _
  // Predicated region
  $region54: #{autoencoder_forward.1} parent=0 // pred_check
    _
  $region55: #{autoencoder_forward.1} parent=0 // pred_check_branch
    %110 = sbr.rel (0) target = $region57
  $region56: #{autoencoder_forward.1} parent=0 // pred_region
    _
  $region57: #{autoencoder_forward.1} parent=0 // pred_fallthru
    _
  // Predicated region
  $region58: #{autoencoder_forward.1} parent=0 // pred_check
    _
  $region59: #{autoencoder_forward.1} parent=0 // pred_check_branch
    %112 = sbr.rel (0) target = $region61
  $region60: #{autoencoder_forward.1} parent=0 // pred_region
    _
  $region61: #{autoencoder_forward.1} parent=0 // pred_fallthru
    _
  // Predicated region
  $region62: #{autoencoder_forward.1} parent=0 // pred_check
    _
  $region63: #{autoencoder_forward.1} parent=0 // pred_check_branch
    %114 = sbr.rel (0) target = $region65
  $region64: #{autoencoder_forward.1} parent=0 // pred_region
    _
  $region65: #{autoencoder_forward.1} parent=0 // pred_fallthru
    _
  // Predicated region
  $region66: #{autoencoder_forward.1} parent=0 // pred_check
    _
  $region67: #{autoencoder_forward.1} parent=0 // pred_check_branch
    %116 = sbr.rel (0) target = $region69
  $region68: #{autoencoder_forward.1} parent=0 // pred_region
    _
  $region69: #{autoencoder_forward.1} parent=0 // pred_fallthru
    _
  // Predicated region
  $region70: #{autoencoder_forward.1} parent=0 // pred_check
    _
  $region71: #{autoencoder_forward.1} parent=0 // pred_check_branch
    %118 = sbr.rel (0) target = $region73
  $region72: #{autoencoder_forward.1} parent=0 // pred_region
    _
  $region73: #{autoencoder_forward.1} parent=0 // pred_fallthru
    _
  // Predicated region
  $region74: #{autoencoder_forward.1} parent=0 // pred_check
    _
  $region75: #{autoencoder_forward.1} parent=0 // pred_check_branch
    %120 = sbr.rel (0) target = $region77
  $region76: #{autoencoder_forward.1} parent=0 // pred_region
    _
  $region77: #{autoencoder_forward.1} parent=0 // pred_fallthru
    _
  // Predicated region
  $region78: #{autoencoder_forward.1} parent=0 // pred_check
    _
  $region79: #{autoencoder_forward.1} parent=0 // pred_check_branch
    %122 = sbr.rel (0) target = $region81
  $region80: #{autoencoder_forward.1} parent=0 // pred_region
    _
  $region81: #{autoencoder_forward.1} parent=0 // pred_fallthru
    _
  // Predicated region
  $region82: #{autoencoder_forward.1} parent=0 // pred_check
    _
  $region83: #{autoencoder_forward.1} parent=0 // pred_check_branch
    %124 = sbr.rel (0) target = $region85
  $region84: #{autoencoder_forward.1} parent=0 // pred_region
    _
  $region85: #{autoencoder_forward.1} parent=0 // pred_fallthru
    _
  // Predicated region
  $region86: #{autoencoder_forward.1} parent=0 // pred_check
    _
  $region87: #{autoencoder_forward.1} parent=0 // pred_check_branch
    %126 = sbr.rel (0) target = $region89
  $region88: #{autoencoder_forward.1} parent=0 // pred_region
    _
  $region89: #{autoencoder_forward.1} parent=0 // pred_fallthru
    _
  // Predicated region
  $region90: #{autoencoder_forward.1} parent=0 // pred_check
    _
  $region91: #{autoencoder_forward.1} parent=0 // pred_check_branch
    %128 = sbr.rel (0) target = $region93
  $region92: #{autoencoder_forward.1} parent=0 // pred_region
    _
  $region93: #{autoencoder_forward.1} parent=0 // pred_fallthru
    _
  // Predicated region
  $region94: #{autoencoder_forward.1} parent=0 // pred_check
    _
  $region95: #{autoencoder_forward.1} parent=0 // pred_check_branch
    %130 = sbr.rel (0) target = $region97
  $region96: #{autoencoder_forward.1} parent=0 // pred_region
    _
  $region97: #{autoencoder_forward.1} parent=0 // pred_fallthru
    _
  // Predicated region
  $region98: #{autoencoder_forward.1} parent=0 // pred_check
    _
  $region99: #{autoencoder_forward.1} parent=0 // pred_check_branch
    %132 = sbr.rel (0) target = $region101
  $region100: #{autoencoder_forward.1} parent=0 // pred_region
    _
  $region101: #{autoencoder_forward.1} parent=0 // pred_fallthru
    _
  // Predicated region
  $region102: #{autoencoder_forward.1} parent=0 // pred_check
    _
  $region103: #{autoencoder_forward.1} parent=0 // pred_check_branch
    %134 = sbr.rel (0) target = $region105
  $region104: #{autoencoder_forward.1} parent=0 // pred_region
    _
  $region105: #{autoencoder_forward.1} parent=0 // pred_fallthru
    _
  // Predicated region
  $region106: #{autoencoder_forward.1} parent=0 // pred_check
    _
  $region107: #{autoencoder_forward.1} parent=0 // pred_check_branch
    %136 = sbr.rel (0) target = $region109
  $region108: #{autoencoder_forward.1} parent=0 // pred_region
    _
  $region109: #{autoencoder_forward.1} parent=0 // pred_fallthru
    _
  // Predicated region
  $region110: #{autoencoder_forward.1} parent=0 // pred_check
    _
  $region111: #{autoencoder_forward.1} parent=0 // pred_check_branch
    %138 = sbr.rel (0) target = $region113
  $region112: #{autoencoder_forward.1} parent=0 // pred_region
    _
  $region113: #{autoencoder_forward.1} parent=0 // pred_fallthru
    _
  // Predicated region
  $region114: #{autoencoder_forward.1} parent=0 // pred_check
    _
  $region115: #{autoencoder_forward.1} parent=0 // pred_check_branch
    %140 = sbr.rel (0) target = $region117
  $region116: #{autoencoder_forward.1} parent=0 // pred_region
    _
  $region117: #{autoencoder_forward.1} parent=0 // pred_fallthru
    _
  // Predicated region
  $region118: #{autoencoder_forward.1} parent=0 // pred_check
    _
  $region119: #{autoencoder_forward.1} parent=0 // pred_check_branch
    %142 = sbr.rel (0) target = $region121
  $region120: #{autoencoder_forward.1} parent=0 // pred_region
    _
  $region121: #{autoencoder_forward.1} parent=0 // pred_fallthru
    _
  // Predicated region
  $region122: #{autoencoder_forward.1} parent=0 // pred_check
    _
  $region123: #{autoencoder_forward.1} parent=0 // pred_check_branch
    %144 = sbr.rel (0) target = $region125
  $region124: #{autoencoder_forward.1} parent=0 // pred_region
    _
  $region125: #{autoencoder_forward.1} parent=0 // pred_fallthru
    _
  // Predicated region
  $region126: #{autoencoder_forward.1} parent=0 // pred_check
    _
  $region127: #{autoencoder_forward.1} parent=0 // pred_check_branch
    %146 = sbr.rel (0) target = $region129
  $region128: #{autoencoder_forward.1} parent=0 // pred_region
    _
  $region129: #{autoencoder_forward.1} parent=0 // pred_fallthru
    _
  // Predicated region
  $region130: #{autoencoder_forward.1} parent=0 // pred_check
    _
  $region131: #{autoencoder_forward.1} parent=0 // pred_check_branch
    %148 = sbr.rel (0) target = $region133
  $region132: #{autoencoder_forward.1} parent=0 // pred_region
    _
  $region133: #{autoencoder_forward.1} parent=0 // pred_fallthru
    _
  // Predicated region
  $region134: #{autoencoder_forward.1} parent=0 // pred_check
    _
  $region135: #{autoencoder_forward.1} parent=0 // pred_check_branch
    %150 = sbr.rel (0) target = $region137
  $region136: #{autoencoder_forward.1} parent=0 // pred_region
    _
  $region137: #{autoencoder_forward.1} parent=0 // pred_fallthru
    _
  // Predicated region
  $region138: #{autoencoder_forward.1} parent=0 // pred_check
    _
  $region139: #{autoencoder_forward.1} parent=0 // pred_check_branch
    %152 = sbr.rel (0) target = $region141
  $region140: #{autoencoder_forward.1} parent=0 // pred_region
    _
  $region141: #{autoencoder_forward.1} parent=0 // pred_fallthru
    _
  // Predicated region
  $region142: #{autoencoder_forward.1} parent=0 // pred_check
    _
  $region143: #{autoencoder_forward.1} parent=0 // pred_check_branch
    %154 = sbr.rel (0) target = $region145
  $region144: #{autoencoder_forward.1} parent=0 // pred_region
    _
  $region145: #{autoencoder_forward.1} parent=0 // pred_fallthru
    _
  // Predicated region
  $region146: #{autoencoder_forward.1} parent=0 // pred_check
    _
  $region147: #{autoencoder_forward.1} parent=0 // pred_check_branch
    %156 = sbr.rel (0) target = $region149
  $region148: #{autoencoder_forward.1} parent=0 // pred_region
    _
  $region149: #{autoencoder_forward.1} parent=0 // pred_fallthru
    _
  %v157 = vld [vmem:[%s1] sm:$0xff]
  %v158 = vld [vmem:[%s3] sm:$0xff]
  %v159 = vld [vmem:[%s5] sm:$0xff]
  %161 = vrot.lane.b32.xlu0 %v157, 3
  %v162 = vpop.permute.xlu0 %161
  %vm164 = vcmask 23552
  %v165 = vsel %vm164, 0.0, %v162
  %vm166 = vcmask 154624
  %v167 = vsel %vm166, %v165, 0.0
  %169 = vrot.lane.b32.xlu0 %v167, 127
  %v170 = vpop.permute.xlu0 %169
  %172 = vrot.lane.b32.xlu0 %v167, 126
  %v173 = vpop.permute.xlu0 %172
  %175 = vrot.lane.b32.xlu0 %v167, 125
  %v176 = vpop.permute.xlu0 %175
  %178 = vrot.lane.b32.xlu0 %v167, 124
  %v179 = vpop.permute.xlu0 %178
  %181 = vrot.lane.b32.xlu0 %v167, 123
  %v182 = vpop.permute.xlu0 %181
  %184 = vrot.lane.b32.xlu0 %v167, 122
  %v185 = vpop.permute.xlu0 %184
  %187 = vrot.lane.b32.xlu0 %v157, 115
  %v188 = vpop.permute.xlu0 %187
  %v190 = vsel %vm164, 0.0, %v188
  %v191 = vsel %vm166, %v190, 0.0
  %193 = vrot.lane.b32.xlu0 %v191, 127
  %v194 = vpop.permute.xlu0 %193
  %195 = vrot.lane.b32.xlu0 %v191, 126
  %v196 = vpop.permute.xlu0 %195
  %197 = vrot.lane.b32.xlu0 %v191, 125
  %v198 = vpop.permute.xlu0 %197
  %199 = vrot.lane.b32.xlu0 %v191, 124
  %v200 = vpop.permute.xlu0 %199
  %201 = vrot.lane.b32.xlu0 %v191, 123
  %v202 = vpop.permute.xlu0 %201
  %203 = vrot.lane.b32.xlu0 %v191, 122
  %v204 = vpop.permute.xlu0 %203
  %205 = vrot.lane.b32.xlu0 %v191, 16
  %v206 = vpop.permute.xlu0 %205
  %207 = vrot.lane.b32.xlu0 %v194, 16
  %v208 = vpop.permute.xlu0 %207
  %209 = vrot.lane.b32.xlu0 %v196, 16
  %v210 = vpop.permute.xlu0 %209
  %211 = vrot.lane.b32.xlu0 %v198, 16
  %v212 = vpop.permute.xlu0 %211
  %213 = vrot.lane.b32.xlu0 %v200, 16
  %v214 = vpop.permute.xlu0 %213
  %215 = vrot.lane.b32.xlu0 %v202, 16
  %v216 = vpop.permute.xlu0 %215
  %217 = vrot.lane.b32.xlu0 %v204, 16
  %v218 = vpop.permute.xlu0 %217
  %vm226 = vcmask 130048
  %v227 = vsel %vm226, %v167, %v206
  %v228 = vsel %vm226, %v170, %v208
  %v229 = vsel %vm226, %v173, %v210
  %v230 = vsel %vm226, %v176, %v212
  %v231 = vsel %vm226, %v179, %v214
  %v232 = vsel %vm226, %v182, %v216
  %v233 = vsel %vm226, %v185, %v218
  %235 = vset.pattern.permute.xlu0 0
  %236 = vperm.xlu0 %235, %v159
  %v237 = vpop.permute.xlu0 %236
  %vm239 = vcmask 457728
  %v241 = vsel %vm239, %v158, 0
  %243 = vmatpush.msra.mxu0 0.0
  %244 = vmatpush.msra.mxu0 0.0
  %245 = vmatpush.msra.mxu0 0.0
  %246 = vmatpush.msra.mxu0 0.0
  %247 = vmatpush.msra.mxu0 0.0
  %248 = vmatpush.msra.mxu0 0.0
  %249 = vmatpush.msra.mxu0 0.0
  %250 = vmatpush.msra.mxu0 0.0
  %251 = vmatpush.msra.mxu0 0.0
  %252 = vmatpush.msra.mxu0 %v233
  %253 = vmatpush.msra.mxu0 %v232
  %254 = vmatpush.msra.mxu0 %v231
  %255 = vmatpush.msra.mxu0 %v230
  %256 = vmatpush.msra.mxu0 %v229
  %257 = vmatpush.msra.mxu0 %v228
  %258 = vmatpush.msra.mxu0 %v227
  %259 = vmatmul.f32.gmra.mxu0 %v241
  %v260 = vpop.f32.mrf.mxu0
  %v261 = vadd.f32 %v237, %v260
  %262 = vdwg.mxu0
  %v263 = vmax.f32 %v261, 0.0
  %v264 = vld [vmem:[%s7] sm:$0xff]
  %v265 = vld [vmem:[%s9] sm:$0xff]
  %vm266 = vcmask 261120
  %v267 = vsel %vm266, %v263, 0.0
  %268 = vadd.xlane.f32.xlu0 %v267
  %v269 = vpop.xlane.xlu0 %268
  %v270 = vrcp.pop 32.0
  %v271 = vmul.f32 32.0, %v270
  %v272 = vsub.f32 1.0, %v271
  %v273 = vmul.f32 %v270, %v272
  %v274 = vadd.f32 %v270, %v273
  %vm275 = vweird.f32 %v270
  %v276 = vsel %vm275, %v270, %v274
  %v277 = vmul.f32 %v269, %v276
  %v278 = vsub.f32 %v263, %v277
  %v279 = vmul.f32 %v278, %v278
  %v280 = vsel %vm266, %v279, 0.0
  %281 = vadd.xlane.f32.xlu0 %v280
  %v282 = vpop.xlane.xlu0 %281
  %v283 = vmul.f32 %v282, %v276
  %v284 = vadd.f32 %v283, 1e-05
  %v285 = vrsqrt.pop %v284
  %v286 = vmul.f32 %v285, %v284
  %v287 = vmul.f32 %v286, %v285
  %v288 = vmul.f32 0.5, %v287
  %v289 = vsub.f32 1.5, %v288
  %v290 = vmul.f32 %v285, %v289
  %vm291 = vweird.f32 %v284
  %vm292 = vweird.f32 %v285
  %vm293 = vmor %vm291, %vm292
  %v294 = vsel %vm293, %v285, %v290
  %v295 = vmul.f32 %v278, %v294
  %297 = vset.pattern.permute.xlu0 0
  %298 = vperm.xlu0 %297, %v264
  %v299 = vpop.permute.xlu0 %298
  %v301 = vmul.f32 %v295, %v299
  %303 = vset.pattern.permute.xlu0 0
  %304 = vperm.xlu0 %303, %v265
  %v305 = vpop.permute.xlu0 %304
  %v307 = vadd.f32 %v301, %v305
  %v308 = vld [vmem:[%s11] sm:$0xff]
  %v309 = vld [vmem:[%s13] sm:$0xff]
  %311 = vrot.lane.b32.xlu0 %v307, 3
  %v312 = vpop.permute.xlu0 %311
  %v314 = vsel %vm164, 0.0, %v312
  %v315 = vsel %vm166, %v314, 0.0
  %317 = vrot.lane.b32.xlu0 %v315, 127
  %v318 = vpop.permute.xlu0 %317
  %320 = vrot.lane.b32.xlu0 %v315, 126
  %v321 = vpop.permute.xlu0 %320
  %323 = vrot.lane.b32.xlu0 %v315, 125
  %v324 = vpop.permute.xlu0 %323
  %326 = vrot.lane.b32.xlu0 %v315, 124
  %v327 = vpop.permute.xlu0 %326
  %329 = vrot.lane.b32.xlu0 %v315, 123
  %v330 = vpop.permute.xlu0 %329
  %332 = vrot.lane.b32.xlu0 %v315, 122
  %v333 = vpop.permute.xlu0 %332
  %335 = vrot.lane.b32.xlu0 %v307, 115
  %v336 = vpop.permute.xlu0 %335
  %v338 = vsel %vm164, 0.0, %v336
  %v339 = vsel %vm166, %v338, 0.0
  %341 = vrot.lane.b32.xlu0 %v339, 127
  %v342 = vpop.permute.xlu0 %341
  %343 = vrot.lane.b32.xlu0 %v339, 126
  %v344 = vpop.permute.xlu0 %343
  %345 = vrot.lane.b32.xlu0 %v339, 125
  %v346 = vpop.permute.xlu0 %345
  %347 = vrot.lane.b32.xlu0 %v339, 124
  %v348 = vpop.permute.xlu0 %347
  %349 = vrot.lane.b32.xlu0 %v339, 123
  %v350 = vpop.permute.xlu0 %349
  %351 = vrot.lane.b32.xlu0 %v339, 122
  %v352 = vpop.permute.xlu0 %351
  %353 = vrot.lane.b32.xlu0 %v339, 16
  %v354 = vpop.permute.xlu0 %353
  %355 = vrot.lane.b32.xlu0 %v342, 16
  %v356 = vpop.permute.xlu0 %355
  %357 = vrot.lane.b32.xlu0 %v344, 16
  %v358 = vpop.permute.xlu0 %357
  %359 = vrot.lane.b32.xlu0 %v346, 16
  %v360 = vpop.permute.xlu0 %359
  %361 = vrot.lane.b32.xlu0 %v348, 16
  %v362 = vpop.permute.xlu0 %361
  %363 = vrot.lane.b32.xlu0 %v350, 16
  %v364 = vpop.permute.xlu0 %363
  %365 = vrot.lane.b32.xlu0 %v352, 16
  %v366 = vpop.permute.xlu0 %365
  %v374 = vsel %vm226, %v315, %v354
  %v375 = vsel %vm226, %v318, %v356
  %v376 = vsel %vm226, %v321, %v358
  %v377 = vsel %vm226, %v324, %v360
  %v378 = vsel %vm226, %v327, %v362
  %v379 = vsel %vm226, %v330, %v364
  %v380 = vsel %vm226, %v333, %v366
  %382 = vset.pattern.permute.xlu0 0
  %383 = vperm.xlu0 %382, %v309
  %v384 = vpop.permute.xlu0 %383
  %v387 = vsel %vm239, %v308, 0
  %389 = vmatpush.msra.mxu0 0.0
  %390 = vmatpush.msra.mxu0 0.0
  %391 = vmatpush.msra.mxu0 0.0
  %392 = vmatpush.msra.mxu0 0.0
  %393 = vmatpush.msra.mxu0 0.0
  %394 = vmatpush.msra.mxu0 0.0
  %395 = vmatpush.msra.mxu0 0.0
  %396 = vmatpush.msra.mxu0 0.0
  %397 = vmatpush.msra.mxu0 0.0
  %398 = vmatpush.msra.mxu0 %v380
  %399 = vmatpush.msra.mxu0 %v379
  %400 = vmatpush.msra.mxu0 %v378
  %401 = vmatpush.msra.mxu0 %v377
  %402 = vmatpush.msra.mxu0 %v376
  %403 = vmatpush.msra.mxu0 %v375
  %404 = vmatpush.msra.mxu0 %v374
  %405 = vmatmul.f32.gmra.mxu0 %v387
  %v406 = vpop.f32.mrf.mxu0
  %v407 = vadd.f32 %v384, %v406
  %408 = vdwg.mxu0
  %v409 = vmax.f32 %v407, 0.0
  %v410 = vlaneseq
  %v411 = vshrl.u32 %v410, 7
  %v412 = vadd.s32 %v411, 8
  %v413 = vadd.s32 %v411, 16
  %v414 = vadd.s32 %v411, 24
  %v415 = vlaneseq
  %v416 = vand.u32 %v415, 127
  %v417 = vmul.u32 %v416, 2
  %vm418 = vcmp.eq.s32.totalorder %v411, %v417
  %vm419 = vcmp.eq.s32.totalorder %v412, %v417
  %vm420 = vcmp.eq.s32.totalorder %v413, %v417
  %vm421 = vcmp.eq.s32.totalorder %v414, %v417
  %v422 = vsel %vm418, 1.0, 0.0
  %v423 = vsel %vm419, 1.0, 0.0
  %v424 = vsel %vm420, 1.0, 0.0
  %v425 = vsel %vm421, 1.0, 0.0
  %v426 = vadd.s32 %v417, 1
  %vm427 = vcmp.eq.s32.totalorder %v411, %v426
  %vm428 = vcmp.eq.s32.totalorder %v412, %v426
  %vm429 = vcmp.eq.s32.totalorder %v413, %v426
  %vm430 = vcmp.eq.s32.totalorder %v414, %v426
  %v431 = vsel %vm427, 1.0, 0.0
  %v432 = vsel %vm428, 1.0, 0.0
  %v433 = vsel %vm429, 1.0, 0.0
  %v434 = vsel %vm430, 1.0, 0.0
  %v436 = vsel %vm266, %v409, 0
  %438 = vmatpush.msra.mxu0 0.0
  %439 = vmatpush.msra.mxu0 0.0
  %440 = vmatpush.msra.mxu0 0.0
  %441 = vmatpush.msra.mxu0 0.0
  %442 = vmatpush.msra.mxu0 0.0
  %443 = vmatpush.msra.mxu0 0.0
  %444 = vmatpush.msra.mxu0 0.0
  %445 = vmatpush.msra.mxu0 0.0
  %446 = vmatpush.msra.mxu0 0.0
  %447 = vmatpush.msra.mxu0 0.0
  %448 = vmatpush.msra.mxu0 0.0
  %449 = vmatpush.msra.mxu0 0.0
  %450 = vmatpush.msra.mxu0 %v425
  %451 = vmatpush.msra.mxu0 %v424
  %452 = vmatpush.msra.mxu0 %v423
  %453 = vmatpush.msra.mxu0 %v422
  %454 = vmatmul.f32.gmra.mxu0 %v436
  %v455 = vpop.f32.mrf.mxu0
  %v456 = vadd.f32 0.0, %v455
  %457 = vdwg.mxu0
  %458 = vmatpush.msra.mxu0 0.0
  %459 = vmatpush.msra.mxu0 0.0
  %460 = vmatpush.msra.mxu0 0.0
  %461 = vmatpush.msra.mxu0 0.0
  %462 = vmatpush.msra.mxu0 0.0
  %463 = vmatpush.msra.mxu0 0.0
  %464 = vmatpush.msra.mxu0 0.0
  %465 = vmatpush.msra.mxu0 0.0
  %466 = vmatpush.msra.mxu0 0.0
  %467 = vmatpush.msra.mxu0 0.0
  %468 = vmatpush.msra.mxu0 0.0
  %469 = vmatpush.msra.mxu0 0.0
  %470 = vmatpush.msra.mxu0 %v434
  %471 = vmatpush.msra.mxu0 %v433
  %472 = vmatpush.msra.mxu0 %v432
  %473 = vmatpush.msra.mxu0 %v431
  %474 = vmatmul.f32.gmra.mxu0 %v436
  %v475 = vpop.f32.mrf.mxu0
  %v476 = vadd.f32 0.0, %v475
  %477 = vdwg.mxu0
  %v478 = vmax.f32 %v456, %v476
  %v479 = vld [vmem:[%s15] sm:$0xff]
  %v480 = vld [vmem:[%s17] sm:$0xff]
  %v481 = vsel %vm226, %v478, 0.0
  %482 = vadd.xlane.f32.xlu0 %v481
  %v483 = vpop.xlane.xlu0 %482
  %v484 = vrcp.pop 16.0
  %v485 = vmul.f32 16.0, %v484
  %v486 = vsub.f32 1.0, %v485
  %v487 = vmul.f32 %v484, %v486
  %v488 = vadd.f32 %v484, %v487
  %vm489 = vweird.f32 %v484
  %v490 = vsel %vm489, %v484, %v488
  %v491 = vmul.f32 %v483, %v490
  %v492 = vsub.f32 %v478, %v491
  %v493 = vmul.f32 %v492, %v492
  %v494 = vsel %vm226, %v493, 0.0
  %495 = vadd.xlane.f32.xlu0 %v494
  %v496 = vpop.xlane.xlu0 %495
  %v497 = vmul.f32 %v496, %v490
  %v498 = vadd.f32 %v497, 1e-05
  %v499 = vrsqrt.pop %v498
  %v500 = vmul.f32 %v499, %v498
  %v501 = vmul.f32 %v500, %v499
  %v502 = vmul.f32 0.5, %v501
  %v503 = vsub.f32 1.5, %v502
  %v504 = vmul.f32 %v499, %v503
  %vm505 = vweird.f32 %v498
  %vm506 = vweird.f32 %v499
  %vm507 = vmor %vm505, %vm506
  %v508 = vsel %vm507, %v499, %v504
  %v509 = vmul.f32 %v492, %v508
  %511 = vset.pattern.permute.xlu0 0
  %512 = vperm.xlu0 %511, %v479
  %v513 = vpop.permute.xlu0 %512
  %v515 = vmul.f32 %v509, %v513
  %517 = vset.pattern.permute.xlu0 0
  %518 = vperm.xlu0 %517, %v480
  %v519 = vpop.permute.xlu0 %518
  %v521 = vadd.f32 %v515, %v519
  %v522 = vld [vmem:[%s19] sm:$0xff]
  %v523 = vld [vmem:[%s19 + $0x8] sm:$0xff]
  %v524 = vld [vmem:[%s21] sm:$0xff]
  %v525 = vld [vmem:[%s21 + $0x8] sm:$0xff]
  %527 = vrot.lane.b32.xlu0 %v521, 3
  %v528 = vpop.permute.xlu0 %527
  %v530 = vsel %vm164, 0.0, %v528
  %vm531 = vcmask 89088
  %v532 = vsel %vm531, %v530, 0.0
  %534 = vrot.lane.b32.xlu0 %v532, 127
  %v535 = vpop.permute.xlu0 %534
  %537 = vrot.lane.b32.xlu0 %v532, 126
  %v538 = vpop.permute.xlu0 %537
  %540 = vrot.lane.b32.xlu0 %v532, 125
  %v541 = vpop.permute.xlu0 %540
  %543 = vrot.lane.b32.xlu0 %v532, 124
  %v544 = vpop.permute.xlu0 %543
  %546 = vrot.lane.b32.xlu0 %v532, 123
  %v547 = vpop.permute.xlu0 %546
  %549 = vrot.lane.b32.xlu0 %v532, 122
  %v550 = vpop.permute.xlu0 %549
  %552 = vrot.lane.b32.xlu0 %v521, 123
  %v553 = vpop.permute.xlu0 %552
  %v555 = vsel %vm164, 0.0, %v553
  %v556 = vsel %vm531, %v555, 0.0
  %558 = vrot.lane.b32.xlu0 %v556, 127
  %v559 = vpop.permute.xlu0 %558
  %560 = vrot.lane.b32.xlu0 %v556, 126
  %v561 = vpop.permute.xlu0 %560
  %562 = vrot.lane.b32.xlu0 %v556, 125
  %v563 = vpop.permute.xlu0 %562
  %564 = vrot.lane.b32.xlu0 %v556, 124
  %v565 = vpop.permute.xlu0 %564
  %566 = vrot.lane.b32.xlu0 %v556, 123
  %v567 = vpop.permute.xlu0 %566
  %568 = vrot.lane.b32.xlu0 %v556, 122
  %v569 = vpop.permute.xlu0 %568
  %570 = vrot.lane.b32.xlu0 %v556, 8
  %v571 = vpop.permute.xlu0 %570
  %572 = vrot.lane.b32.xlu0 %v559, 8
  %v573 = vpop.permute.xlu0 %572
  %574 = vrot.lane.b32.xlu0 %v561, 8
  %v575 = vpop.permute.xlu0 %574
  %576 = vrot.lane.b32.xlu0 %v563, 8
  %v577 = vpop.permute.xlu0 %576
  %578 = vrot.lane.b32.xlu0 %v565, 8
  %v579 = vpop.permute.xlu0 %578
  %580 = vrot.lane.b32.xlu0 %v567, 8
  %v581 = vpop.permute.xlu0 %580
  %582 = vrot.lane.b32.xlu0 %v569, 8
  %v583 = vpop.permute.xlu0 %582
  %vm591 = vcmask 64512
  %v592 = vsel %vm591, %v532, %v571
  %v593 = vsel %vm591, %v535, %v573
  %v594 = vsel %vm591, %v538, %v575
  %v595 = vsel %vm591, %v541, %v577
  %v596 = vsel %vm591, %v544, %v579
  %v597 = vsel %vm591, %v547, %v581
  %v598 = vsel %vm591, %v550, %v583
  %600 = vset.pattern.permute.xlu0 0
  %601 = vperm.xlu0 %600, %v524
  %v602 = vpop.permute.xlu0 %601
  %605 = vset.pattern.permute.xlu0 0
  %606 = vperm.xlu0 %605, %v525
  %v607 = vpop.permute.xlu0 %606
  %v610 = vsel %vm239, %v522, 0
  %v613 = vsel %vm239, %v523, 0
  %615 = vmatpush.msra.mxu0 0.0
  %616 = vmatpush.msra.mxu0 0.0
  %617 = vmatpush.msra.mxu0 0.0
  %618 = vmatpush.msra.mxu0 0.0
  %619 = vmatpush.msra.mxu0 0.0
  %620 = vmatpush.msra.mxu0 0.0
  %621 = vmatpush.msra.mxu0 0.0
  %622 = vmatpush.msra.mxu0 0.0
  %623 = vmatpush.msra.mxu0 0.0
  %624 = vmatpush.msra.mxu0 %v598
  %625 = vmatpush.msra.mxu0 %v597
  %626 = vmatpush.msra.mxu0 %v596
  %627 = vmatpush.msra.mxu0 %v595
  %628 = vmatpush.msra.mxu0 %v594
  %629 = vmatpush.msra.mxu0 %v593
  %630 = vmatpush.msra.mxu0 %v592
  %631 = vmatmul.f32.gmra.mxu0 %v610
  %v632 = vpop.f32.mrf.mxu0
  %v633 = vadd.f32 %v602, %v632
  %634 = vmatmul.f32.gmra.mxu0 %v613
  %v635 = vpop.f32.mrf.mxu0
  %v636 = vadd.f32 %v607, %v635
  %637 = vdwg.mxu0
  %v638 = vmax.f32 %v633, 0.0
  %v639 = vmax.f32 %v636, 0.0
  %v640 = vld [vmem:[%s23] sm:$0xff]
  %v641 = vld [vmem:[%s23 + $0x8] sm:$0xff]
  %v642 = vld [vmem:[%s25] sm:$0xff]
  %v643 = vld [vmem:[%s25 + $0x8] sm:$0xff]
  %v644 = vsel %vm226, %v638, 0.0
  %645 = vadd.xlane.f32.xlu0 %v644
  %v646 = vpop.xlane.xlu0 %645
  %v647 = vsel %vm226, %v639, 0.0
  %648 = vadd.xlane.f32.xlu0 %v647
  %v649 = vpop.xlane.xlu0 %648
  %v650 = vmul.f32 %v646, %v490
  %v651 = vmul.f32 %v649, %v490
  %v652 = vsub.f32 %v638, %v650
  %v653 = vsub.f32 %v639, %v651
  %v654 = vmul.f32 %v652, %v652
  %v655 = vmul.f32 %v653, %v653
  %v656 = vsel %vm226, %v654, 0.0
  %657 = vadd.xlane.f32.xlu0 %v656
  %v658 = vpop.xlane.xlu0 %657
  %v659 = vsel %vm226, %v655, 0.0
  %660 = vadd.xlane.f32.xlu0 %v659
  %v661 = vpop.xlane.xlu0 %660
  %v662 = vmul.f32 %v658, %v490
  %v663 = vmul.f32 %v661, %v490
  %v664 = vadd.f32 %v662, 1e-05
  %v665 = vadd.f32 %v663, 1e-05
  %v666 = vrsqrt.pop %v664
  %v667 = vmul.f32 %v666, %v664
  %v668 = vmul.f32 %v667, %v666
  %v669 = vmul.f32 0.5, %v668
  %v670 = vsub.f32 1.5, %v669
  %v671 = vmul.f32 %v666, %v670
  %vm672 = vweird.f32 %v664
  %vm673 = vweird.f32 %v666
  %vm674 = vmor %vm672, %vm673
  %v675 = vsel %vm674, %v666, %v671
  %v676 = vrsqrt.pop %v665
  %v677 = vmul.f32 %v676, %v665
  %v678 = vmul.f32 %v677, %v676
  %v679 = vmul.f32 0.5, %v678
  %v680 = vsub.f32 1.5, %v679
  %v681 = vmul.f32 %v676, %v680
  %vm682 = vweird.f32 %v665
  %vm683 = vweird.f32 %v676
  %vm684 = vmor %vm682, %vm683
  %v685 = vsel %vm684, %v676, %v681
  %v686 = vmul.f32 %v652, %v675
  %v687 = vmul.f32 %v653, %v685
  %689 = vset.pattern.permute.xlu0 0
  %690 = vperm.xlu0 %689, %v640
  %v691 = vpop.permute.xlu0 %690
  %694 = vset.pattern.permute.xlu0 0
  %695 = vperm.xlu0 %694, %v641
  %v696 = vpop.permute.xlu0 %695
  %v698 = vmul.f32 %v686, %v691
  %v699 = vmul.f32 %v687, %v696
  %701 = vset.pattern.permute.xlu0 0
  %702 = vperm.xlu0 %701, %v642
  %v703 = vpop.permute.xlu0 %702
  %706 = vset.pattern.permute.xlu0 0
  %707 = vperm.xlu0 %706, %v643
  %v708 = vpop.permute.xlu0 %707
  %v710 = vadd.f32 %v698, %v703
  %v711 = vadd.f32 %v699, %v708
  %v712 = vld [vmem:[%s27] sm:$0xff]
  %v713 = vld [vmem:[%s27 + $0x8] sm:$0xff]
  %v714 = vld [vmem:[%s29] sm:$0xff]
  %v715 = vld [vmem:[%s29 + $0x8] sm:$0xff]
  %718 = vrot.lane.b32.xlu0 %v710, 3
  %v719 = vpop.permute.xlu0 %718
  %720 = vrot.lane.b32.xlu0 %v711, 3
  %v721 = vpop.permute.xlu0 %720
  %v724 = vsel %vm164, 0.0, %v719
  %v725 = vsel %vm164, 0.0, %v721
  %v726 = vsel %vm531, %v724, 0.0
  %v727 = vsel %vm531, %v725, 0.0
  %730 = vrot.lane.b32.xlu0 %v726, 127
  %v731 = vpop.permute.xlu0 %730
  %732 = vrot.lane.b32.xlu0 %v727, 127
  %v733 = vpop.permute.xlu0 %732
  %736 = vrot.lane.b32.xlu0 %v726, 126
  %v737 = vpop.permute.xlu0 %736
  %738 = vrot.lane.b32.xlu0 %v727, 126
  %v739 = vpop.permute.xlu0 %738
  %742 = vrot.lane.b32.xlu0 %v726, 125
  %v743 = vpop.permute.xlu0 %742
  %744 = vrot.lane.b32.xlu0 %v727, 125
  %v745 = vpop.permute.xlu0 %744
  %748 = vrot.lane.b32.xlu0 %v726, 124
  %v749 = vpop.permute.xlu0 %748
  %750 = vrot.lane.b32.xlu0 %v727, 124
  %v751 = vpop.permute.xlu0 %750
  %754 = vrot.lane.b32.xlu0 %v726, 123
  %v755 = vpop.permute.xlu0 %754
  %756 = vrot.lane.b32.xlu0 %v727, 123
  %v757 = vpop.permute.xlu0 %756
  %760 = vrot.lane.b32.xlu0 %v726, 122
  %v761 = vpop.permute.xlu0 %760
  %762 = vrot.lane.b32.xlu0 %v727, 122
  %v763 = vpop.permute.xlu0 %762
  %766 = vrot.lane.b32.xlu0 %v710, 123
  %v767 = vpop.permute.xlu0 %766
  %768 = vrot.lane.b32.xlu0 %v711, 123
  %v769 = vpop.permute.xlu0 %768
  %v772 = vsel %vm164, 0.0, %v767
  %v773 = vsel %vm164, 0.0, %v769
  %v774 = vsel %vm531, %v772, 0.0
  %v775 = vsel %vm531, %v773, 0.0
  %778 = vrot.lane.b32.xlu0 %v774, 127
  %v779 = vpop.permute.xlu0 %778
  %780 = vrot.lane.b32.xlu0 %v775, 127
  %v781 = vpop.permute.xlu0 %780
  %782 = vrot.lane.b32.xlu0 %v774, 126
  %v783 = vpop.permute.xlu0 %782
  %784 = vrot.lane.b32.xlu0 %v775, 126
  %v785 = vpop.permute.xlu0 %784
  %786 = vrot.lane.b32.xlu0 %v774, 125
  %v787 = vpop.permute.xlu0 %786
  %788 = vrot.lane.b32.xlu0 %v775, 125
  %v789 = vpop.permute.xlu0 %788
  %790 = vrot.lane.b32.xlu0 %v774, 124
  %v791 = vpop.permute.xlu0 %790
  %792 = vrot.lane.b32.xlu0 %v775, 124
  %v793 = vpop.permute.xlu0 %792
  %794 = vrot.lane.b32.xlu0 %v774, 123
  %v795 = vpop.permute.xlu0 %794
  %796 = vrot.lane.b32.xlu0 %v775, 123
  %v797 = vpop.permute.xlu0 %796
  %798 = vrot.lane.b32.xlu0 %v774, 122
  %v799 = vpop.permute.xlu0 %798
  %800 = vrot.lane.b32.xlu0 %v775, 122
  %v801 = vpop.permute.xlu0 %800
  %802 = vrot.lane.b32.xlu0 %v774, 8
  %v803 = vpop.permute.xlu0 %802
  %804 = vrot.lane.b32.xlu0 %v775, 8
  %v805 = vpop.permute.xlu0 %804
  %806 = vrot.lane.b32.xlu0 %v779, 8
  %v807 = vpop.permute.xlu0 %806
  %808 = vrot.lane.b32.xlu0 %v781, 8
  %v809 = vpop.permute.xlu0 %808
  %810 = vrot.lane.b32.xlu0 %v783, 8
  %v811 = vpop.permute.xlu0 %810
  %812 = vrot.lane.b32.xlu0 %v785, 8
  %v813 = vpop.permute.xlu0 %812
  %814 = vrot.lane.b32.xlu0 %v787, 8
  %v815 = vpop.permute.xlu0 %814
  %816 = vrot.lane.b32.xlu0 %v789, 8
  %v817 = vpop.permute.xlu0 %816
  %818 = vrot.lane.b32.xlu0 %v791, 8
  %v819 = vpop.permute.xlu0 %818
  %820 = vrot.lane.b32.xlu0 %v793, 8
  %v821 = vpop.permute.xlu0 %820
  %822 = vrot.lane.b32.xlu0 %v795, 8
  %v823 = vpop.permute.xlu0 %822
  %824 = vrot.lane.b32.xlu0 %v797, 8
  %v825 = vpop.permute.xlu0 %824
  %826 = vrot.lane.b32.xlu0 %v799, 8
  %v827 = vpop.permute.xlu0 %826
  %828 = vrot.lane.b32.xlu0 %v801, 8
  %v829 = vpop.permute.xlu0 %828
  %v844 = vsel %vm591, %v726, %v803
  %v845 = vsel %vm591, %v727, %v805
  %v846 = vsel %vm591, %v731, %v807
  %v847 = vsel %vm591, %v733, %v809
  %v848 = vsel %vm591, %v737, %v811
  %v849 = vsel %vm591, %v739, %v813
  %v850 = vsel %vm591, %v743, %v815
  %v851 = vsel %vm591, %v745, %v817
  %v852 = vsel %vm591, %v749, %v819
  %v853 = vsel %vm591, %v751, %v821
  %v854 = vsel %vm591, %v755, %v823
  %v855 = vsel %vm591, %v757, %v825
  %v856 = vsel %vm591, %v761, %v827
  %v857 = vsel %vm591, %v763, %v829
  %859 = vset.pattern.permute.xlu0 0
  %860 = vperm.xlu0 %859, %v714
  %v861 = vpop.permute.xlu0 %860
  %864 = vset.pattern.permute.xlu0 0
  %865 = vperm.xlu0 %864, %v715
  %v866 = vpop.permute.xlu0 %865
  %vm868 = vcmask 916480
  %v870 = vsel %vm868, %v712, 0
  %v873 = vsel %vm868, %v713, 0
  %875 = vmatpush.msra.mxu0 0.0
  %876 = vmatpush.msra.mxu0 0.0
  %877 = vmatpush.msra.mxu0 %v857
  %878 = vmatpush.msra.mxu0 %v856
  %879 = vmatpush.msra.mxu0 %v855
  %880 = vmatpush.msra.mxu0 %v854
  %881 = vmatpush.msra.mxu0 %v853
  %882 = vmatpush.msra.mxu0 %v852
  %883 = vmatpush.msra.mxu0 %v851
  %884 = vmatpush.msra.mxu0 %v850
  %885 = vmatpush.msra.mxu0 %v849
  %886 = vmatpush.msra.mxu0 %v848
  %887 = vmatpush.msra.mxu0 %v847
  %888 = vmatpush.msra.mxu0 %v846
  %889 = vmatpush.msra.mxu0 %v845
  %890 = vmatpush.msra.mxu0 %v844
  %891 = vmatmul.f32.gmra.mxu0 %v870
  %v892 = vpop.f32.mrf.mxu0
  %v893 = vadd.f32 %v861, %v892
  %894 = vmatmul.f32.gmra.mxu0 %v873
  %v895 = vpop.f32.mrf.mxu0
  %v896 = vadd.f32 %v866, %v895
  %897 = vdwg.mxu0
  %v898 = vmax.f32 %v893, 0.0
  %v899 = vmax.f32 %v896, 0.0
  %v901 = vsel %vm226, %v898, 0
  %v904 = vsel %vm226, %v899, 0
  %906 = vmatpush.msra.mxu0 0.0
  %907 = vmatpush.msra.mxu0 0.0
  %908 = vmatpush.msra.mxu0 0.0
  %909 = vmatpush.msra.mxu0 0.0
  %910 = vmatpush.msra.mxu0 0.0
  %911 = vmatpush.msra.mxu0 0.0
  %912 = vmatpush.msra.mxu0 0.0
  %913 = vmatpush.msra.mxu0 0.0
  %914 = vmatpush.msra.mxu0 0.0
  %915 = vmatpush.msra.mxu0 0.0
  %916 = vmatpush.msra.mxu0 0.0
  %917 = vmatpush.msra.mxu0 0.0
  %918 = vmatpush.msra.mxu0 0.0
  %919 = vmatpush.msra.mxu0 0.0
  %920 = vmatpush.msra.mxu0 %v423
  %921 = vmatpush.msra.mxu0 %v422
  %922 = vmatmul.f32.gmra.mxu0 %v901
  %v923 = vpop.f32.mrf.mxu0
  %v924 = vadd.f32 0.0, %v923
  %925 = vmatmul.f32.gmra.mxu0 %v904
  %v926 = vpop.f32.mrf.mxu0
  %v927 = vadd.f32 0.0, %v926
  %928 = vdwg.mxu0
  %929 = vmatpush.msra.mxu0 0.0
  %930 = vmatpush.msra.mxu0 0.0
  %931 = vmatpush.msra.mxu0 0.0
  %932 = vmatpush.msra.mxu0 0.0
  %933 = vmatpush.msra.mxu0 0.0
  %934 = vmatpush.msra.mxu0 0.0
  %935 = vmatpush.msra.mxu0 0.0
  %936 = vmatpush.msra.mxu0 0.0
  %937 = vmatpush.msra.mxu0 0.0
  %938 = vmatpush.msra.mxu0 0.0
  %939 = vmatpush.msra.mxu0 0.0
  %940 = vmatpush.msra.mxu0 0.0
  %941 = vmatpush.msra.mxu0 0.0
  %942 = vmatpush.msra.mxu0 0.0
  %943 = vmatpush.msra.mxu0 %v432
  %944 = vmatpush.msra.mxu0 %v431
  %945 = vmatmul.f32.gmra.mxu0 %v901
  %v946 = vpop.f32.mrf.mxu0
  %v947 = vadd.f32 0.0, %v946
  %948 = vmatmul.f32.gmra.mxu0 %v904
  %v949 = vpop.f32.mrf.mxu0
  %v950 = vadd.f32 0.0, %v949
  %951 = vdwg.mxu0
  %v952 = vmax.f32 %v924, %v947
  %v953 = vmax.f32 %v927, %v950
  %v954 = vld [vmem:[%s31] sm:$0xff]
  %v955 = vld [vmem:[%s31 + $0x8] sm:$0xff]
  %v956 = vld [vmem:[%s33] sm:$0xff]
  %v957 = vld [vmem:[%s33 + $0x8] sm:$0xff]
  %v958 = vsel %vm591, %v952, 0.0
  %959 = vadd.xlane.f32.xlu0 %v958
  %v960 = vpop.xlane.xlu0 %959
  %v961 = vsel %vm591, %v953, 0.0
  %962 = vadd.xlane.f32.xlu0 %v961
  %v963 = vpop.xlane.xlu0 %962
  %v964 = vrcp.pop 8.0
  %v965 = vmul.f32 8.0, %v964
  %v966 = vsub.f32 1.0, %v965
  %v967 = vmul.f32 %v964, %v966
  %v968 = vadd.f32 %v964, %v967
  %vm969 = vweird.f32 %v964
  %v970 = vsel %vm969, %v964, %v968
  %v971 = vmul.f32 %v960, %v970
  %v972 = vmul.f32 %v963, %v970
  %v973 = vsub.f32 %v952, %v971
  %v974 = vsub.f32 %v953, %v972
  %v975 = vmul.f32 %v973, %v973
  %v976 = vmul.f32 %v974, %v974
  %v977 = vsel %vm591, %v975, 0.0
  %978 = vadd.xlane.f32.xlu0 %v977
  %v979 = vpop.xlane.xlu0 %978
  %v980 = vsel %vm591, %v976, 0.0
  %981 = vadd.xlane.f32.xlu0 %v980
  %v982 = vpop.xlane.xlu0 %981
  %v983 = vmul.f32 %v979, %v970
  %v984 = vmul.f32 %v982, %v970
  %v985 = vadd.f32 %v983, 1e-05
  %v986 = vadd.f32 %v984, 1e-05
  %v987 = vrsqrt.pop %v985
  %v988 = vmul.f32 %v987, %v985
  %v989 = vmul.f32 %v988, %v987
  %v990 = vmul.f32 0.5, %v989
  %v991 = vsub.f32 1.5, %v990
  %v992 = vmul.f32 %v987, %v991
  %vm993 = vweird.f32 %v985
  %vm994 = vweird.f32 %v987
  %vm995 = vmor %vm993, %vm994
  %v996 = vsel %vm995, %v987, %v992
  %v997 = vrsqrt.pop %v986
  %v998 = vmul.f32 %v997, %v986
  %v999 = vmul.f32 %v998, %v997
  %v1000 = vmul.f32 0.5, %v999
  %v1001 = vsub.f32 1.5, %v1000
  %v1002 = vmul.f32 %v997, %v1001
  %vm1003 = vweird.f32 %v986
  %vm1004 = vweird.f32 %v997
  %vm1005 = vmor %vm1003, %vm1004
  %v1006 = vsel %vm1005, %v997, %v1002
  %v1007 = vmul.f32 %v973, %v996
  %v1008 = vmul.f32 %v974, %v1006
  %1010 = vset.pattern.permute.xlu0 0
  %1011 = vperm.xlu0 %1010, %v954
  %v1012 = vpop.permute.xlu0 %1011
  %1015 = vset.pattern.permute.xlu0 0
  %1016 = vperm.xlu0 %1015, %v955
  %v1017 = vpop.permute.xlu0 %1016
  %v1019 = vmul.f32 %v1007, %v1012
  %v1020 = vmul.f32 %v1008, %v1017
  %1022 = vset.pattern.permute.xlu0 0
  %1023 = vperm.xlu0 %1022, %v956
  %v1024 = vpop.permute.xlu0 %1023
  %1027 = vset.pattern.permute.xlu0 0
  %1028 = vperm.xlu0 %1027, %v957
  %v1029 = vpop.permute.xlu0 %1028
  %v1031 = vadd.f32 %v1019, %v1024
  %v1032 = vadd.f32 %v1020, %v1029
  %v1033 = vld [vmem:[%s35] sm:$0xff]
  %v1034 = vld [vmem:[%s35 + $0x8] sm:$0xff]
  %v1035 = vld [vmem:[%s35 + $0x10] sm:$0xff]
  %v1036 = vld [vmem:[%s35 + $0x18] sm:$0xff]
  %v1037 = vld [vmem:[%s37] sm:$0xff]
  %v1038 = vld [vmem:[%s37 + $0x8] sm:$0xff]
  %v1039 = vld [vmem:[%s37 + $0x10] sm:$0xff]
  %v1040 = vld [vmem:[%s37 + $0x18] sm:$0xff]
  %1043 = vrot.lane.b32.xlu0 %v1031, 3
  %v1044 = vpop.permute.xlu0 %1043
  %1045 = vrot.lane.b32.xlu0 %v1032, 3
  %v1046 = vpop.permute.xlu0 %1045
  %v1049 = vsel %vm164, 0.0, %v1044
  %v1050 = vsel %vm164, 0.0, %v1046
  %vm1051 = vcmask 56320
  %v1052 = vsel %vm1051, %v1049, 0.0
  %v1053 = vsel %vm1051, %v1050, 0.0
  %1056 = vrot.lane.b32.xlu0 %v1052, 127
  %v1057 = vpop.permute.xlu0 %1056
  %1058 = vrot.lane.b32.xlu0 %v1053, 127
  %v1059 = vpop.permute.xlu0 %1058
  %1062 = vrot.lane.b32.xlu0 %v1052, 126
  %v1063 = vpop.permute.xlu0 %1062
  %1064 = vrot.lane.b32.xlu0 %v1053, 126
  %v1065 = vpop.permute.xlu0 %1064
  %1068 = vrot.lane.b32.xlu0 %v1052, 125
  %v1069 = vpop.permute.xlu0 %1068
  %1070 = vrot.lane.b32.xlu0 %v1053, 125
  %v1071 = vpop.permute.xlu0 %1070
  %1074 = vrot.lane.b32.xlu0 %v1052, 124
  %v1075 = vpop.permute.xlu0 %1074
  %1076 = vrot.lane.b32.xlu0 %v1053, 124
  %v1077 = vpop.permute.xlu0 %1076
  %1080 = vrot.lane.b32.xlu0 %v1052, 123
  %v1081 = vpop.permute.xlu0 %1080
  %1082 = vrot.lane.b32.xlu0 %v1053, 123
  %v1083 = vpop.permute.xlu0 %1082
  %1086 = vrot.lane.b32.xlu0 %v1052, 122
  %v1087 = vpop.permute.xlu0 %1086
  %1088 = vrot.lane.b32.xlu0 %v1053, 122
  %v1089 = vpop.permute.xlu0 %1088
  %1092 = vrot.lane.b32.xlu0 %v1031, 127
  %v1093 = vpop.permute.xlu0 %1092
  %1094 = vrot.lane.b32.xlu0 %v1032, 127
  %v1095 = vpop.permute.xlu0 %1094
  %v1098 = vsel %vm164, 0.0, %v1093
  %v1099 = vsel %vm164, 0.0, %v1095
  %v1100 = vsel %vm1051, %v1098, 0.0
  %v1101 = vsel %vm1051, %v1099, 0.0
  %1104 = vrot.lane.b32.xlu0 %v1100, 127
  %v1105 = vpop.permute.xlu0 %1104
  %1106 = vrot.lane.b32.xlu0 %v1101, 127
  %v1107 = vpop.permute.xlu0 %1106
  %1108 = vrot.lane.b32.xlu0 %v1100, 126
  %v1109 = vpop.permute.xlu0 %1108
  %1110 = vrot.lane.b32.xlu0 %v1101, 126
  %v1111 = vpop.permute.xlu0 %1110
  %1112 = vrot.lane.b32.xlu0 %v1100, 125
  %v1113 = vpop.permute.xlu0 %1112
  %1114 = vrot.lane.b32.xlu0 %v1101, 125
  %v1115 = vpop.permute.xlu0 %1114
  %1116 = vrot.lane.b32.xlu0 %v1100, 124
  %v1117 = vpop.permute.xlu0 %1116
  %1118 = vrot.lane.b32.xlu0 %v1101, 124
  %v1119 = vpop.permute.xlu0 %1118
  %1120 = vrot.lane.b32.xlu0 %v1100, 123
  %v1121 = vpop.permute.xlu0 %1120
  %1122 = vrot.lane.b32.xlu0 %v1101, 123
  %v1123 = vpop.permute.xlu0 %1122
  %1124 = vrot.lane.b32.xlu0 %v1100, 122
  %v1125 = vpop.permute.xlu0 %1124
  %1126 = vrot.lane.b32.xlu0 %v1101, 122
  %v1127 = vpop.permute.xlu0 %1126
  %1128 = vrot.lane.b32.xlu0 %v1100, 4
  %v1129 = vpop.permute.xlu0 %1128
  %1130 = vrot.lane.b32.xlu0 %v1101, 4
  %v1131 = vpop.permute.xlu0 %1130
  %1132 = vrot.lane.b32.xlu0 %v1105, 4
  %v1133 = vpop.permute.xlu0 %1132
  %1134 = vrot.lane.b32.xlu0 %v1107, 4
  %v1135 = vpop.permute.xlu0 %1134
  %1136 = vrot.lane.b32.xlu0 %v1109, 4
  %v1137 = vpop.permute.xlu0 %1136
  %1138 = vrot.lane.b32.xlu0 %v1111, 4
  %v1139 = vpop.permute.xlu0 %1138
  %1140 = vrot.lane.b32.xlu0 %v1113, 4
  %v1141 = vpop.permute.xlu0 %1140
  %1142 = vrot.lane.b32.xlu0 %v1115, 4
  %v1143 = vpop.permute.xlu0 %1142
  %1144 = vrot.lane.b32.xlu0 %v1117, 4
  %v1145 = vpop.permute.xlu0 %1144
  %1146 = vrot.lane.b32.xlu0 %v1119, 4
  %v1147 = vpop.permute.xlu0 %1146
  %1148 = vrot.lane.b32.xlu0 %v1121, 4
  %v1149 = vpop.permute.xlu0 %1148
  %1150 = vrot.lane.b32.xlu0 %v1123, 4
  %v1151 = vpop.permute.xlu0 %1150
  %1152 = vrot.lane.b32.xlu0 %v1125, 4
  %v1153 = vpop.permute.xlu0 %1152
  %1154 = vrot.lane.b32.xlu0 %v1127, 4
  %v1155 = vpop.permute.xlu0 %1154
  %vm1170 = vcmask 31744
  %v1171 = vsel %vm1170, %v1052, %v1129
  %v1172 = vsel %vm1170, %v1053, %v1131
  %v1173 = vsel %vm1170, %v1057, %v1133
  %v1174 = vsel %vm1170, %v1059, %v1135
  %v1175 = vsel %vm1170, %v1063, %v1137
  %v1176 = vsel %vm1170, %v1065, %v1139
  %v1177 = vsel %vm1170, %v1069, %v1141
  %v1178 = vsel %vm1170, %v1071, %v1143
  %v1179 = vsel %vm1170, %v1075, %v1145
  %v1180 = vsel %vm1170, %v1077, %v1147
  %v1181 = vsel %vm1170, %v1081, %v1149
  %v1182 = vsel %vm1170, %v1083, %v1151
  %v1183 = vsel %vm1170, %v1087, %v1153
  %v1184 = vsel %vm1170, %v1089, %v1155
  %1186 = vset.pattern.permute.xlu0 0
  %1187 = vperm.xlu0 %1186, %v1037
  %v1188 = vpop.permute.xlu0 %1187
  %1191 = vset.pattern.permute.xlu0 0
  %1192 = vperm.xlu0 %1191, %v1038
  %v1193 = vpop.permute.xlu0 %1192
  %1196 = vset.pattern.permute.xlu0 0
  %1197 = vperm.xlu0 %1196, %v1039
  %v1198 = vpop.permute.xlu0 %1197
  %1201 = vset.pattern.permute.xlu0 0
  %1202 = vperm.xlu0 %1201, %v1040
  %v1203 = vpop.permute.xlu0 %1202
  %v1206 = vsel %vm868, %v1033, 0
  %v1209 = vsel %vm868, %v1034, 0
  %v1212 = vsel %vm868, %v1035, 0
  %v1215 = vsel %vm868, %v1036, 0
  %1217 = vmatpush.msra.mxu0 0.0
  %1218 = vmatpush.msra.mxu0 0.0
  %1219 = vmatpush.msra.mxu0 %v1184
  %1220 = vmatpush.msra.mxu0 %v1183
  %1221 = vmatpush.msra.mxu0 %v1182
  %1222 = vmatpush.msra.mxu0 %v1181
  %1223 = vmatpush.msra.mxu0 %v1180
  %1224 = vmatpush.msra.mxu0 %v1179
  %1225 = vmatpush.msra.mxu0 %v1178
  %1226 = vmatpush.msra.mxu0 %v1177
  %1227 = vmatpush.msra.mxu0 %v1176
  %1228 = vmatpush.msra.mxu0 %v1175
  %1229 = vmatpush.msra.mxu0 %v1174
  %1230 = vmatpush.msra.mxu0 %v1173
  %1231 = vmatpush.msra.mxu0 %v1172
  %1232 = vmatpush.msra.mxu0 %v1171
  %1233 = vmatmul.f32.gmra.mxu0 %v1206
  %v1234 = vpop.f32.mrf.mxu0
  %v1235 = vadd.f32 %v1188, %v1234
  %1236 = vmatmul.f32.gmra.mxu0 %v1209
  %v1237 = vpop.f32.mrf.mxu0
  %v1238 = vadd.f32 %v1193, %v1237
  %1239 = vmatmul.f32.gmra.mxu0 %v1212
  %v1240 = vpop.f32.mrf.mxu0
  %v1241 = vadd.f32 %v1198, %v1240
  %1242 = vmatmul.f32.gmra.mxu0 %v1215
  %v1243 = vpop.f32.mrf.mxu0
  %v1244 = vadd.f32 %v1203, %v1243
  %1245 = vdwg.mxu0
  %v1246 = vmax.f32 %v1235, 0.0
  %v1247 = vmax.f32 %v1238, 0.0
  %v1248 = vmax.f32 %v1241, 0.0
  %v1249 = vmax.f32 %v1244, 0.0
  %v1250 = vld [vmem:[%s39] sm:$0xff]
  %v1251 = vld [vmem:[%s39 + $0x8] sm:$0xff]
  %v1252 = vld [vmem:[%s39 + $0x10] sm:$0xff]
  %v1253 = vld [vmem:[%s39 + $0x18] sm:$0xff]
  %v1254 = vld [vmem:[%s41] sm:$0xff]
  %v1255 = vld [vmem:[%s41 + $0x8] sm:$0xff]
  %v1256 = vld [vmem:[%s41 + $0x10] sm:$0xff]
  %v1257 = vld [vmem:[%s41 + $0x18] sm:$0xff]
  %v1258 = vsel %vm591, %v1246, 0.0
  %1259 = vadd.xlane.f32.xlu0 %v1258
  %v1260 = vpop.xlane.xlu0 %1259
  %v1261 = vsel %vm591, %v1247, 0.0
  %1262 = vadd.xlane.f32.xlu0 %v1261
  %v1263 = vpop.xlane.xlu0 %1262
  %v1264 = vsel %vm591, %v1248, 0.0
  %1265 = vadd.xlane.f32.xlu0 %v1264
  %v1266 = vpop.xlane.xlu0 %1265
  %v1267 = vsel %vm591, %v1249, 0.0
  %1268 = vadd.xlane.f32.xlu0 %v1267
  %v1269 = vpop.xlane.xlu0 %1268
  %v1270 = vmul.f32 %v1260, %v970
  %v1271 = vmul.f32 %v1263, %v970
  %v1272 = vmul.f32 %v1266, %v970
  %v1273 = vmul.f32 %v1269, %v970
  %v1274 = vsub.f32 %v1246, %v1270
  %v1275 = vsub.f32 %v1247, %v1271
  %v1276 = vsub.f32 %v1248, %v1272
  %v1277 = vsub.f32 %v1249, %v1273
  %v1278 = vmul.f32 %v1274, %v1274
  %v1279 = vmul.f32 %v1275, %v1275
  %v1280 = vmul.f32 %v1276, %v1276
  %v1281 = vmul.f32 %v1277, %v1277
  %v1282 = vsel %vm591, %v1278, 0.0
  %1283 = vadd.xlane.f32.xlu0 %v1282
  %v1284 = vpop.xlane.xlu0 %1283
  %v1285 = vsel %vm591, %v1279, 0.0
  %1286 = vadd.xlane.f32.xlu0 %v1285
  %v1287 = vpop.xlane.xlu0 %1286
  %v1288 = vsel %vm591, %v1280, 0.0
  %1289 = vadd.xlane.f32.xlu0 %v1288
  %v1290 = vpop.xlane.xlu0 %1289
  %v1291 = vsel %vm591, %v1281, 0.0
  %1292 = vadd.xlane.f32.xlu0 %v1291
  %v1293 = vpop.xlane.xlu0 %1292
  %v1294 = vmul.f32 %v1284, %v970
  %v1295 = vmul.f32 %v1287, %v970
  %v1296 = vmul.f32 %v1290, %v970
  %v1297 = vmul.f32 %v1293, %v970
  %v1298 = vadd.f32 %v1294, 1e-05
  %v1299 = vadd.f32 %v1295, 1e-05
  %v1300 = vadd.f32 %v1296, 1e-05
  %v1301 = vadd.f32 %v1297, 1e-05
  %v1302 = vrsqrt.pop %v1298
  %v1303 = vmul.f32 %v1302, %v1298
  %v1304 = vmul.f32 %v1303, %v1302
  %v1305 = vmul.f32 0.5, %v1304
  %v1306 = vsub.f32 1.5, %v1305
  %v1307 = vmul.f32 %v1302, %v1306
  %vm1308 = vweird.f32 %v1298
  %vm1309 = vweird.f32 %v1302
  %vm1310 = vmor %vm1308, %vm1309
  %v1311 = vsel %vm1310, %v1302, %v1307
  %v1312 = vrsqrt.pop %v1299
  %v1313 = vmul.f32 %v1312, %v1299
  %v1314 = vmul.f32 %v1313, %v1312
  %v1315 = vmul.f32 0.5, %v1314
  %v1316 = vsub.f32 1.5, %v1315
  %v1317 = vmul.f32 %v1312, %v1316
  %vm1318 = vweird.f32 %v1299
  %vm1319 = vweird.f32 %v1312
  %vm1320 = vmor %vm1318, %vm1319
  %v1321 = vsel %vm1320, %v1312, %v1317
  %v1322 = vrsqrt.pop %v1300
  %v1323 = vmul.f32 %v1322, %v1300
  %v1324 = vmul.f32 %v1323, %v1322
  %v1325 = vmul.f32 0.5, %v1324
  %v1326 = vsub.f32 1.5, %v1325
  %v1327 = vmul.f32 %v1322, %v1326
  %vm1328 = vweird.f32 %v1300
  %vm1329 = vweird.f32 %v1322
  %vm1330 = vmor %vm1328, %vm1329
  %v1331 = vsel %vm1330, %v1322, %v1327
  %v1332 = vrsqrt.pop %v1301
  %v1333 = vmul.f32 %v1332, %v1301
  %v1334 = vmul.f32 %v1333, %v1332
  %v1335 = vmul.f32 0.5, %v1334
  %v1336 = vsub.f32 1.5, %v1335
  %v1337 = vmul.f32 %v1332, %v1336
  %vm1338 = vweird.f32 %v1301
  %vm1339 = vweird.f32 %v1332
  %vm1340 = vmor %vm1338, %vm1339
  %v1341 = vsel %vm1340, %v1332, %v1337
  %v1342 = vmul.f32 %v1274, %v1311
  %v1343 = vmul.f32 %v1275, %v1321
  %v1344 = vmul.f32 %v1276, %v1331
  %v1345 = vmul.f32 %v1277, %v1341
  %1347 = vset.pattern.permute.xlu0 0
  %1348 = vperm.xlu0 %1347, %v1250
  %v1349 = vpop.permute.xlu0 %1348
  %1352 = vset.pattern.permute.xlu0 0
  %1353 = vperm.xlu0 %1352, %v1251
  %v1354 = vpop.permute.xlu0 %1353
  %1357 = vset.pattern.permute.xlu0 0
  %1358 = vperm.xlu0 %1357, %v1252
  %v1359 = vpop.permute.xlu0 %1358
  %1362 = vset.pattern.permute.xlu0 0
  %1363 = vperm.xlu0 %1362, %v1253
  %v1364 = vpop.permute.xlu0 %1363
  %v1366 = vmul.f32 %v1342, %v1349
  %v1367 = vmul.f32 %v1343, %v1354
  %v1368 = vmul.f32 %v1344, %v1359
  %v1369 = vmul.f32 %v1345, %v1364
  %1371 = vset.pattern.permute.xlu0 0
  %1372 = vperm.xlu0 %1371, %v1254
  %v1373 = vpop.permute.xlu0 %1372
  %1376 = vset.pattern.permute.xlu0 0
  %1377 = vperm.xlu0 %1376, %v1255
  %v1378 = vpop.permute.xlu0 %1377
  %1381 = vset.pattern.permute.xlu0 0
  %1382 = vperm.xlu0 %1381, %v1256
  %v1383 = vpop.permute.xlu0 %1382
  %1386 = vset.pattern.permute.xlu0 0
  %1387 = vperm.xlu0 %1386, %v1257
  %v1388 = vpop.permute.xlu0 %1387
  %v1390 = vadd.f32 %v1366, %v1373
  %v1391 = vadd.f32 %v1367, %v1378
  %v1392 = vadd.f32 %v1368, %v1383
  %v1393 = vadd.f32 %v1369, %v1388
  %v1394 = vld [vmem:[%s43] sm:$0xff]
  %v1395 = vld [vmem:[%s43 + $0x8] sm:$0xff]
  %v1396 = vld [vmem:[%s43 + $0x10] sm:$0xff]
  %v1397 = vld [vmem:[%s43 + $0x18] sm:$0xff]
  %v1398 = vld [vmem:[%s43 + $0x20] sm:$0xff]
  %v1399 = vld [vmem:[%s43 + $0x28] sm:$0xff]
  %v1400 = vld [vmem:[%s43 + $0x30] sm:$0xff]
  %v1401 = vld [vmem:[%s43 + $0x38] sm:$0xff]
  %v1402 = vld [vmem:[%s45] sm:$0xff]
  %v1403 = vld [vmem:[%s45 + $0x8] sm:$0xff]
  %v1404 = vld [vmem:[%s45 + $0x10] sm:$0xff]
  %v1405 = vld [vmem:[%s45 + $0x18] sm:$0xff]
  %1410 = vrot.lane.b32.xlu0 %v1390, 3
  %v1411 = vpop.permute.xlu0 %1410
  %1412 = vrot.lane.b32.xlu0 %v1391, 3
  %v1413 = vpop.permute.xlu0 %1412
  %1414 = vrot.lane.b32.xlu0 %v1392, 3
  %v1415 = vpop.permute.xlu0 %1414
  %1416 = vrot.lane.b32.xlu0 %v1393, 3
  %v1417 = vpop.permute.xlu0 %1416
  %v1422 = vsel %vm164, 0.0, %v1411
  %v1423 = vsel %vm164, 0.0, %v1413
  %v1424 = vsel %vm164, 0.0, %v1415
  %v1425 = vsel %vm164, 0.0, %v1417
  %v1426 = vsel %vm1051, %v1422, 0.0
  %v1427 = vsel %vm1051, %v1423, 0.0
  %v1428 = vsel %vm1051, %v1424, 0.0
  %v1429 = vsel %vm1051, %v1425, 0.0
  %1434 = vrot.lane.b32.xlu0 %v1426, 127
  %v1435 = vpop.permute.xlu0 %1434
  %1436 = vrot.lane.b32.xlu0 %v1427, 127
  %v1437 = vpop.permute.xlu0 %1436
  %1438 = vrot.lane.b32.xlu0 %v1428, 127
  %v1439 = vpop.permute.xlu0 %1438
  %1440 = vrot.lane.b32.xlu0 %v1429, 127
  %v1441 = vpop.permute.xlu0 %1440
  %1446 = vrot.lane.b32.xlu0 %v1426, 126
  %v1447 = vpop.permute.xlu0 %1446
  %1448 = vrot.lane.b32.xlu0 %v1427, 126
  %v1449 = vpop.permute.xlu0 %1448
  %1450 = vrot.lane.b32.xlu0 %v1428, 126
  %v1451 = vpop.permute.xlu0 %1450
  %1452 = vrot.lane.b32.xlu0 %v1429, 126
  %v1453 = vpop.permute.xlu0 %1452
  %1458 = vrot.lane.b32.xlu0 %v1426, 125
  %v1459 = vpop.permute.xlu0 %1458
  %1460 = vrot.lane.b32.xlu0 %v1427, 125
  %v1461 = vpop.permute.xlu0 %1460
  %1462 = vrot.lane.b32.xlu0 %v1428, 125
  %v1463 = vpop.permute.xlu0 %1462
  %1464 = vrot.lane.b32.xlu0 %v1429, 125
  %v1465 = vpop.permute.xlu0 %1464
  %1470 = vrot.lane.b32.xlu0 %v1426, 124
  %v1471 = vpop.permute.xlu0 %1470
  %1472 = vrot.lane.b32.xlu0 %v1427, 124
  %v1473 = vpop.permute.xlu0 %1472
  %1474 = vrot.lane.b32.xlu0 %v1428, 124
  %v1475 = vpop.permute.xlu0 %1474
  %1476 = vrot.lane.b32.xlu0 %v1429, 124
  %v1477 = vpop.permute.xlu0 %1476
  %1482 = vrot.lane.b32.xlu0 %v1426, 123
  %v1483 = vpop.permute.xlu0 %1482
  %1484 = vrot.lane.b32.xlu0 %v1427, 123
  %v1485 = vpop.permute.xlu0 %1484
  %1486 = vrot.lane.b32.xlu0 %v1428, 123
  %v1487 = vpop.permute.xlu0 %1486
  %1488 = vrot.lane.b32.xlu0 %v1429, 123
  %v1489 = vpop.permute.xlu0 %1488
  %1494 = vrot.lane.b32.xlu0 %v1426, 122
  %v1495 = vpop.permute.xlu0 %1494
  %1496 = vrot.lane.b32.xlu0 %v1427, 122
  %v1497 = vpop.permute.xlu0 %1496
  %1498 = vrot.lane.b32.xlu0 %v1428, 122
  %v1499 = vpop.permute.xlu0 %1498
  %1500 = vrot.lane.b32.xlu0 %v1429, 122
  %v1501 = vpop.permute.xlu0 %1500
  %1506 = vrot.lane.b32.xlu0 %v1390, 127
  %v1507 = vpop.permute.xlu0 %1506
  %1508 = vrot.lane.b32.xlu0 %v1391, 127
  %v1509 = vpop.permute.xlu0 %1508
  %1510 = vrot.lane.b32.xlu0 %v1392, 127
  %v1511 = vpop.permute.xlu0 %1510
  %1512 = vrot.lane.b32.xlu0 %v1393, 127
  %v1513 = vpop.permute.xlu0 %1512
  %v1518 = vsel %vm164, 0.0, %v1507
  %v1519 = vsel %vm164, 0.0, %v1509
  %v1520 = vsel %vm164, 0.0, %v1511
  %v1521 = vsel %vm164, 0.0, %v1513
  %v1522 = vsel %vm1051, %v1518, 0.0
  %v1523 = vsel %vm1051, %v1519, 0.0
  %v1524 = vsel %vm1051, %v1520, 0.0
  %v1525 = vsel %vm1051, %v1521, 0.0
  %1530 = vrot.lane.b32.xlu0 %v1522, 127
  %v1531 = vpop.permute.xlu0 %1530
  %1532 = vrot.lane.b32.xlu0 %v1523, 127
  %v1533 = vpop.permute.xlu0 %1532
  %1534 = vrot.lane.b32.xlu0 %v1524, 127
  %v1535 = vpop.permute.xlu0 %1534
  %1536 = vrot.lane.b32.xlu0 %v1525, 127
  %v1537 = vpop.permute.xlu0 %1536
  %1538 = vrot.lane.b32.xlu0 %v1522, 126
  %v1539 = vpop.permute.xlu0 %1538
  %1540 = vrot.lane.b32.xlu0 %v1523, 126
  %v1541 = vpop.permute.xlu0 %1540
  %1542 = vrot.lane.b32.xlu0 %v1524, 126
  %v1543 = vpop.permute.xlu0 %1542
  %1544 = vrot.lane.b32.xlu0 %v1525, 126
  %v1545 = vpop.permute.xlu0 %1544
  %1546 = vrot.lane.b32.xlu0 %v1522, 125
  %v1547 = vpop.permute.xlu0 %1546
  %1548 = vrot.lane.b32.xlu0 %v1523, 125
  %v1549 = vpop.permute.xlu0 %1548
  %1550 = vrot.lane.b32.xlu0 %v1524, 125
  %v1551 = vpop.permute.xlu0 %1550
  %1552 = vrot.lane.b32.xlu0 %v1525, 125
  %v1553 = vpop.permute.xlu0 %1552
  %1554 = vrot.lane.b32.xlu0 %v1522, 124
  %v1555 = vpop.permute.xlu0 %1554
  %1556 = vrot.lane.b32.xlu0 %v1523, 124
  %v1557 = vpop.permute.xlu0 %1556
  %1558 = vrot.lane.b32.xlu0 %v1524, 124
  %v1559 = vpop.permute.xlu0 %1558
  %1560 = vrot.lane.b32.xlu0 %v1525, 124
  %v1561 = vpop.permute.xlu0 %1560
  %1562 = vrot.lane.b32.xlu0 %v1522, 123
  %v1563 = vpop.permute.xlu0 %1562
  %1564 = vrot.lane.b32.xlu0 %v1523, 123
  %v1565 = vpop.permute.xlu0 %1564
  %1566 = vrot.lane.b32.xlu0 %v1524, 123
  %v1567 = vpop.permute.xlu0 %1566
  %1568 = vrot.lane.b32.xlu0 %v1525, 123
  %v1569 = vpop.permute.xlu0 %1568
  %1570 = vrot.lane.b32.xlu0 %v1522, 122
  %v1571 = vpop.permute.xlu0 %1570
  %1572 = vrot.lane.b32.xlu0 %v1523, 122
  %v1573 = vpop.permute.xlu0 %1572
  %1574 = vrot.lane.b32.xlu0 %v1524, 122
  %v1575 = vpop.permute.xlu0 %1574
  %1576 = vrot.lane.b32.xlu0 %v1525, 122
  %v1577 = vpop.permute.xlu0 %1576
  %1578 = vrot.lane.b32.xlu0 %v1522, 4
  %v1579 = vpop.permute.xlu0 %1578
  %1580 = vrot.lane.b32.xlu0 %v1523, 4
  %v1581 = vpop.permute.xlu0 %1580
  %1582 = vrot.lane.b32.xlu0 %v1524, 4
  %v1583 = vpop.permute.xlu0 %1582
  %1584 = vrot.lane.b32.xlu0 %v1525, 4
  %v1585 = vpop.permute.xlu0 %1584
  %1586 = vrot.lane.b32.xlu0 %v1531, 4
  %v1587 = vpop.permute.xlu0 %1586
  %1588 = vrot.lane.b32.xlu0 %v1533, 4
  %v1589 = vpop.permute.xlu0 %1588
  %1590 = vrot.lane.b32.xlu0 %v1535, 4
  %v1591 = vpop.permute.xlu0 %1590
  %1592 = vrot.lane.b32.xlu0 %v1537, 4
  %v1593 = vpop.permute.xlu0 %1592
  %1594 = vrot.lane.b32.xlu0 %v1539, 4
  %v1595 = vpop.permute.xlu0 %1594
  %1596 = vrot.lane.b32.xlu0 %v1541, 4
  %v1597 = vpop.permute.xlu0 %1596
  %1598 = vrot.lane.b32.xlu0 %v1543, 4
  %v1599 = vpop.permute.xlu0 %1598
  %1600 = vrot.lane.b32.xlu0 %v1545, 4
  %v1601 = vpop.permute.xlu0 %1600
  %1602 = vrot.lane.b32.xlu0 %v1547, 4
  %v1603 = vpop.permute.xlu0 %1602
  %1604 = vrot.lane.b32.xlu0 %v1549, 4
  %v1605 = vpop.permute.xlu0 %1604
  %1606 = vrot.lane.b32.xlu0 %v1551, 4
  %v1607 = vpop.permute.xlu0 %1606
  %1608 = vrot.lane.b32.xlu0 %v1553, 4
  %v1609 = vpop.permute.xlu0 %1608
  %1610 = vrot.lane.b32.xlu0 %v1555, 4
  %v1611 = vpop.permute.xlu0 %1610
  %1612 = vrot.lane.b32.xlu0 %v1557, 4
  %v1613 = vpop.permute.xlu0 %1612
  %1614 = vrot.lane.b32.xlu0 %v1559, 4
  %v1615 = vpop.permute.xlu0 %1614
  %1616 = vrot.lane.b32.xlu0 %v1561, 4
  %v1617 = vpop.permute.xlu0 %1616
  %1618 = vrot.lane.b32.xlu0 %v1563, 4
  %v1619 = vpop.permute.xlu0 %1618
  %1620 = vrot.lane.b32.xlu0 %v1565, 4
  %v1621 = vpop.permute.xlu0 %1620
  %1622 = vrot.lane.b32.xlu0 %v1567, 4
  %v1623 = vpop.permute.xlu0 %1622
  %1624 = vrot.lane.b32.xlu0 %v1569, 4
  %v1625 = vpop.permute.xlu0 %1624
  %1626 = vrot.lane.b32.xlu0 %v1571, 4
  %v1627 = vpop.permute.xlu0 %1626
  %1628 = vrot.lane.b32.xlu0 %v1573, 4
  %v1629 = vpop.permute.xlu0 %1628
  %1630 = vrot.lane.b32.xlu0 %v1575, 4
  %v1631 = vpop.permute.xlu0 %1630
  %1632 = vrot.lane.b32.xlu0 %v1577, 4
  %v1633 = vpop.permute.xlu0 %1632
  %v1662 = vsel %vm1170, %v1426, %v1579
  %v1663 = vsel %vm1170, %v1427, %v1581
  %v1664 = vsel %vm1170, %v1428, %v1583
  %v1665 = vsel %vm1170, %v1429, %v1585
  %v1666 = vsel %vm1170, %v1435, %v1587
  %v1667 = vsel %vm1170, %v1437, %v1589
  %v1668 = vsel %vm1170, %v1439, %v1591
  %v1669 = vsel %vm1170, %v1441, %v1593
  %v1670 = vsel %vm1170, %v1447, %v1595
  %v1671 = vsel %vm1170, %v1449, %v1597
  %v1672 = vsel %vm1170, %v1451, %v1599
  %v1673 = vsel %vm1170, %v1453, %v1601
  %v1674 = vsel %vm1170, %v1459, %v1603
  %v1675 = vsel %vm1170, %v1461, %v1605
  %v1676 = vsel %vm1170, %v1463, %v1607
  %v1677 = vsel %vm1170, %v1465, %v1609
  %v1678 = vsel %vm1170, %v1471, %v1611
  %v1679 = vsel %vm1170, %v1473, %v1613
  %v1680 = vsel %vm1170, %v1475, %v1615
  %v1681 = vsel %vm1170, %v1477, %v1617
  %v1682 = vsel %vm1170, %v1483, %v1619
  %v1683 = vsel %vm1170, %v1485, %v1621
  %v1684 = vsel %vm1170, %v1487, %v1623
  %v1685 = vsel %vm1170, %v1489, %v1625
  %v1686 = vsel %vm1170, %v1495, %v1627
  %v1687 = vsel %vm1170, %v1497, %v1629
  %v1688 = vsel %vm1170, %v1499, %v1631
  %v1689 = vsel %vm1170, %v1501, %v1633
  %1691 = vset.pattern.permute.xlu0 0
  %1692 = vperm.xlu0 %1691, %v1402
  %v1693 = vpop.permute.xlu0 %1692
  %1696 = vset.pattern.permute.xlu0 0
  %1697 = vperm.xlu0 %1696, %v1403
  %v1698 = vpop.permute.xlu0 %1697
  %1701 = vset.pattern.permute.xlu0 0
  %1702 = vperm.xlu0 %1701, %v1404
  %v1703 = vpop.permute.xlu0 %1702
  %1706 = vset.pattern.permute.xlu0 0
  %1707 = vperm.xlu0 %1706, %v1405
  %v1708 = vpop.permute.xlu0 %1707
  %vm1710 = vcmask 785408
  %v1712 = vsel %vm1710, %v1395, 0
  %v1715 = vsel %vm1710, %v1397, 0
  %v1718 = vsel %vm1710, %v1399, 0
  %v1721 = vsel %vm1710, %v1401, 0
  %1723 = vmatpush.msra.mxu0 %v1677
  %1724 = vmatpush.msra.mxu0 %v1676
  %1725 = vmatpush.msra.mxu0 %v1675
  %1726 = vmatpush.msra.mxu0 %v1674
  %1727 = vmatpush.msra.mxu0 %v1673
  %1728 = vmatpush.msra.mxu0 %v1672
  %1729 = vmatpush.msra.mxu0 %v1671
  %1730 = vmatpush.msra.mxu0 %v1670
  %1731 = vmatpush.msra.mxu0 %v1669
  %1732 = vmatpush.msra.mxu0 %v1668
  %1733 = vmatpush.msra.mxu0 %v1667
  %1734 = vmatpush.msra.mxu0 %v1666
  %1735 = vmatpush.msra.mxu0 %v1665
  %1736 = vmatpush.msra.mxu0 %v1664
  %1737 = vmatpush.msra.mxu0 %v1663
  %1738 = vmatpush.msra.mxu0 %v1662
  %1739 = vmatmul.f32.gmra.mxu0 %v1394
  %v1740 = vpop.f32.mrf.mxu0
  %v1741 = vadd.f32 %v1693, %v1740
  %1742 = vmatmul.f32.gmra.mxu0 %v1396
  %v1743 = vpop.f32.mrf.mxu0
  %v1744 = vadd.f32 %v1698, %v1743
  %1745 = vmatmul.f32.gmra.mxu0 %v1398
  %v1746 = vpop.f32.mrf.mxu0
  %v1747 = vadd.f32 %v1703, %v1746
  %1748 = vmatmul.f32.gmra.mxu0 %v1400
  %v1749 = vpop.f32.mrf.mxu0
  %v1750 = vadd.f32 %v1708, %v1749
  %1751 = vdwg.mxu0
  %1752 = vmatpush.msra.mxu0 0.0
  %1753 = vmatpush.msra.mxu0 0.0
  %1754 = vmatpush.msra.mxu0 0.0
  %1755 = vmatpush.msra.mxu0 0.0
  %1756 = vmatpush.msra.mxu0 %v1689
  %1757 = vmatpush.msra.mxu0 %v1688
  %1758 = vmatpush.msra.mxu0 %v1687
  %1759 = vmatpush.msra.mxu0 %v1686
  %1760 = vmatpush.msra.mxu0 %v1685
  %1761 = vmatpush.msra.mxu0 %v1684
  %1762 = vmatpush.msra.mxu0 %v1683
  %1763 = vmatpush.msra.mxu0 %v1682
  %1764 = vmatpush.msra.mxu0 %v1681
  %1765 = vmatpush.msra.mxu0 %v1680
  %1766 = vmatpush.msra.mxu0 %v1679
  %1767 = vmatpush.msra.mxu0 %v1678
  %1768 = vmatmul.f32.gmra.mxu0 %v1712
  %v1769 = vpop.f32.mrf.mxu0
  %v1770 = vadd.f32 %v1741, %v1769
  %1771 = vmatmul.f32.gmra.mxu0 %v1715
  %v1772 = vpop.f32.mrf.mxu0
  %v1773 = vadd.f32 %v1744, %v1772
  %1774 = vmatmul.f32.gmra.mxu0 %v1718
  %v1775 = vpop.f32.mrf.mxu0
  %v1776 = vadd.f32 %v1747, %v1775
  %1777 = vmatmul.f32.gmra.mxu0 %v1721
  %v1778 = vpop.f32.mrf.mxu0
  %v1779 = vadd.f32 %v1750, %v1778
  %1780 = vdwg.mxu0
  %v1781 = vmax.f32 %v1770, 0.0
  %v1782 = vmax.f32 %v1773, 0.0
  %v1783 = vmax.f32 %v1776, 0.0
  %v1784 = vmax.f32 %v1779, 0.0
  %v1786 = vsel %vm591, %v1781, 0
  %v1789 = vsel %vm591, %v1782, 0
  %v1792 = vsel %vm591, %v1783, 0
  %v1795 = vsel %vm591, %v1784, 0
  %1797 = vmatpush.msra.mxu0 0.0
  %1798 = vmatpush.msra.mxu0 0.0
  %1799 = vmatpush.msra.mxu0 0.0
  %1800 = vmatpush.msra.mxu0 0.0
  %1801 = vmatpush.msra.mxu0 0.0
  %1802 = vmatpush.msra.mxu0 0.0
  %1803 = vmatpush.msra.mxu0 0.0
  %1804 = vmatpush.msra.mxu0 0.0
  %1805 = vmatpush.msra.mxu0 0.0
  %1806 = vmatpush.msra.mxu0 0.0
  %1807 = vmatpush.msra.mxu0 0.0
  %1808 = vmatpush.msra.mxu0 0.0
  %1809 = vmatpush.msra.mxu0 0.0
  %1810 = vmatpush.msra.mxu0 0.0
  %1811 = vmatpush.msra.mxu0 0.0
  %1812 = vmatpush.msra.mxu0 %v422
  %1813 = vmatmul.f32.gmra.mxu0 %v1786
  %v1814 = vpop.f32.mrf.mxu0
  %v1815 = vadd.f32 0.0, %v1814
  %1816 = vmatmul.f32.gmra.mxu0 %v1789
  %v1817 = vpop.f32.mrf.mxu0
  %v1818 = vadd.f32 0.0, %v1817
  %1819 = vmatmul.f32.gmra.mxu0 %v1792
  %v1820 = vpop.f32.mrf.mxu0
  %v1821 = vadd.f32 0.0, %v1820
  %1822 = vmatmul.f32.gmra.mxu0 %v1795
  %v1823 = vpop.f32.mrf.mxu0
  %v1824 = vadd.f32 0.0, %v1823
  %1825 = vdwg.mxu0
  %1826 = vmatpush.msra.mxu0 0.0
  %1827 = vmatpush.msra.mxu0 0.0
  %1828 = vmatpush.msra.mxu0 0.0
  %1829 = vmatpush.msra.mxu0 0.0
  %1830 = vmatpush.msra.mxu0 0.0
  %1831 = vmatpush.msra.mxu0 0.0
  %1832 = vmatpush.msra.mxu0 0.0
  %1833 = vmatpush.msra.mxu0 0.0
  %1834 = vmatpush.msra.mxu0 0.0
  %1835 = vmatpush.msra.mxu0 0.0
  %1836 = vmatpush.msra.mxu0 0.0
  %1837 = vmatpush.msra.mxu0 0.0
  %1838 = vmatpush.msra.mxu0 0.0
  %1839 = vmatpush.msra.mxu0 0.0
  %1840 = vmatpush.msra.mxu0 0.0
  %1841 = vmatpush.msra.mxu0 %v431
  %1842 = vmatmul.f32.gmra.mxu0 %v1786
  %v1843 = vpop.f32.mrf.mxu0
  %v1844 = vadd.f32 0.0, %v1843
  %1845 = vmatmul.f32.gmra.mxu0 %v1789
  %v1846 = vpop.f32.mrf.mxu0
  %v1847 = vadd.f32 0.0, %v1846
  %1848 = vmatmul.f32.gmra.mxu0 %v1792
  %v1849 = vpop.f32.mrf.mxu0
  %v1850 = vadd.f32 0.0, %v1849
  %1851 = vmatmul.f32.gmra.mxu0 %v1795
  %v1852 = vpop.f32.mrf.mxu0
  %v1853 = vadd.f32 0.0, %v1852
  %1854 = vdwg.mxu0
  %v1855 = vmax.f32 %v1815, %v1844
  %v1856 = vmax.f32 %v1818, %v1847
  %v1857 = vmax.f32 %v1821, %v1850
  %v1858 = vmax.f32 %v1824, %v1853
  %v1859 = vld [vmem:[%s47] sm:$0xff]
  %v1860 = vld [vmem:[%s47 + $0x8] sm:$0xff]
  %v1861 = vld [vmem:[%s47 + $0x10] sm:$0xff]
  %v1862 = vld [vmem:[%s47 + $0x18] sm:$0xff]
  %v1863 = vld [vmem:[%s49] sm:$0xff]
  %v1864 = vld [vmem:[%s49 + $0x8] sm:$0xff]
  %v1865 = vld [vmem:[%s49 + $0x10] sm:$0xff]
  %v1866 = vld [vmem:[%s49 + $0x18] sm:$0xff]
  %v1867 = vsel %vm1170, %v1855, 0.0
  %1868 = vadd.xlane.f32.xlu0 %v1867
  %v1869 = vpop.xlane.xlu0 %1868
  %v1870 = vsel %vm1170, %v1856, 0.0
  %1871 = vadd.xlane.f32.xlu0 %v1870
  %v1872 = vpop.xlane.xlu0 %1871
  %v1873 = vsel %vm1170, %v1857, 0.0
  %1874 = vadd.xlane.f32.xlu0 %v1873
  %v1875 = vpop.xlane.xlu0 %1874
  %v1876 = vsel %vm1170, %v1858, 0.0
  %1877 = vadd.xlane.f32.xlu0 %v1876
  %v1878 = vpop.xlane.xlu0 %1877
  %v1879 = vrcp.pop 4.0
  %v1880 = vmul.f32 4.0, %v1879
  %v1881 = vsub.f32 1.0, %v1880
  %v1882 = vmul.f32 %v1879, %v1881
  %v1883 = vadd.f32 %v1879, %v1882
  %vm1884 = vweird.f32 %v1879
  %v1885 = vsel %vm1884, %v1879, %v1883
  %v1886 = vmul.f32 %v1869, %v1885
  %v1887 = vmul.f32 %v1872, %v1885
  %v1888 = vmul.f32 %v1875, %v1885
  %v1889 = vmul.f32 %v1878, %v1885
  %v1890 = vsub.f32 %v1855, %v1886
  %v1891 = vsub.f32 %v1856, %v1887
  %v1892 = vsub.f32 %v1857, %v1888
  %v1893 = vsub.f32 %v1858, %v1889
  %v1894 = vmul.f32 %v1890, %v1890
  %v1895 = vmul.f32 %v1891, %v1891
  %v1896 = vmul.f32 %v1892, %v1892
  %v1897 = vmul.f32 %v1893, %v1893
  %v1898 = vsel %vm1170, %v1894, 0.0
  %1899 = vadd.xlane.f32.xlu0 %v1898
  %v1900 = vpop.xlane.xlu0 %1899
  %v1901 = vsel %vm1170, %v1895, 0.0
  %1902 = vadd.xlane.f32.xlu0 %v1901
  %v1903 = vpop.xlane.xlu0 %1902
  %v1904 = vsel %vm1170, %v1896, 0.0
  %1905 = vadd.xlane.f32.xlu0 %v1904
  %v1906 = vpop.xlane.xlu0 %1905
  %v1907 = vsel %vm1170, %v1897, 0.0
  %1908 = vadd.xlane.f32.xlu0 %v1907
  %v1909 = vpop.xlane.xlu0 %1908
  %v1910 = vmul.f32 %v1900, %v1885
  %v1911 = vmul.f32 %v1903, %v1885
  %v1912 = vmul.f32 %v1906, %v1885
  %v1913 = vmul.f32 %v1909, %v1885
  %v1914 = vadd.f32 %v1910, 1e-05
  %v1915 = vadd.f32 %v1911, 1e-05
  %v1916 = vadd.f32 %v1912, 1e-05
  %v1917 = vadd.f32 %v1913, 1e-05
  %v1918 = vrsqrt.pop %v1914
  %v1919 = vmul.f32 %v1918, %v1914
  %v1920 = vmul.f32 %v1919, %v1918
  %v1921 = vmul.f32 0.5, %v1920
  %v1922 = vsub.f32 1.5, %v1921
  %v1923 = vmul.f32 %v1918, %v1922
  %vm1924 = vweird.f32 %v1914
  %vm1925 = vweird.f32 %v1918
  %vm1926 = vmor %vm1924, %vm1925
  %v1927 = vsel %vm1926, %v1918, %v1923
  %v1928 = vrsqrt.pop %v1915
  %v1929 = vmul.f32 %v1928, %v1915
  %v1930 = vmul.f32 %v1929, %v1928
  %v1931 = vmul.f32 0.5, %v1930
  %v1932 = vsub.f32 1.5, %v1931
  %v1933 = vmul.f32 %v1928, %v1932
  %vm1934 = vweird.f32 %v1915
  %vm1935 = vweird.f32 %v1928
  %vm1936 = vmor %vm1934, %vm1935
  %v1937 = vsel %vm1936, %v1928, %v1933
  %v1938 = vrsqrt.pop %v1916
  %v1939 = vmul.f32 %v1938, %v1916
  %v1940 = vmul.f32 %v1939, %v1938
  %v1941 = vmul.f32 0.5, %v1940
  %v1942 = vsub.f32 1.5, %v1941
  %v1943 = vmul.f32 %v1938, %v1942
  %vm1944 = vweird.f32 %v1916
  %vm1945 = vweird.f32 %v1938
  %vm1946 = vmor %vm1944, %vm1945
  %v1947 = vsel %vm1946, %v1938, %v1943
  %v1948 = vrsqrt.pop %v1917
  %v1949 = vmul.f32 %v1948, %v1917
  %v1950 = vmul.f32 %v1949, %v1948
  %v1951 = vmul.f32 0.5, %v1950
  %v1952 = vsub.f32 1.5, %v1951
  %v1953 = vmul.f32 %v1948, %v1952
  %vm1954 = vweird.f32 %v1917
  %vm1955 = vweird.f32 %v1948
  %vm1956 = vmor %vm1954, %vm1955
  %v1957 = vsel %vm1956, %v1948, %v1953
  %v1958 = vmul.f32 %v1890, %v1927
  %v1959 = vmul.f32 %v1891, %v1937
  %v1960 = vmul.f32 %v1892, %v1947
  %v1961 = vmul.f32 %v1893, %v1957
  %1963 = vset.pattern.permute.xlu0 0
  %1964 = vperm.xlu0 %1963, %v1859
  %v1965 = vpop.permute.xlu0 %1964
  %1968 = vset.pattern.permute.xlu0 0
  %1969 = vperm.xlu0 %1968, %v1860
  %v1970 = vpop.permute.xlu0 %1969
  %1973 = vset.pattern.permute.xlu0 0
  %1974 = vperm.xlu0 %1973, %v1861
  %v1975 = vpop.permute.xlu0 %1974
  %1978 = vset.pattern.permute.xlu0 0
  %1979 = vperm.xlu0 %1978, %v1862
  %v1980 = vpop.permute.xlu0 %1979
  %v1982 = vmul.f32 %v1958, %v1965
  %v1983 = vmul.f32 %v1959, %v1970
  %v1984 = vmul.f32 %v1960, %v1975
  %v1985 = vmul.f32 %v1961, %v1980
  %1987 = vset.pattern.permute.xlu0 0
  %1988 = vperm.xlu0 %1987, %v1863
  %v1989 = vpop.permute.xlu0 %1988
  %1992 = vset.pattern.permute.xlu0 0
  %1993 = vperm.xlu0 %1992, %v1864
  %v1994 = vpop.permute.xlu0 %1993
  %1997 = vset.pattern.permute.xlu0 0
  %1998 = vperm.xlu0 %1997, %v1865
  %v1999 = vpop.permute.xlu0 %1998
  %2002 = vset.pattern.permute.xlu0 0
  %2003 = vperm.xlu0 %2002, %v1866
  %v2004 = vpop.permute.xlu0 %2003
  %v2006 = vadd.f32 %v1982, %v1989
  %v2007 = vadd.f32 %v1983, %v1994
  %v2008 = vadd.f32 %v1984, %v1999
  %v2009 = vadd.f32 %v1985, %v2004
  %v2010 = vld [vmem:[%s51] sm:$0xff]
  %v2011 = vld [vmem:[%s51 + $0x8] sm:$0xff]
  %v2012 = vld [vmem:[%s51 + $0x10] sm:$0xff]
  %v2013 = vld [vmem:[%s51 + $0x18] sm:$0xff]
  %v2014 = vld [vmem:[%s53] sm:$0xff]
  %v2015 = vld [vmem:[%s53 + $0x8] sm:$0xff]
  %v2016 = vld [vmem:[%s53 + $0x10] sm:$0xff]
  %v2017 = vld [vmem:[%s53 + $0x18] sm:$0xff]
  %2019 = vset.pattern.permute.xlu0 0
  %2020 = vperm.xlu0 %2019, %v2014
  %v2021 = vpop.permute.xlu0 %2020
  %2024 = vset.pattern.permute.xlu0 0
  %2025 = vperm.xlu0 %2024, %v2015
  %v2026 = vpop.permute.xlu0 %2025
  %2029 = vset.pattern.permute.xlu0 0
  %2030 = vperm.xlu0 %2029, %v2016
  %v2031 = vpop.permute.xlu0 %2030
  %2034 = vset.pattern.permute.xlu0 0
  %2035 = vperm.xlu0 %2034, %v2017
  %v2036 = vpop.permute.xlu0 %2035
  %v2039 = vsel %vm266, %v2010, 0
  %v2042 = vsel %vm266, %v2011, 0
  %v2045 = vsel %vm266, %v2012, 0
  %v2048 = vsel %vm266, %v2013, 0
  %2050 = vmatpush.msra.mxu0 0.0
  %2051 = vmatpush.msra.mxu0 0.0
  %2052 = vmatpush.msra.mxu0 0.0
  %2053 = vmatpush.msra.mxu0 0.0
  %2054 = vmatpush.msra.mxu0 0.0
  %2055 = vmatpush.msra.mxu0 0.0
  %2056 = vmatpush.msra.mxu0 0.0
  %2057 = vmatpush.msra.mxu0 0.0
  %2058 = vmatpush.msra.mxu0 0.0
  %2059 = vmatpush.msra.mxu0 0.0
  %2060 = vmatpush.msra.mxu0 0.0
  %2061 = vmatpush.msra.mxu0 0.0
  %2062 = vmatpush.msra.mxu0 %v2009
  %2063 = vmatpush.msra.mxu0 %v2008
  %2064 = vmatpush.msra.mxu0 %v2007
  %2065 = vmatpush.msra.mxu0 %v2006
  %2066 = vmatmul.f32.gmra.mxu0 %v2039
  %v2067 = vpop.f32.mrf.mxu0
  %v2068 = vadd.f32 %v2021, %v2067
  %2069 = vmatmul.f32.gmra.mxu0 %v2042
  %v2070 = vpop.f32.mrf.mxu0
  %v2071 = vadd.f32 %v2026, %v2070
  %2072 = vmatmul.f32.gmra.mxu0 %v2045
  %v2073 = vpop.f32.mrf.mxu0
  %v2074 = vadd.f32 %v2031, %v2073
  %2075 = vmatmul.f32.gmra.mxu0 %v2048
  %v2076 = vpop.f32.mrf.mxu0
  %v2077 = vadd.f32 %v2036, %v2076
  %2078 = vdwg.mxu0
  %v2079 = vmax.f32 %v2068, 0.0
  %v2080 = vmax.f32 %v2071, 0.0
  %v2081 = vmax.f32 %v2074, 0.0
  %v2082 = vmax.f32 %v2077, 0.0
  %2083 = vst.msk [vmem:[%s77] sm:$0xff] %vm1170, %v2079
  %2084 = vst.msk [vmem:[%s77 + $0x8] sm:$0xff] %vm1170, %v2080
  %2085 = vst.msk [vmem:[%s77 + $0x10] sm:$0xff] %vm1170, %v2081
  %2086 = vst.msk [vmem:[%s77 + $0x18] sm:$0xff] %vm1170, %v2082
  %v2087 = vld [vmem:[%s55] sm:$0xff]
  %v2088 = vld [vmem:[%s55 + $0x8] sm:$0xff]
  %v2089 = vld [vmem:[%s55 + $0x10] sm:$0xff]
  %v2090 = vld [vmem:[%s55 + $0x18] sm:$0xff]
  %v2091 = vld [vmem:[%s57] sm:$0xff]
  %v2092 = vld [vmem:[%s57 + $0x8] sm:$0xff]
  %v2093 = vld [vmem:[%s57 + $0x10] sm:$0xff]
  %v2094 = vld [vmem:[%s57 + $0x18] sm:$0xff]
  %2096 = vset.pattern.permute.xlu0 0
  %2097 = vperm.xlu0 %2096, %v2091
  %v2098 = vpop.permute.xlu0 %2097
  %2101 = vset.pattern.permute.xlu0 0
  %2102 = vperm.xlu0 %2101, %v2092
  %v2103 = vpop.permute.xlu0 %2102
  %2106 = vset.pattern.permute.xlu0 0
  %2107 = vperm.xlu0 %2106, %v2093
  %v2108 = vpop.permute.xlu0 %2107
  %2111 = vset.pattern.permute.xlu0 0
  %2112 = vperm.xlu0 %2111, %v2094
  %v2113 = vpop.permute.xlu0 %2112
  %v2116 = vsel %vm266, %v2087, 0
  %v2119 = vsel %vm266, %v2088, 0
  %v2122 = vsel %vm266, %v2089, 0
  %v2125 = vsel %vm266, %v2090, 0
  %2127 = vmatpush.msra.mxu0 0.0
  %2128 = vmatpush.msra.mxu0 0.0
  %2129 = vmatpush.msra.mxu0 0.0
  %2130 = vmatpush.msra.mxu0 0.0
  %2131 = vmatpush.msra.mxu0 0.0
  %2132 = vmatpush.msra.mxu0 0.0
  %2133 = vmatpush.msra.mxu0 0.0
  %2134 = vmatpush.msra.mxu0 0.0
  %2135 = vmatpush.msra.mxu0 0.0
  %2136 = vmatpush.msra.mxu0 0.0
  %2137 = vmatpush.msra.mxu0 0.0
  %2138 = vmatpush.msra.mxu0 0.0
  %2139 = vmatpush.msra.mxu0 %v2082
  %2140 = vmatpush.msra.mxu0 %v2081
  %2141 = vmatpush.msra.mxu0 %v2080
  %2142 = vmatpush.msra.mxu0 %v2079
  %2143 = vmatmul.f32.gmra.mxu0 %v2116
  %v2144 = vpop.f32.mrf.mxu0
  %v2145 = vadd.f32 %v2098, %v2144
  %2146 = vmatmul.f32.gmra.mxu0 %v2119
  %v2147 = vpop.f32.mrf.mxu0
  %v2148 = vadd.f32 %v2103, %v2147
  %2149 = vmatmul.f32.gmra.mxu0 %v2122
  %v2150 = vpop.f32.mrf.mxu0
  %v2151 = vadd.f32 %v2108, %v2150
  %2152 = vmatmul.f32.gmra.mxu0 %v2125
  %v2153 = vpop.f32.mrf.mxu0
  %v2154 = vadd.f32 %v2113, %v2153
  %2155 = vdwg.mxu0
  %v2156 = vmax.f32 %v2145, 0.0
  %v2157 = vmax.f32 %v2148, 0.0
  %v2158 = vmax.f32 %v2151, 0.0
  %v2159 = vmax.f32 %v2154, 0.0
  %v2160 = vmul.u32 %v411, 2
  %vm2161 = vcmp.eq.s32.totalorder %v416, %v2160
  %v2162 = vadd.s32 %v2160, 1
  %vm2163 = vcmp.eq.s32.totalorder %v416, %v2162
  %vm2164 = vmor %vm2161, %vm2163
  %v2165 = vsel %vm2164, 1.0, 0.0
  %v2167 = vsel %vm1170, %v2156, 0
  %v2170 = vsel %vm1170, %v2157, 0
  %v2173 = vsel %vm1170, %v2158, 0
  %v2176 = vsel %vm1170, %v2159, 0
  %vm2178 = vcmask 1043456
  %v2180 = vsel %vm2178, %v2165, 0
  %2182 = vmatpush.msra.mxu0 0.0
  %2183 = vmatpush.msra.mxu0 0.0
  %2184 = vmatpush.msra.mxu0 0.0
  %2185 = vmatpush.msra.mxu0 0.0
  %2186 = vmatpush.msra.mxu0 0.0
  %2187 = vmatpush.msra.mxu0 0.0
  %2188 = vmatpush.msra.mxu0 0.0
  %2189 = vmatpush.msra.mxu0 0.0
  %2190 = vmatpush.msra.mxu0 0.0
  %2191 = vmatpush.msra.mxu0 0.0
  %2192 = vmatpush.msra.mxu0 0.0
  %2193 = vmatpush.msra.mxu0 0.0
  %2194 = vmatpush.msra.mxu0 0.0
  %2195 = vmatpush.msra.mxu0 0.0
  %2196 = vmatpush.msra.mxu0 0.0
  %2197 = vmatpush.msra.mxu0 %v2180
  %2198 = vmatmul.f32.gmra.mxu0 %v2167
  %v2199 = vpop.f32.mrf.mxu0
  %v2200 = vadd.f32 0.0, %v2199
  %2201 = vmatmul.f32.gmra.mxu0 %v2170
  %v2202 = vpop.f32.mrf.mxu0
  %v2203 = vadd.f32 0.0, %v2202
  %2204 = vmatmul.f32.gmra.mxu0 %v2173
  %v2205 = vpop.f32.mrf.mxu0
  %v2206 = vadd.f32 0.0, %v2205
  %2207 = vmatmul.f32.gmra.mxu0 %v2176
  %v2208 = vpop.f32.mrf.mxu0
  %v2209 = vadd.f32 0.0, %v2208
  %2210 = vdwg.mxu0
  %v2211 = vld [vmem:[%s59] sm:$0xff]
  %v2212 = vld [vmem:[%s59 + $0x8] sm:$0xff]
  %v2213 = vld [vmem:[%s59 + $0x10] sm:$0xff]
  %v2214 = vld [vmem:[%s59 + $0x18] sm:$0xff]
  %v2215 = vld [vmem:[%s61] sm:$0xff]
  %v2216 = vld [vmem:[%s61 + $0x8] sm:$0xff]
  %2221 = vrot.lane.b32.xlu0 %v2200, 3
  %v2222 = vpop.permute.xlu0 %2221
  %2223 = vrot.lane.b32.xlu0 %v2203, 3
  %v2224 = vpop.permute.xlu0 %2223
  %2225 = vrot.lane.b32.xlu0 %v2206, 3
  %v2226 = vpop.permute.xlu0 %2225
  %2227 = vrot.lane.b32.xlu0 %v2209, 3
  %v2228 = vpop.permute.xlu0 %2227
  %v2233 = vsel %vm164, 0.0, %v2222
  %v2234 = vsel %vm164, 0.0, %v2224
  %v2235 = vsel %vm164, 0.0, %v2226
  %v2236 = vsel %vm164, 0.0, %v2228
  %v2237 = vsel %vm1051, %v2233, 0.0
  %v2238 = vsel %vm1051, %v2234, 0.0
  %v2239 = vsel %vm1051, %v2235, 0.0
  %v2240 = vsel %vm1051, %v2236, 0.0
  %2245 = vrot.lane.b32.xlu0 %v2237, 127
  %v2246 = vpop.permute.xlu0 %2245
  %2247 = vrot.lane.b32.xlu0 %v2238, 127
  %v2248 = vpop.permute.xlu0 %2247
  %2249 = vrot.lane.b32.xlu0 %v2239, 127
  %v2250 = vpop.permute.xlu0 %2249
  %2251 = vrot.lane.b32.xlu0 %v2240, 127
  %v2252 = vpop.permute.xlu0 %2251
  %2257 = vrot.lane.b32.xlu0 %v2237, 126
  %v2258 = vpop.permute.xlu0 %2257
  %2259 = vrot.lane.b32.xlu0 %v2238, 126
  %v2260 = vpop.permute.xlu0 %2259
  %2261 = vrot.lane.b32.xlu0 %v2239, 126
  %v2262 = vpop.permute.xlu0 %2261
  %2263 = vrot.lane.b32.xlu0 %v2240, 126
  %v2264 = vpop.permute.xlu0 %2263
  %2269 = vrot.lane.b32.xlu0 %v2237, 125
  %v2270 = vpop.permute.xlu0 %2269
  %2271 = vrot.lane.b32.xlu0 %v2238, 125
  %v2272 = vpop.permute.xlu0 %2271
  %2273 = vrot.lane.b32.xlu0 %v2239, 125
  %v2274 = vpop.permute.xlu0 %2273
  %2275 = vrot.lane.b32.xlu0 %v2240, 125
  %v2276 = vpop.permute.xlu0 %2275
  %2281 = vrot.lane.b32.xlu0 %v2237, 124
  %v2282 = vpop.permute.xlu0 %2281
  %2283 = vrot.lane.b32.xlu0 %v2238, 124
  %v2284 = vpop.permute.xlu0 %2283
  %2285 = vrot.lane.b32.xlu0 %v2239, 124
  %v2286 = vpop.permute.xlu0 %2285
  %2287 = vrot.lane.b32.xlu0 %v2240, 124
  %v2288 = vpop.permute.xlu0 %2287
  %2293 = vrot.lane.b32.xlu0 %v2237, 123
  %v2294 = vpop.permute.xlu0 %2293
  %2295 = vrot.lane.b32.xlu0 %v2238, 123
  %v2296 = vpop.permute.xlu0 %2295
  %2297 = vrot.lane.b32.xlu0 %v2239, 123
  %v2298 = vpop.permute.xlu0 %2297
  %2299 = vrot.lane.b32.xlu0 %v2240, 123
  %v2300 = vpop.permute.xlu0 %2299
  %2305 = vrot.lane.b32.xlu0 %v2237, 122
  %v2306 = vpop.permute.xlu0 %2305
  %2307 = vrot.lane.b32.xlu0 %v2238, 122
  %v2308 = vpop.permute.xlu0 %2307
  %2309 = vrot.lane.b32.xlu0 %v2239, 122
  %v2310 = vpop.permute.xlu0 %2309
  %2311 = vrot.lane.b32.xlu0 %v2240, 122
  %v2312 = vpop.permute.xlu0 %2311
  %2317 = vrot.lane.b32.xlu0 %v2200, 127
  %v2318 = vpop.permute.xlu0 %2317
  %2319 = vrot.lane.b32.xlu0 %v2203, 127
  %v2320 = vpop.permute.xlu0 %2319
  %2321 = vrot.lane.b32.xlu0 %v2206, 127
  %v2322 = vpop.permute.xlu0 %2321
  %2323 = vrot.lane.b32.xlu0 %v2209, 127
  %v2324 = vpop.permute.xlu0 %2323
  %v2329 = vsel %vm164, 0.0, %v2318
  %v2330 = vsel %vm164, 0.0, %v2320
  %v2331 = vsel %vm164, 0.0, %v2322
  %v2332 = vsel %vm164, 0.0, %v2324
  %v2333 = vsel %vm1051, %v2329, 0.0
  %v2334 = vsel %vm1051, %v2330, 0.0
  %v2335 = vsel %vm1051, %v2331, 0.0
  %v2336 = vsel %vm1051, %v2332, 0.0
  %2341 = vrot.lane.b32.xlu0 %v2333, 127
  %v2342 = vpop.permute.xlu0 %2341
  %2343 = vrot.lane.b32.xlu0 %v2334, 127
  %v2344 = vpop.permute.xlu0 %2343
  %2345 = vrot.lane.b32.xlu0 %v2335, 127
  %v2346 = vpop.permute.xlu0 %2345
  %2347 = vrot.lane.b32.xlu0 %v2336, 127
  %v2348 = vpop.permute.xlu0 %2347
  %2349 = vrot.lane.b32.xlu0 %v2333, 126
  %v2350 = vpop.permute.xlu0 %2349
  %2351 = vrot.lane.b32.xlu0 %v2334, 126
  %v2352 = vpop.permute.xlu0 %2351
  %2353 = vrot.lane.b32.xlu0 %v2335, 126
  %v2354 = vpop.permute.xlu0 %2353
  %2355 = vrot.lane.b32.xlu0 %v2336, 126
  %v2356 = vpop.permute.xlu0 %2355
  %2357 = vrot.lane.b32.xlu0 %v2333, 125
  %v2358 = vpop.permute.xlu0 %2357
  %2359 = vrot.lane.b32.xlu0 %v2334, 125
  %v2360 = vpop.permute.xlu0 %2359
  %2361 = vrot.lane.b32.xlu0 %v2335, 125
  %v2362 = vpop.permute.xlu0 %2361
  %2363 = vrot.lane.b32.xlu0 %v2336, 125
  %v2364 = vpop.permute.xlu0 %2363
  %2365 = vrot.lane.b32.xlu0 %v2333, 124
  %v2366 = vpop.permute.xlu0 %2365
  %2367 = vrot.lane.b32.xlu0 %v2334, 124
  %v2368 = vpop.permute.xlu0 %2367
  %2369 = vrot.lane.b32.xlu0 %v2335, 124
  %v2370 = vpop.permute.xlu0 %2369
  %2371 = vrot.lane.b32.xlu0 %v2336, 124
  %v2372 = vpop.permute.xlu0 %2371
  %2373 = vrot.lane.b32.xlu0 %v2333, 123
  %v2374 = vpop.permute.xlu0 %2373
  %2375 = vrot.lane.b32.xlu0 %v2334, 123
  %v2376 = vpop.permute.xlu0 %2375
  %2377 = vrot.lane.b32.xlu0 %v2335, 123
  %v2378 = vpop.permute.xlu0 %2377
  %2379 = vrot.lane.b32.xlu0 %v2336, 123
  %v2380 = vpop.permute.xlu0 %2379
  %2381 = vrot.lane.b32.xlu0 %v2333, 122
  %v2382 = vpop.permute.xlu0 %2381
  %2383 = vrot.lane.b32.xlu0 %v2334, 122
  %v2384 = vpop.permute.xlu0 %2383
  %2385 = vrot.lane.b32.xlu0 %v2335, 122
  %v2386 = vpop.permute.xlu0 %2385
  %2387 = vrot.lane.b32.xlu0 %v2336, 122
  %v2388 = vpop.permute.xlu0 %2387
  %2389 = vrot.lane.b32.xlu0 %v2333, 4
  %v2390 = vpop.permute.xlu0 %2389
  %2391 = vrot.lane.b32.xlu0 %v2334, 4
  %v2392 = vpop.permute.xlu0 %2391
  %2393 = vrot.lane.b32.xlu0 %v2335, 4
  %v2394 = vpop.permute.xlu0 %2393
  %2395 = vrot.lane.b32.xlu0 %v2336, 4
  %v2396 = vpop.permute.xlu0 %2395
  %2397 = vrot.lane.b32.xlu0 %v2342, 4
  %v2398 = vpop.permute.xlu0 %2397
  %2399 = vrot.lane.b32.xlu0 %v2344, 4
  %v2400 = vpop.permute.xlu0 %2399
  %2401 = vrot.lane.b32.xlu0 %v2346, 4
  %v2402 = vpop.permute.xlu0 %2401
  %2403 = vrot.lane.b32.xlu0 %v2348, 4
  %v2404 = vpop.permute.xlu0 %2403
  %2405 = vrot.lane.b32.xlu0 %v2350, 4
  %v2406 = vpop.permute.xlu0 %2405
  %2407 = vrot.lane.b32.xlu0 %v2352, 4
  %v2408 = vpop.permute.xlu0 %2407
  %2409 = vrot.lane.b32.xlu0 %v2354, 4
  %v2410 = vpop.permute.xlu0 %2409
  %2411 = vrot.lane.b32.xlu0 %v2356, 4
  %v2412 = vpop.permute.xlu0 %2411
  %2413 = vrot.lane.b32.xlu0 %v2358, 4
  %v2414 = vpop.permute.xlu0 %2413
  %2415 = vrot.lane.b32.xlu0 %v2360, 4
  %v2416 = vpop.permute.xlu0 %2415
  %2417 = vrot.lane.b32.xlu0 %v2362, 4
  %v2418 = vpop.permute.xlu0 %2417
  %2419 = vrot.lane.b32.xlu0 %v2364, 4
  %v2420 = vpop.permute.xlu0 %2419
  %2421 = vrot.lane.b32.xlu0 %v2366, 4
  %v2422 = vpop.permute.xlu0 %2421
  %2423 = vrot.lane.b32.xlu0 %v2368, 4
  %v2424 = vpop.permute.xlu0 %2423
  %2425 = vrot.lane.b32.xlu0 %v2370, 4
  %v2426 = vpop.permute.xlu0 %2425
  %2427 = vrot.lane.b32.xlu0 %v2372, 4
  %v2428 = vpop.permute.xlu0 %2427
  %2429 = vrot.lane.b32.xlu0 %v2374, 4
  %v2430 = vpop.permute.xlu0 %2429
  %2431 = vrot.lane.b32.xlu0 %v2376, 4
  %v2432 = vpop.permute.xlu0 %2431
  %2433 = vrot.lane.b32.xlu0 %v2378, 4
  %v2434 = vpop.permute.xlu0 %2433
  %2435 = vrot.lane.b32.xlu0 %v2380, 4
  %v2436 = vpop.permute.xlu0 %2435
  %2437 = vrot.lane.b32.xlu0 %v2382, 4
  %v2438 = vpop.permute.xlu0 %2437
  %2439 = vrot.lane.b32.xlu0 %v2384, 4
  %v2440 = vpop.permute.xlu0 %2439
  %2441 = vrot.lane.b32.xlu0 %v2386, 4
  %v2442 = vpop.permute.xlu0 %2441
  %2443 = vrot.lane.b32.xlu0 %v2388, 4
  %v2444 = vpop.permute.xlu0 %2443
  %v2473 = vsel %vm1170, %v2237, %v2390
  %v2474 = vsel %vm1170, %v2238, %v2392
  %v2475 = vsel %vm1170, %v2239, %v2394
  %v2476 = vsel %vm1170, %v2240, %v2396
  %v2477 = vsel %vm1170, %v2246, %v2398
  %v2478 = vsel %vm1170, %v2248, %v2400
  %v2479 = vsel %vm1170, %v2250, %v2402
  %v2480 = vsel %vm1170, %v2252, %v2404
  %v2481 = vsel %vm1170, %v2258, %v2406
  %v2482 = vsel %vm1170, %v2260, %v2408
  %v2483 = vsel %vm1170, %v2262, %v2410
  %v2484 = vsel %vm1170, %v2264, %v2412
  %v2485 = vsel %vm1170, %v2270, %v2414
  %v2486 = vsel %vm1170, %v2272, %v2416
  %v2487 = vsel %vm1170, %v2274, %v2418
  %v2488 = vsel %vm1170, %v2276, %v2420
  %v2489 = vsel %vm1170, %v2282, %v2422
  %v2490 = vsel %vm1170, %v2284, %v2424
  %v2491 = vsel %vm1170, %v2286, %v2426
  %v2492 = vsel %vm1170, %v2288, %v2428
  %v2493 = vsel %vm1170, %v2294, %v2430
  %v2494 = vsel %vm1170, %v2296, %v2432
  %v2495 = vsel %vm1170, %v2298, %v2434
  %v2496 = vsel %vm1170, %v2300, %v2436
  %v2497 = vsel %vm1170, %v2306, %v2438
  %v2498 = vsel %vm1170, %v2308, %v2440
  %v2499 = vsel %vm1170, %v2310, %v2442
  %v2500 = vsel %vm1170, %v2312, %v2444
  %2502 = vset.pattern.permute.xlu0 0
  %2503 = vperm.xlu0 %2502, %v2215
  %v2504 = vpop.permute.xlu0 %2503
  %2507 = vset.pattern.permute.xlu0 0
  %2508 = vperm.xlu0 %2507, %v2216
  %v2509 = vpop.permute.xlu0 %2508
  %v2512 = vsel %vm1710, %v2212, 0
  %v2515 = vsel %vm1710, %v2214, 0
  %2517 = vmatpush.msra.mxu0 %v2488
  %2518 = vmatpush.msra.mxu0 %v2487
  %2519 = vmatpush.msra.mxu0 %v2486
  %2520 = vmatpush.msra.mxu0 %v2485
  %2521 = vmatpush.msra.mxu0 %v2484
  %2522 = vmatpush.msra.mxu0 %v2483
  %2523 = vmatpush.msra.mxu0 %v2482
  %2524 = vmatpush.msra.mxu0 %v2481
  %2525 = vmatpush.msra.mxu0 %v2480
  %2526 = vmatpush.msra.mxu0 %v2479
  %2527 = vmatpush.msra.mxu0 %v2478
  %2528 = vmatpush.msra.mxu0 %v2477
  %2529 = vmatpush.msra.mxu0 %v2476
  %2530 = vmatpush.msra.mxu0 %v2475
  %2531 = vmatpush.msra.mxu0 %v2474
  %2532 = vmatpush.msra.mxu0 %v2473
  %2533 = vmatmul.f32.gmra.mxu0 %v2211
  %v2534 = vpop.f32.mrf.mxu0
  %v2535 = vadd.f32 %v2504, %v2534
  %2536 = vmatmul.f32.gmra.mxu0 %v2213
  %v2537 = vpop.f32.mrf.mxu0
  %v2538 = vadd.f32 %v2509, %v2537
  %2539 = vdwg.mxu0
  %2540 = vmatpush.msra.mxu0 0.0
  %2541 = vmatpush.msra.mxu0 0.0
  %2542 = vmatpush.msra.mxu0 0.0
  %2543 = vmatpush.msra.mxu0 0.0
  %2544 = vmatpush.msra.mxu0 %v2500
  %2545 = vmatpush.msra.mxu0 %v2499
  %2546 = vmatpush.msra.mxu0 %v2498
  %2547 = vmatpush.msra.mxu0 %v2497
  %2548 = vmatpush.msra.mxu0 %v2496
  %2549 = vmatpush.msra.mxu0 %v2495
  %2550 = vmatpush.msra.mxu0 %v2494
  %2551 = vmatpush.msra.mxu0 %v2493
  %2552 = vmatpush.msra.mxu0 %v2492
  %2553 = vmatpush.msra.mxu0 %v2491
  %2554 = vmatpush.msra.mxu0 %v2490
  %2555 = vmatpush.msra.mxu0 %v2489
  %2556 = vmatmul.f32.gmra.mxu0 %v2512
  %v2557 = vpop.f32.mrf.mxu0
  %v2558 = vadd.f32 %v2535, %v2557
  %2559 = vmatmul.f32.gmra.mxu0 %v2515
  %v2560 = vpop.f32.mrf.mxu0
  %v2561 = vadd.f32 %v2538, %v2560
  %2562 = vdwg.mxu0
  %v2563 = vmax.f32 %v2558, 0.0
  %v2564 = vmax.f32 %v2561, 0.0
  %v2566 = vsel %vm591, %v2563, 0
  %v2569 = vsel %vm591, %v2564, 0
  %2571 = vmatpush.msra.mxu0 0.0
  %2572 = vmatpush.msra.mxu0 0.0
  %2573 = vmatpush.msra.mxu0 0.0
  %2574 = vmatpush.msra.mxu0 0.0
  %2575 = vmatpush.msra.mxu0 0.0
  %2576 = vmatpush.msra.mxu0 0.0
  %2577 = vmatpush.msra.mxu0 0.0
  %2578 = vmatpush.msra.mxu0 0.0
  %2579 = vmatpush.msra.mxu0 0.0
  %2580 = vmatpush.msra.mxu0 0.0
  %2581 = vmatpush.msra.mxu0 0.0
  %2582 = vmatpush.msra.mxu0 0.0
  %2583 = vmatpush.msra.mxu0 0.0
  %2584 = vmatpush.msra.mxu0 0.0
  %2585 = vmatpush.msra.mxu0 0.0
  %2586 = vmatpush.msra.mxu0 %v2165
  %2587 = vmatmul.f32.gmra.mxu0 %v2566
  %v2588 = vpop.f32.mrf.mxu0
  %v2589 = vadd.f32 0.0, %v2588
  %2590 = vmatmul.f32.gmra.mxu0 %v2569
  %v2591 = vpop.f32.mrf.mxu0
  %v2592 = vadd.f32 0.0, %v2591
  %2593 = vdwg.mxu0
  %v2594 = vld [vmem:[%s63] sm:$0xff]
  %v2595 = vld [vmem:[%s65] sm:$0xff]
  %2598 = vrot.lane.b32.xlu0 %v2589, 3
  %v2599 = vpop.permute.xlu0 %2598
  %2600 = vrot.lane.b32.xlu0 %v2592, 3
  %v2601 = vpop.permute.xlu0 %2600
  %v2604 = vsel %vm164, 0.0, %v2599
  %v2605 = vsel %vm164, 0.0, %v2601
  %v2606 = vsel %vm531, %v2604, 0.0
  %v2607 = vsel %vm531, %v2605, 0.0
  %2610 = vrot.lane.b32.xlu0 %v2606, 127
  %v2611 = vpop.permute.xlu0 %2610
  %2612 = vrot.lane.b32.xlu0 %v2607, 127
  %v2613 = vpop.permute.xlu0 %2612
  %2616 = vrot.lane.b32.xlu0 %v2606, 126
  %v2617 = vpop.permute.xlu0 %2616
  %2618 = vrot.lane.b32.xlu0 %v2607, 126
  %v2619 = vpop.permute.xlu0 %2618
  %2622 = vrot.lane.b32.xlu0 %v2606, 125
  %v2623 = vpop.permute.xlu0 %2622
  %2624 = vrot.lane.b32.xlu0 %v2607, 125
  %v2625 = vpop.permute.xlu0 %2624
  %2628 = vrot.lane.b32.xlu0 %v2606, 124
  %v2629 = vpop.permute.xlu0 %2628
  %2630 = vrot.lane.b32.xlu0 %v2607, 124
  %v2631 = vpop.permute.xlu0 %2630
  %2634 = vrot.lane.b32.xlu0 %v2606, 123
  %v2635 = vpop.permute.xlu0 %2634
  %2636 = vrot.lane.b32.xlu0 %v2607, 123
  %v2637 = vpop.permute.xlu0 %2636
  %2640 = vrot.lane.b32.xlu0 %v2606, 122
  %v2641 = vpop.permute.xlu0 %2640
  %2642 = vrot.lane.b32.xlu0 %v2607, 122
  %v2643 = vpop.permute.xlu0 %2642
  %2646 = vrot.lane.b32.xlu0 %v2589, 123
  %v2647 = vpop.permute.xlu0 %2646
  %2648 = vrot.lane.b32.xlu0 %v2592, 123
  %v2649 = vpop.permute.xlu0 %2648
  %v2652 = vsel %vm164, 0.0, %v2647
  %v2653 = vsel %vm164, 0.0, %v2649
  %v2654 = vsel %vm531, %v2652, 0.0
  %v2655 = vsel %vm531, %v2653, 0.0
  %2658 = vrot.lane.b32.xlu0 %v2654, 127
  %v2659 = vpop.permute.xlu0 %2658
  %2660 = vrot.lane.b32.xlu0 %v2655, 127
  %v2661 = vpop.permute.xlu0 %2660
  %2662 = vrot.lane.b32.xlu0 %v2654, 126
  %v2663 = vpop.permute.xlu0 %2662
  %2664 = vrot.lane.b32.xlu0 %v2655, 126
  %v2665 = vpop.permute.xlu0 %2664
  %2666 = vrot.lane.b32.xlu0 %v2654, 125
  %v2667 = vpop.permute.xlu0 %2666
  %2668 = vrot.lane.b32.xlu0 %v2655, 125
  %v2669 = vpop.permute.xlu0 %2668
  %2670 = vrot.lane.b32.xlu0 %v2654, 124
  %v2671 = vpop.permute.xlu0 %2670
  %2672 = vrot.lane.b32.xlu0 %v2655, 124
  %v2673 = vpop.permute.xlu0 %2672
  %2674 = vrot.lane.b32.xlu0 %v2654, 123
  %v2675 = vpop.permute.xlu0 %2674
  %2676 = vrot.lane.b32.xlu0 %v2655, 123
  %v2677 = vpop.permute.xlu0 %2676
  %2678 = vrot.lane.b32.xlu0 %v2654, 122
  %v2679 = vpop.permute.xlu0 %2678
  %2680 = vrot.lane.b32.xlu0 %v2655, 122
  %v2681 = vpop.permute.xlu0 %2680
  %2682 = vrot.lane.b32.xlu0 %v2654, 8
  %v2683 = vpop.permute.xlu0 %2682
  %2684 = vrot.lane.b32.xlu0 %v2655, 8
  %v2685 = vpop.permute.xlu0 %2684
  %2686 = vrot.lane.b32.xlu0 %v2659, 8
  %v2687 = vpop.permute.xlu0 %2686
  %2688 = vrot.lane.b32.xlu0 %v2661, 8
  %v2689 = vpop.permute.xlu0 %2688
  %2690 = vrot.lane.b32.xlu0 %v2663, 8
  %v2691 = vpop.permute.xlu0 %2690
  %2692 = vrot.lane.b32.xlu0 %v2665, 8
  %v2693 = vpop.permute.xlu0 %2692
  %2694 = vrot.lane.b32.xlu0 %v2667, 8
  %v2695 = vpop.permute.xlu0 %2694
  %2696 = vrot.lane.b32.xlu0 %v2669, 8
  %v2697 = vpop.permute.xlu0 %2696
  %2698 = vrot.lane.b32.xlu0 %v2671, 8
  %v2699 = vpop.permute.xlu0 %2698
  %2700 = vrot.lane.b32.xlu0 %v2673, 8
  %v2701 = vpop.permute.xlu0 %2700
  %2702 = vrot.lane.b32.xlu0 %v2675, 8
  %v2703 = vpop.permute.xlu0 %2702
  %2704 = vrot.lane.b32.xlu0 %v2677, 8
  %v2705 = vpop.permute.xlu0 %2704
  %2706 = vrot.lane.b32.xlu0 %v2679, 8
  %v2707 = vpop.permute.xlu0 %2706
  %2708 = vrot.lane.b32.xlu0 %v2681, 8
  %v2709 = vpop.permute.xlu0 %2708
  %v2724 = vsel %vm591, %v2606, %v2683
  %v2725 = vsel %vm591, %v2607, %v2685
  %v2726 = vsel %vm591, %v2611, %v2687
  %v2727 = vsel %vm591, %v2613, %v2689
  %v2728 = vsel %vm591, %v2617, %v2691
  %v2729 = vsel %vm591, %v2619, %v2693
  %v2730 = vsel %vm591, %v2623, %v2695
  %v2731 = vsel %vm591, %v2625, %v2697
  %v2732 = vsel %vm591, %v2629, %v2699
  %v2733 = vsel %vm591, %v2631, %v2701
  %v2734 = vsel %vm591, %v2635, %v2703
  %v2735 = vsel %vm591, %v2637, %v2705
  %v2736 = vsel %vm591, %v2641, %v2707
  %v2737 = vsel %vm591, %v2643, %v2709
  %2739 = vset.pattern.permute.xlu0 0
  %2740 = vperm.xlu0 %2739, %v2595
  %v2741 = vpop.permute.xlu0 %2740
  %v2744 = vsel %vm868, %v2594, 0
  %2746 = vmatpush.msra.mxu0 0.0
  %2747 = vmatpush.msra.mxu0 0.0
  %2748 = vmatpush.msra.mxu0 %v2737
  %2749 = vmatpush.msra.mxu0 %v2736
  %2750 = vmatpush.msra.mxu0 %v2735
  %2751 = vmatpush.msra.mxu0 %v2734
  %2752 = vmatpush.msra.mxu0 %v2733
  %2753 = vmatpush.msra.mxu0 %v2732
  %2754 = vmatpush.msra.mxu0 %v2731
  %2755 = vmatpush.msra.mxu0 %v2730
  %2756 = vmatpush.msra.mxu0 %v2729
  %2757 = vmatpush.msra.mxu0 %v2728
  %2758 = vmatpush.msra.mxu0 %v2727
  %2759 = vmatpush.msra.mxu0 %v2726
  %2760 = vmatpush.msra.mxu0 %v2725
  %2761 = vmatpush.msra.mxu0 %v2724
  %2762 = vmatmul.f32.gmra.mxu0 %v2744
  %v2763 = vpop.f32.mrf.mxu0
  %v2764 = vadd.f32 %v2741, %v2763
  %2765 = vdwg.mxu0
  %v2766 = vmax.f32 %v2764, 0.0
  %v2767 = vmul.u32 %v412, 2
  %vm2768 = vcmp.eq.s32.totalorder %v416, %v2767
  %v2769 = vadd.s32 %v2767, 1
  %vm2770 = vcmp.eq.s32.totalorder %v416, %v2769
  %vm2771 = vmor %vm2768, %vm2770
  %v2772 = vsel %vm2771, 1.0, 0.0
  %v2774 = vsel %vm226, %v2766, 0
  %2776 = vmatpush.msra.mxu0 0.0
  %2777 = vmatpush.msra.mxu0 0.0
  %2778 = vmatpush.msra.mxu0 0.0
  %2779 = vmatpush.msra.mxu0 0.0
  %2780 = vmatpush.msra.mxu0 0.0
  %2781 = vmatpush.msra.mxu0 0.0
  %2782 = vmatpush.msra.mxu0 0.0
  %2783 = vmatpush.msra.mxu0 0.0
  %2784 = vmatpush.msra.mxu0 0.0
  %2785 = vmatpush.msra.mxu0 0.0
  %2786 = vmatpush.msra.mxu0 0.0
  %2787 = vmatpush.msra.mxu0 0.0
  %2788 = vmatpush.msra.mxu0 0.0
  %2789 = vmatpush.msra.mxu0 0.0
  %2790 = vmatpush.msra.mxu0 %v2772
  %2791 = vmatpush.msra.mxu0 %v2165
  %2792 = vmatmul.f32.gmra.mxu0 %v2774
  %v2793 = vpop.f32.mrf.mxu0
  %v2794 = vadd.f32 0.0, %v2793
  %2795 = vdwg.mxu0
  %v2796 = vld [vmem:[%s67] sm:$0xff]
  %v2797 = vld [vmem:[%s69] sm:$0xff]
  %2799 = vrot.lane.b32.xlu0 %v2794, 3
  %v2800 = vpop.permute.xlu0 %2799
  %v2802 = vsel %vm164, 0.0, %v2800
  %v2803 = vsel %vm166, %v2802, 0.0
  %2805 = vrot.lane.b32.xlu0 %v2803, 127
  %v2806 = vpop.permute.xlu0 %2805
  %2808 = vrot.lane.b32.xlu0 %v2803, 126
  %v2809 = vpop.permute.xlu0 %2808
  %2811 = vrot.lane.b32.xlu0 %v2803, 125
  %v2812 = vpop.permute.xlu0 %2811
  %2814 = vrot.lane.b32.xlu0 %v2803, 124
  %v2815 = vpop.permute.xlu0 %2814
  %2817 = vrot.lane.b32.xlu0 %v2803, 123
  %v2818 = vpop.permute.xlu0 %2817
  %2820 = vrot.lane.b32.xlu0 %v2803, 122
  %v2821 = vpop.permute.xlu0 %2820
  %2823 = vrot.lane.b32.xlu0 %v2794, 115
  %v2824 = vpop.permute.xlu0 %2823
  %v2826 = vsel %vm164, 0.0, %v2824
  %v2827 = vsel %vm166, %v2826, 0.0
  %2829 = vrot.lane.b32.xlu0 %v2827, 127
  %v2830 = vpop.permute.xlu0 %2829
  %2831 = vrot.lane.b32.xlu0 %v2827, 126
  %v2832 = vpop.permute.xlu0 %2831
  %2833 = vrot.lane.b32.xlu0 %v2827, 125
  %v2834 = vpop.permute.xlu0 %2833
  %2835 = vrot.lane.b32.xlu0 %v2827, 124
  %v2836 = vpop.permute.xlu0 %2835
  %2837 = vrot.lane.b32.xlu0 %v2827, 123
  %v2838 = vpop.permute.xlu0 %2837
  %2839 = vrot.lane.b32.xlu0 %v2827, 122
  %v2840 = vpop.permute.xlu0 %2839
  %2841 = vrot.lane.b32.xlu0 %v2827, 16
  %v2842 = vpop.permute.xlu0 %2841
  %2843 = vrot.lane.b32.xlu0 %v2830, 16
  %v2844 = vpop.permute.xlu0 %2843
  %2845 = vrot.lane.b32.xlu0 %v2832, 16
  %v2846 = vpop.permute.xlu0 %2845
  %2847 = vrot.lane.b32.xlu0 %v2834, 16
  %v2848 = vpop.permute.xlu0 %2847
  %2849 = vrot.lane.b32.xlu0 %v2836, 16
  %v2850 = vpop.permute.xlu0 %2849
  %2851 = vrot.lane.b32.xlu0 %v2838, 16
  %v2852 = vpop.permute.xlu0 %2851
  %2853 = vrot.lane.b32.xlu0 %v2840, 16
  %v2854 = vpop.permute.xlu0 %2853
  %v2862 = vsel %vm226, %v2803, %v2842
  %v2863 = vsel %vm226, %v2806, %v2844
  %v2864 = vsel %vm226, %v2809, %v2846
  %v2865 = vsel %vm226, %v2812, %v2848
  %v2866 = vsel %vm226, %v2815, %v2850
  %v2867 = vsel %vm226, %v2818, %v2852
  %v2868 = vsel %vm226, %v2821, %v2854
  %2870 = vset.pattern.permute.xlu0 0
  %2871 = vperm.xlu0 %2870, %v2797
  %v2872 = vpop.permute.xlu0 %2871
  %v2875 = vsel %vm239, %v2796, 0
  %2877 = vmatpush.msra.mxu0 0.0
  %2878 = vmatpush.msra.mxu0 0.0
  %2879 = vmatpush.msra.mxu0 0.0
  %2880 = vmatpush.msra.mxu0 0.0
  %2881 = vmatpush.msra.mxu0 0.0
  %2882 = vmatpush.msra.mxu0 0.0
  %2883 = vmatpush.msra.mxu0 0.0
  %2884 = vmatpush.msra.mxu0 0.0
  %2885 = vmatpush.msra.mxu0 0.0
  %2886 = vmatpush.msra.mxu0 %v2868
  %2887 = vmatpush.msra.mxu0 %v2867
  %2888 = vmatpush.msra.mxu0 %v2866
  %2889 = vmatpush.msra.mxu0 %v2865
  %2890 = vmatpush.msra.mxu0 %v2864
  %2891 = vmatpush.msra.mxu0 %v2863
  %2892 = vmatpush.msra.mxu0 %v2862
  %2893 = vmatmul.f32.gmra.mxu0 %v2875
  %v2894 = vpop.f32.mrf.mxu0
  %v2895 = vadd.f32 %v2872, %v2894
  %2896 = vdwg.mxu0
  %v2897 = vmax.f32 %v2895, 0.0
  %v2898 = vld [vmem:[%s71] sm:$0x7]
  %v2899 = vld [vmem:[%s73] sm:$0x7]
  %2901 = vset.pattern.permute.xlu0 0
  %2902 = vperm.xlu0 %2901, %v2899
  %v2903 = vpop.permute.xlu0 %2902
  %v2906 = vsel %vm591, %v2898, 0
  %2908 = vmatpush.msra.mxu0 0.0
  %2909 = vmatpush.msra.mxu0 0.0
  %2910 = vmatpush.msra.mxu0 0.0
  %2911 = vmatpush.msra.mxu0 0.0
  %2912 = vmatpush.msra.mxu0 0.0
  %2913 = vmatpush.msra.mxu0 0.0
  %2914 = vmatpush.msra.mxu0 0.0
  %2915 = vmatpush.msra.mxu0 0.0
  %2916 = vmatpush.msra.mxu0 0.0
  %2917 = vmatpush.msra.mxu0 0.0
  %2918 = vmatpush.msra.mxu0 0.0
  %2919 = vmatpush.msra.mxu0 0.0
  %2920 = vmatpush.msra.mxu0 0.0
  %2921 = vmatpush.msra.mxu0 0.0
  %2922 = vmatpush.msra.mxu0 0.0
  %2923 = vmatpush.msra.mxu0 %v2897
  %2924 = vmatmul.f32.gmra.mxu0 %v2906
  %v2925 = vpop.f32.mrf.mxu0
  %v2926 = vadd.f32 %v2903, %v2925
  %2927 = vdwg.mxu0
  %vm2928 = vcmask 256000
  %2929 = vst.msk [vmem:[%s75] sm:$0x7] %vm2928, %v2926
  // Predicated region
  $region150: #{autoencoder_forward.1} parent=0 // pred_check
    _
  $region151: #{autoencoder_forward.1} parent=0 // pred_check_branch
    %2931 = sbr.rel (0) target = $region153
  $region152: #{autoencoder_forward.1} parent=0 // pred_region
    _
  $region153: #{autoencoder_forward.1} parent=0 // pred_fallthru
    _
  // Predicated region
  $region154: #{autoencoder_forward.1} parent=0 // pred_check
    _
  $region155: #{autoencoder_forward.1} parent=0 // pred_check_branch
    %2933 = sbr.rel (0) target = $region157
  $region156: #{autoencoder_forward.1} parent=0 // pred_region
    _
  $region157: #{autoencoder_forward.1} parent=0 // pred_fallthru
    _
  // Predicated region
  $region158: #{autoencoder_forward.1} parent=0 // pred_check
    _
  $region159: #{autoencoder_forward.1} parent=0 // pred_check_branch
    %2935 = sbr.rel (0) target = $region161
  $region160: #{autoencoder_forward.1} parent=0 // pred_region
    _
  $region161: #{autoencoder_forward.1} parent=0 // pred_fallthru
    _
  // Predicated region
  $region162: #{autoencoder_forward.1} parent=0 // pred_check
    _
  $region163: #{autoencoder_forward.1} parent=0 // pred_check_branch
    %2937 = sbr.rel (0) target = $region165
  $region164: #{autoencoder_forward.1} parent=0 // pred_region
    _
  $region165: #{autoencoder_forward.1} parent=0 // pred_fallthru
    _

</llo_original>
